<compile_context>
chip_gen: v5e
topology: v5e:2x2
jax: 0.10.0
libtpu: 0.0.40
codegen_flags: <defaults>
</compile_context>

<pallas_src>
import jax
import jax.numpy as jnp
from jax.experimental import pallas as pl
from jax.experimental.pallas import tpu as pltpu

# ---- module-consistent hyperparameters (hidden divisible by heads) ----
HIDDEN = 256
HEADS = 2                      # head_dim = 128 = TPU lane width (lane-aligned heads)
HEAD_DIM = HIDDEN // HEADS
FF = 512
NUM_LAYERS = 3                 # module default num_layers=3
BETA = 0.5
LN_EPS = 1e-5                  # nn.LayerNorm default
NEG_BIG = 1e9                  # additive key-padding bias magnitude


# ----------------------------- in-kernel helpers -----------------------------
def _layernorm(x, gamma, beta):
    # x: [S, H] f32, gamma/beta: [1, H] f32
    mean = jnp.mean(x, axis=-1, keepdims=True)
    var = jnp.mean((x - mean) ** 2, axis=-1, keepdims=True)
    return (x - mean) * jax.lax.rsqrt(var + LN_EPS) * gamma + beta


def _mha_ctx(q, k, v, bias):
    """Multi-head attention context (pre output-projection) for one batch element.

    q, k, v : [S, H] f32  (q already scaled by 1/sqrt(head_dim) via its weights)
    bias    : [1, S] f32 additive key-padding bias (0 = attend, -1e9 = padded)
    returns : [S, H] f32 concatenated per-head context (lane-aligned concat)
    """
    ctx_heads = []
    for h in range(HEADS):                              # HEAD_DIM==128 -> lane-aligned
        sl = slice(h * HEAD_DIM, (h + 1) * HEAD_DIM)
        qh = q[:, sl].astype(jnp.bfloat16)
        kh = k[:, sl].astype(jnp.bfloat16)
        vh = v[:, sl].astype(jnp.bfloat16)
        # scores = qh @ kh.T (contracting dims, no explicit transpose)
        s = jax.lax.dot_general(qh, kh, (((1,), (1,)), ((), ())),
                                preferred_element_type=jnp.float32)     # [S, S]
        s = s + bias
        s = s - jnp.max(s, axis=-1, keepdims=True)
        p = jnp.exp(s)
        p = p * pl.reciprocal(jnp.sum(p, axis=-1, keepdims=True), approx=True)
        ctx_heads.append(jnp.dot(p.astype(jnp.bfloat16), vh,
                                 preferred_element_type=jnp.float32))   # [S, HEAD_DIM]
    return jnp.concatenate(ctx_heads, axis=-1)           # [S, H]


# ------------------------------- Pallas kernel --------------------------------
def encoder_kernel(
    x_ref, mem_ref, bias_ref,
    x_proj_w, x_proj_b, mem_kv_w, mem_kv_b, out_w, out_b,
    n1_g, n1_b,
    ff_w1, ff_b1, ff_w2, ff_b2,
    n2_g, n2_b,
    out_ref, act_ref,
):
    l = pl.program_id(1)
    H = HIDDEN

    # Load the layer-0 input into the VMEM activation carry.
    @pl.when(l == 0)
    def _():
        act_ref[...] = x_ref[0]

    x = act_ref[...]                                  # [S, H] f32 (e_k_l_minus_1)
    x_bf = x.astype(jnp.bfloat16)
    mem_bf = mem_ref[0].astype(jnp.bfloat16)          # [S, H]     (e_k_minus_1)
    bias = bias_ref[0]                                # [1, S] additive mask bias

    # ---- fused projections ----
    # x -> [self-Q | self-K | self-V | cross-Q]   (Q columns pre-scaled)
    proj = jnp.dot(x_bf, x_proj_w[0],
                   preferred_element_type=jnp.float32) + x_proj_b[0]     # [S, 4H]
    # memory -> [cross-K | cross-V]
    kv_c = jnp.dot(mem_bf, mem_kv_w[0],
                   preferred_element_type=jnp.float32) + mem_kv_b[0]     # [S, 2H]

    q_s, k_s, v_s = proj[:, 0:H], proj[:, H:2 * H], proj[:, 2 * H:3 * H]
    q_c = proj[:, 3 * H:4 * H]
    k_c, v_c = kv_c[:, 0:H], kv_c[:, H:2 * H]

    ctx_s = _mha_ctx(q_s, k_s, v_s, bias)             # [S, H]
    ctx_c = _mha_ctx(q_c, k_c, v_c, bias)             # [S, H]

    # Fused output projection + beta blend (beta folded into out_w/out_b).
    ctx = jnp.concatenate([ctx_s, ctx_c], axis=-1).astype(jnp.bfloat16)  # [S, 2H]
    att = jnp.dot(ctx, out_w[0], preferred_element_type=jnp.float32) + out_b[0]

    # TODO(synk): nn.Dropout is identity at inference time; not implemented.
    y = _layernorm(att + x, n1_g[0], n1_b[0])

    h1 = jnp.dot(y.astype(jnp.bfloat16), ff_w1[0],
                 preferred_element_type=jnp.float32) + ff_b1[0]
    h1 = jnp.maximum(h1, 0.0)
    ff = jnp.dot(h1.astype(jnp.bfloat16), ff_w2[0],
                 preferred_element_type=jnp.float32) + ff_b2[0]
    y2 = _layernorm(ff + y, n2_g[0], n2_b[0])

    act_ref[...] = y2                                 # carry to next layer

    @pl.when(l == pl.num_programs(1) - 1)
    def _():
        out_ref[0] = y2


# --------------------------------- wrapper ------------------------------------
_PARAM_ORDER = (
    "x_proj_w", "x_proj_b", "mem_kv_w", "mem_kv_b", "out_w", "out_b",
    "n1_g", "n1_b",
    "ff_w1", "ff_b1", "ff_w2", "ff_b2",
    "n2_g", "n2_b",
)


def prepare_stacked_params(layer_params):
    """PyTorch-layout per-layer params -> stacked, kernel-ready arrays.

    Pre-transposes weights to [in, out], folds 1/sqrt(head_dim) into the Q
    projection, fuses (self-QKV + cross-Q), (cross-KV) and (out-proj + beta
    blend), casts matmul weights to bf16, and stacks everything on a leading
    [NUM_LAYERS, ...] axis.
    """
    H = HIDDEN
    scale = 1.0 / float(HEAD_DIM) ** 0.5
    bf16 = jnp.bfloat16

    def per_layer(p):
        s_in_w = p["self_in_w"].T              # [H, 3H], cols = [Q | K | V]
        s_in_b = p["self_in_b"]                # [1, 3H]
        c_in_w = p["cross_in_w"].T             # [H, 3H]
        c_in_b = p["cross_in_b"]               # [1, 3H]

        # fused x-projection: [self-Q (scaled) | self-K | self-V | cross-Q (scaled)]
        x_proj_w = jnp.concatenate(
            [s_in_w[:, 0:H] * scale, s_in_w[:, H:3 * H], c_in_w[:, 0:H] * scale],
            axis=1).astype(bf16)                                       # [H, 4H]
        x_proj_b = jnp.concatenate(
            [s_in_b[:, 0:H] * scale, s_in_b[:, H:3 * H], c_in_b[:, 0:H] * scale],
            axis=1)                                                    # [1, 4H]

        mem_kv_w = c_in_w[:, H:3 * H].astype(bf16)                     # [H, 2H]
        mem_kv_b = c_in_b[:, H:3 * H]                                  # [1, 2H]

        # fused output projection with beta blend folded in: [2H, H]
        out_w = jnp.concatenate(
            [BETA * p["self_out_w"].T, (1.0 - BETA) * p["cross_out_w"].T],
            axis=0).astype(bf16)
        out_b = BETA * p["self_out_b"] + (1.0 - BETA) * p["cross_out_b"]

        return dict(
            x_proj_w=x_proj_w, x_proj_b=x_proj_b,
            mem_kv_w=mem_kv_w, mem_kv_b=mem_kv_b,
            out_w=out_w, out_b=out_b,
            n1_g=p["n1_g"], n1_b=p["n1_b"],
            ff_w1=p["ff_w1"].T.astype(bf16), ff_b1=p["ff_b1"],
            ff_w2=p["ff_w2"].T.astype(bf16), ff_b2=p["ff_b2"],
            n2_g=p["n2_g"], n2_b=p["n2_b"],
        )

    prepped = [per_layer(p) for p in layer_params]
    return {k: jnp.stack([pp[k] for pp in prepped]) for k in _PARAM_ORDER}


def transformer_encoder_pallas(x, src_mask_bool, e_k_minus_1, stacked):
    """x, e_k_minus_1: [B, S, H] f32; src_mask_bool: [B, S] (True = valid token)."""
    B, S, H = x.shape
    L = stacked["x_proj_w"].shape[0]

    # key_padding_mask (= ~src_mask) as a precomputed additive bias.
    mask_bias = ((src_mask_bool.astype(jnp.float32) - 1.0) * NEG_BIG).reshape(B, 1, S)

    weights = [stacked[k] for k in _PARAM_ORDER]

    data_spec = pl.BlockSpec((1, S, H), lambda b, l: (b, 0, 0))
    bias_spec = pl.BlockSpec((1, 1, S), lambda b, l: (b, 0, 0))
    weight_specs = [
        pl.BlockSpec((1,) + w.shape[1:], lambda b, l: (l, 0, 0)) for w in weights
    ]

    return pl.pallas_call(
        encoder_kernel,
        out_shape=jax.ShapeDtypeStruct((B, S, H), jnp.float32),
        grid=(B, L),
        in_specs=[data_spec, data_spec, bias_spec] + weight_specs,
        out_specs=pl.BlockSpec((1, S, H), lambda b, l: (b, 0, 0)),
        scratch_shapes=[pltpu.VMEM((S, H), jnp.float32)],   # activation carry
        compiler_params=pltpu.CompilerParams(
            dimension_semantics=("parallel", "arbitrary")),
    )(x, e_k_minus_1, mask_bias, *weights)


# --------------------------- deterministic parameters --------------------------
def init_layer_params(key):
    """Parameters in the PyTorch nn.Module layout."""
    ks = jax.random.split(key, 6)
    std = 0.02
    H, F = HIDDEN, FF

    def w(k, shape):
        return (std * jax.random.normal(k, shape)).astype(jnp.float32)

    return {
        "self_in_w": w(ks[0], (3 * H, H)),
        "self_in_b": jnp.zeros((1, 3 * H), jnp.float32),
        "self_out_w": w(ks[1], (H, H)),
        "self_out_b": jnp.zeros((1, H), jnp.float32),
        "cross_in_w": w(ks[2], (3 * H, H)),
        "cross_in_b": jnp.zeros((1, 3 * H), jnp.float32),
        "cross_out_w": w(ks[3], (H, H)),
        "cross_out_b": jnp.zeros((1, H), jnp.float32),
        "n1_g": jnp.ones((1, H), jnp.float32),
        "n1_b": jnp.zeros((1, H), jnp.float32),
        "ff_w1": w(ks[4], (F, H)),
        "ff_b1": jnp.zeros((1, F), jnp.float32),
        "ff_w2": w(ks[5], (H, F)),
        "ff_b2": jnp.zeros((1, H), jnp.float32),
        "n2_g": jnp.ones((1, H), jnp.float32),
        "n2_b": jnp.zeros((1, H), jnp.float32),
    }


if __name__ == "__main__":
    B, S = 2, 16

    root = jax.random.PRNGKey(0)
    k_x, k_e, k_p = jax.random.split(root, 3)

    x = jax.random.normal(k_x, (B, S, HIDDEN), dtype=jnp.float32)
    e_k_minus_1 = jax.random.normal(k_e, (B, S, HIDDEN), dtype=jnp.float32)

    # src_mask: True = real token. Second sequence has 4 padded positions.
    lengths = jnp.array([S, S - 4])
    src_mask = jnp.arange(S)[None, :] < lengths[:, None]          # [B, S] bool

    layer_params = [init_layer_params(k) for k in jax.random.split(k_p, NUM_LAYERS)]
    stacked = prepare_stacked_params(layer_params)

    out = jax.jit(transformer_encoder_pallas)(x, src_mask, e_k_minus_1, stacked)
    out = jax.block_until_ready(out)

    assert out.shape == (B, S, HIDDEN)
    assert bool(jnp.all(jnp.isfinite(out)))
    print("KERNEL_OK")
</pallas_src>

<mosaic_0001>
module attributes {stable_mosaic.version = 11 : i64} {
  func.func @encoder_kernel(%arg0: i32, %arg1: i32, %arg2: memref<1x16x256xf32, #tpu.memory_space<vmem>>, %arg3: memref<1x16x256xf32, #tpu.memory_space<vmem>>, %arg4: memref<1x1x16xf32, #tpu.memory_space<vmem>>, %arg5: memref<1x256x1024xbf16, #tpu.memory_space<vmem>>, %arg6: memref<1x1x1024xf32, #tpu.memory_space<vmem>>, %arg7: memref<1x256x512xbf16, #tpu.memory_space<vmem>>, %arg8: memref<1x1x512xf32, #tpu.memory_space<vmem>>, %arg9: memref<1x512x256xbf16, #tpu.memory_space<vmem>>, %arg10: memref<1x1x256xf32, #tpu.memory_space<vmem>>, %arg11: memref<1x1x256xf32, #tpu.memory_space<vmem>>, %arg12: memref<1x1x256xf32, #tpu.memory_space<vmem>>, %arg13: memref<1x256x512xbf16, #tpu.memory_space<vmem>>, %arg14: memref<1x1x512xf32, #tpu.memory_space<vmem>>, %arg15: memref<1x512x256xbf16, #tpu.memory_space<vmem>>, %arg16: memref<1x1x256xf32, #tpu.memory_space<vmem>>, %arg17: memref<1x1x256xf32, #tpu.memory_space<vmem>>, %arg18: memref<1x1x256xf32, #tpu.memory_space<vmem>>, %arg19: memref<1x16x256xf32, #tpu.memory_space<vmem>>, %arg20: memref<16x256xf32, #tpu.memory_space<vmem>>) attributes {dimension_semantics = [#tpu.dimension_semantics<parallel>, #tpu.dimension_semantics<arbitrary>], iteration_bounds = array<i64: 2, 3>, scalar_prefetch = 0 : i64, scratch_operands = 1 : i64, tpu.core_type = #tpu.core_type<tc>, window_params = [{transform_indices = @transform_0, window_bounds = array<i64: 1, 16, 256>}, {transform_indices = @transform_1, window_bounds = array<i64: 1, 16, 256>}, {transform_indices = @transform_2, window_bounds = array<i64: 1, 1, 16>}, {transform_indices = @transform_3, window_bounds = array<i64: 1, 256, 1024>}, {transform_indices = @transform_4, window_bounds = array<i64: 1, 1, 1024>}, {transform_indices = @transform_5, window_bounds = array<i64: 1, 256, 512>}, {transform_indices = @transform_6, window_bounds = array<i64: 1, 1, 512>}, {transform_indices = @transform_7, window_bounds = array<i64: 1, 512, 256>}, {transform_indices = @transform_8, window_bounds = array<i64: 1, 1, 256>}, {transform_indices = @transform_9, window_bounds = array<i64: 1, 1, 256>}, {transform_indices = @transform_10, window_bounds = array<i64: 1, 1, 256>}, {transform_indices = @transform_11, window_bounds = array<i64: 1, 256, 512>}, {transform_indices = @transform_12, window_bounds = array<i64: 1, 1, 512>}, {transform_indices = @transform_13, window_bounds = array<i64: 1, 512, 256>}, {transform_indices = @transform_14, window_bounds = array<i64: 1, 1, 256>}, {transform_indices = @transform_15, window_bounds = array<i64: 1, 1, 256>}, {transform_indices = @transform_16, window_bounds = array<i64: 1, 1, 256>}, {transform_indices = @transform_17, window_bounds = array<i64: 1, 16, 256>}]} {
    %c0_i32 = arith.constant 0 : i32
    %0 = arith.cmpi eq, %arg1, %c0_i32 : i32
    %1 = arith.extui %0 : i1 to i32
    %c0_i32_0 = arith.constant 0 : i32
    %2 = arith.cmpi ne, %1, %c0_i32_0 : i32
    scf.if %2 {
      %c0_84 = arith.constant 0 : index
      %c0_85 = arith.constant 0 : index
      %c0_86 = arith.constant 0 : index
      %201 = vector.load %arg2[%c0_84, %c0_85, %c0_86] : memref<1x16x256xf32, #tpu.memory_space<vmem>>, vector<1x16x256xf32>
      %202 = vector.shape_cast %201 : vector<1x16x256xf32> to vector<16x256xf32>
      %c0_87 = arith.constant 0 : index
      %c0_88 = arith.constant 0 : index
      %203 = vector.load %arg20[%c0_87, %c0_88] : memref<16x256xf32, #tpu.memory_space<vmem>>, vector<16x256xf32>
      tpu.vector_store %arg20[%c0_87, %c0_88], %202 {strides = array<i32>} : memref<16x256xf32, #tpu.memory_space<vmem>>, vector<16x256xf32>,
    } else {
    }
    %c0 = arith.constant 0 : index
    %c0_1 = arith.constant 0 : index
    %3 = vector.load %arg20[%c0, %c0_1] : memref<16x256xf32, #tpu.memory_space<vmem>>, vector<16x256xf32>
    %4 = arith.truncf %3 : vector<16x256xf32> to vector<16x256xbf16>
    %c0_2 = arith.constant 0 : index
    %c0_3 = arith.constant 0 : index
    %c0_4 = arith.constant 0 : index
    %5 = vector.load %arg3[%c0_2, %c0_3, %c0_4] : memref<1x16x256xf32, #tpu.memory_space<vmem>>, vector<1x16x256xf32>
    %6 = vector.shape_cast %5 : vector<1x16x256xf32> to vector<16x256xf32>
    %7 = arith.truncf %6 : vector<16x256xf32> to vector<16x256xbf16>
    %c0_5 = arith.constant 0 : index
    %c0_6 = arith.constant 0 : index
    %c0_7 = arith.constant 0 : index
    %8 = vector.load %arg4[%c0_5, %c0_6, %c0_7] : memref<1x1x16xf32, #tpu.memory_space<vmem>>, vector<1x1x16xf32>
    %9 = vector.shape_cast %8 : vector<1x1x16xf32> to vector<1x16xf32>
    %c0_8 = arith.constant 0 : index
    %c0_9 = arith.constant 0 : index
    %c0_10 = arith.constant 0 : index
    %10 = vector.load %arg5[%c0_8, %c0_9, %c0_10] : memref<1x256x1024xbf16, #tpu.memory_space<vmem>>, vector<1x256x1024xbf16>
    %11 = vector.shape_cast %10 : vector<1x256x1024xbf16> to vector<256x1024xbf16>
    %cst = arith.constant dense<0.000000e+00> : vector<16x1024xf32>
    %12 = tpu.matmul %4, %11, %cst {dimension_numbers = #tpu.dot_dimension_numbers<[1], [0], [0], [1], [0, 0, 1, 1], [], []>} : vector<16x256xbf16>, vector<256x1024xbf16>, vector<16x1024xf32> -> vector<16x1024xf32>
    %c0_11 = arith.constant 0 : index
    %c0_12 = arith.constant 0 : index
    %c0_13 = arith.constant 0 : index
    %13 = vector.load %arg6[%c0_11, %c0_12, %c0_13] : memref<1x1x1024xf32, #tpu.memory_space<vmem>>, vector<1x1x1024xf32>
    %14 = vector.shape_cast %13 : vector<1x1x1024xf32> to vector<1x1024xf32>
    %15 = vector.broadcast %14 : vector<1x1024xf32> to vector<16x1024xf32>
    %16 = arith.addf %12, %15 : vector<16x1024xf32>
    %c0_14 = arith.constant 0 : index
    %c0_15 = arith.constant 0 : index
    %c0_16 = arith.constant 0 : index
    %17 = vector.load %arg7[%c0_14, %c0_15, %c0_16] : memref<1x256x512xbf16, #tpu.memory_space<vmem>>, vector<1x256x512xbf16>
    %18 = vector.shape_cast %17 : vector<1x256x512xbf16> to vector<256x512xbf16>
    %cst_17 = arith.constant dense<0.000000e+00> : vector<16x512xf32>
    %19 = tpu.matmul %7, %18, %cst_17 {dimension_numbers = #tpu.dot_dimension_numbers<[1], [0], [0], [1], [0, 0, 1, 1], [], []>} : vector<16x256xbf16>, vector<256x512xbf16>, vector<16x512xf32> -> vector<16x512xf32>
    %c0_18 = arith.constant 0 : index
    %c0_19 = arith.constant 0 : index
    %c0_20 = arith.constant 0 : index
    %20 = vector.load %arg8[%c0_18, %c0_19, %c0_20] : memref<1x1x512xf32, #tpu.memory_space<vmem>>, vector<1x1x512xf32>
    %21 = vector.shape_cast %20 : vector<1x1x512xf32> to vector<1x512xf32>
    %22 = vector.broadcast %21 : vector<1x512xf32> to vector<16x512xf32>
    %23 = arith.addf %19, %22 : vector<16x512xf32>
    %24 = vector.extract_strided_slice %16 {offsets = [0, 0], sizes = [16, 256], strides = [1, 1]} : vector<16x1024xf32> to vector<16x256xf32>
    %25 = vector.extract_strided_slice %16 {offsets = [0, 256], sizes = [16, 256], strides = [1, 1]} : vector<16x1024xf32> to vector<16x256xf32>
    %26 = vector.extract_strided_slice %16 {offsets = [0, 512], sizes = [16, 256], strides = [1, 1]} : vector<16x1024xf32> to vector<16x256xf32>
    %27 = vector.extract_strided_slice %16 {offsets = [0, 768], sizes = [16, 256], strides = [1, 1]} : vector<16x1024xf32> to vector<16x256xf32>
    %28 = vector.extract_strided_slice %23 {offsets = [0, 0], sizes = [16, 256], strides = [1, 1]} : vector<16x512xf32> to vector<16x256xf32>
    %29 = vector.extract_strided_slice %23 {offsets = [0, 256], sizes = [16, 256], strides = [1, 1]} : vector<16x512xf32> to vector<16x256xf32>
    %30 = vector.extract_strided_slice %24 {offsets = [0, 0], sizes = [16, 128], strides = [1, 1]} : vector<16x256xf32> to vector<16x128xf32>
    %31 = arith.truncf %30 : vector<16x128xf32> to vector<16x128xbf16>
    %32 = vector.extract_strided_slice %25 {offsets = [0, 0], sizes = [16, 128], strides = [1, 1]} : vector<16x256xf32> to vector<16x128xf32>
    %33 = arith.truncf %32 : vector<16x128xf32> to vector<16x128xbf16>
    %34 = vector.extract_strided_slice %26 {offsets = [0, 0], sizes = [16, 128], strides = [1, 1]} : vector<16x256xf32> to vector<16x128xf32>
    %35 = arith.truncf %34 : vector<16x128xf32> to vector<16x128xbf16>
    %cst_21 = arith.constant dense<0.000000e+00> : vector<16x16xf32>
    %36 = tpu.matmul %31, %33, %cst_21 {dimension_numbers = #tpu.dot_dimension_numbers<[1], [1], [0], [0], [0, 0, 1, 0], [], []>} : vector<16x128xbf16>, vector<16x128xbf16>, vector<16x16xf32> -> vector<16x16xf32>
    %37 = vector.broadcast %9 : vector<1x16xf32> to vector<16x16xf32>
    %38 = arith.addf %36, %37 : vector<16x16xf32>
    %cst_22 = arith.constant dense<0xFF800000> : vector<16xf32>
    %39 = vector.multi_reduction <maximumf>, %38, %cst_22 [1] : vector<16x16xf32> to vector<16xf32>
    %40 = vector.shape_cast %39 : vector<16xf32> to vector<16x1xf32>
    %41 = vector.broadcast %40 : vector<16x1xf32> to vector<16x16xf32>
    %42 = arith.subf %38, %41 : vector<16x16xf32>
    %43 = math.exp %42 : vector<16x16xf32>
    %cst_23 = arith.constant dense<0.000000e+00> : vector<16xf32>
    %44 = vector.multi_reduction <add>, %43, %cst_23 [1] : vector<16x16xf32> to vector<16xf32>
    %45 = vector.shape_cast %44 : vector<16xf32> to vector<16x1xf32>
    %46 = tpu.reciprocal %45 {approx = true} : vector<16x1xf32> -> vector<16x1xf32>
    %47 = vector.broadcast %46 : vector<16x1xf32> to vector<16x16xf32>
    %48 = arith.mulf %43, %47 : vector<16x16xf32>
    %49 = arith.truncf %48 : vector<16x16xf32> to vector<16x16xbf16>
    %cst_24 = arith.constant dense<0.000000e+00> : vector<16x128xf32>
    %50 = tpu.matmul %49, %35, %cst_24 {dimension_numbers = #tpu.dot_dimension_numbers<[1], [0], [0], [1], [0, 0, 1, 1], [], []>} : vector<16x16xbf16>, vector<16x128xbf16>, vector<16x128xf32> -> vector<16x128xf32>
    %51 = vector.extract_strided_slice %24 {offsets = [0, 128], sizes = [16, 128], strides = [1, 1]} : vector<16x256xf32> to vector<16x128xf32>
    %52 = arith.truncf %51 : vector<16x128xf32> to vector<16x128xbf16>
    %53 = vector.extract_strided_slice %25 {offsets = [0, 128], sizes = [16, 128], strides = [1, 1]} : vector<16x256xf32> to vector<16x128xf32>
    %54 = arith.truncf %53 : vector<16x128xf32> to vector<16x128xbf16>
    %55 = vector.extract_strided_slice %26 {offsets = [0, 128], sizes = [16, 128], strides = [1, 1]} : vector<16x256xf32> to vector<16x128xf32>
    %56 = arith.truncf %55 : vector<16x128xf32> to vector<16x128xbf16>
    %cst_25 = arith.constant dense<0.000000e+00> : vector<16x16xf32>
    %57 = tpu.matmul %52, %54, %cst_25 {dimension_numbers = #tpu.dot_dimension_numbers<[1], [1], [0], [0], [0, 0, 1, 0], [], []>} : vector<16x128xbf16>, vector<16x128xbf16>, vector<16x16xf32> -> vector<16x16xf32>
    %58 = vector.broadcast %9 : vector<1x16xf32> to vector<16x16xf32>
    %59 = arith.addf %57, %58 : vector<16x16xf32>
    %cst_26 = arith.constant dense<0xFF800000> : vector<16xf32>
    %60 = vector.multi_reduction <maximumf>, %59, %cst_26 [1] : vector<16x16xf32> to vector<16xf32>
    %61 = vector.shape_cast %60 : vector<16xf32> to vector<16x1xf32>
    %62 = vector.broadcast %61 : vector<16x1xf32> to vector<16x16xf32>
    %63 = arith.subf %59, %62 : vector<16x16xf32>
    %64 = math.exp %63 : vector<16x16xf32>
    %cst_27 = arith.constant dense<0.000000e+00> : vector<16xf32>
    %65 = vector.multi_reduction <add>, %64, %cst_27 [1] : vector<16x16xf32> to vector<16xf32>
    %66 = vector.shape_cast %65 : vector<16xf32> to vector<16x1xf32>
    %67 = tpu.reciprocal %66 {approx = true} : vector<16x1xf32> -> vector<16x1xf32>
    %68 = vector.broadcast %67 : vector<16x1xf32> to vector<16x16xf32>
    %69 = arith.mulf %64, %68 : vector<16x16xf32>
    %70 = arith.truncf %69 : vector<16x16xf32> to vector<16x16xbf16>
    %cst_28 = arith.constant dense<0.000000e+00> : vector<16x128xf32>
    %71 = tpu.matmul %70, %56, %cst_28 {dimension_numbers = #tpu.dot_dimension_numbers<[1], [0], [0], [1], [0, 0, 1, 1], [], []>} : vector<16x16xbf16>, vector<16x128xbf16>, vector<16x128xf32> -> vector<16x128xf32>
    %72 = tpu.concatenate %50, %71 in 1 : vector<16x128xf32>, vector<16x128xf32> -> vector<16x256xf32>
    %73 = vector.extract_strided_slice %27 {offsets = [0, 0], sizes = [16, 128], strides = [1, 1]} : vector<16x256xf32> to vector<16x128xf32>
    %74 = arith.truncf %73 : vector<16x128xf32> to vector<16x128xbf16>
    %75 = vector.extract_strided_slice %28 {offsets = [0, 0], sizes = [16, 128], strides = [1, 1]} : vector<16x256xf32> to vector<16x128xf32>
    %76 = arith.truncf %75 : vector<16x128xf32> to vector<16x128xbf16>
    %77 = vector.extract_strided_slice %29 {offsets = [0, 0], sizes = [16, 128], strides = [1, 1]} : vector<16x256xf32> to vector<16x128xf32>
    %78 = arith.truncf %77 : vector<16x128xf32> to vector<16x128xbf16>
    %cst_29 = arith.constant dense<0.000000e+00> : vector<16x16xf32>
    %79 = tpu.matmul %74, %76, %cst_29 {dimension_numbers = #tpu.dot_dimension_numbers<[1], [1], [0], [0], [0, 0, 1, 0], [], []>} : vector<16x128xbf16>, vector<16x128xbf16>, vector<16x16xf32> -> vector<16x16xf32>
    %80 = vector.broadcast %9 : vector<1x16xf32> to vector<16x16xf32>
    %81 = arith.addf %79, %80 : vector<16x16xf32>
    %cst_30 = arith.constant dense<0xFF800000> : vector<16xf32>
    %82 = vector.multi_reduction <maximumf>, %81, %cst_30 [1] : vector<16x16xf32> to vector<16xf32>
    %83 = vector.shape_cast %82 : vector<16xf32> to vector<16x1xf32>
    %84 = vector.broadcast %83 : vector<16x1xf32> to vector<16x16xf32>
    %85 = arith.subf %81, %84 : vector<16x16xf32>
    %86 = math.exp %85 : vector<16x16xf32>
    %cst_31 = arith.constant dense<0.000000e+00> : vector<16xf32>
    %87 = vector.multi_reduction <add>, %86, %cst_31 [1] : vector<16x16xf32> to vector<16xf32>
    %88 = vector.shape_cast %87 : vector<16xf32> to vector<16x1xf32>
    %89 = tpu.reciprocal %88 {approx = true} : vector<16x1xf32> -> vector<16x1xf32>
    %90 = vector.broadcast %89 : vector<16x1xf32> to vector<16x16xf32>
    %91 = arith.mulf %86, %90 : vector<16x16xf32>
    %92 = arith.truncf %91 : vector<16x16xf32> to vector<16x16xbf16>
    %cst_32 = arith.constant dense<0.000000e+00> : vector<16x128xf32>
    %93 = tpu.matmul %92, %78, %cst_32 {dimension_numbers = #tpu.dot_dimension_numbers<[1], [0], [0], [1], [0, 0, 1, 1], [], []>} : vector<16x16xbf16>, vector<16x128xbf16>, vector<16x128xf32> -> vector<16x128xf32>
    %94 = vector.extract_strided_slice %27 {offsets = [0, 128], sizes = [16, 128], strides = [1, 1]} : vector<16x256xf32> to vector<16x128xf32>
    %95 = arith.truncf %94 : vector<16x128xf32> to vector<16x128xbf16>
    %96 = vector.extract_strided_slice %28 {offsets = [0, 128], sizes = [16, 128], strides = [1, 1]} : vector<16x256xf32> to vector<16x128xf32>
    %97 = arith.truncf %96 : vector<16x128xf32> to vector<16x128xbf16>
    %98 = vector.extract_strided_slice %29 {offsets = [0, 128], sizes = [16, 128], strides = [1, 1]} : vector<16x256xf32> to vector<16x128xf32>
    %99 = arith.truncf %98 : vector<16x128xf32> to vector<16x128xbf16>
    %cst_33 = arith.constant dense<0.000000e+00> : vector<16x16xf32>
    %100 = tpu.matmul %95, %97, %cst_33 {dimension_numbers = #tpu.dot_dimension_numbers<[1], [1], [0], [0], [0, 0, 1, 0], [], []>} : vector<16x128xbf16>, vector<16x128xbf16>, vector<16x16xf32> -> vector<16x16xf32>
    %101 = vector.broadcast %9 : vector<1x16xf32> to vector<16x16xf32>
    %102 = arith.addf %100, %101 : vector<16x16xf32>
    %cst_34 = arith.constant dense<0xFF800000> : vector<16xf32>
    %103 = vector.multi_reduction <maximumf>, %102, %cst_34 [1] : vector<16x16xf32> to vector<16xf32>
    %104 = vector.shape_cast %103 : vector<16xf32> to vector<16x1xf32>
    %105 = vector.broadcast %104 : vector<16x1xf32> to vector<16x16xf32>
    %106 = arith.subf %102, %105 : vector<16x16xf32>
    %107 = math.exp %106 : vector<16x16xf32>
    %cst_35 = arith.constant dense<0.000000e+00> : vector<16xf32>
    %108 = vector.multi_reduction <add>, %107, %cst_35 [1] : vector<16x16xf32> to vector<16xf32>
    %109 = vector.shape_cast %108 : vector<16xf32> to vector<16x1xf32>
    %110 = tpu.reciprocal %109 {approx = true} : vector<16x1xf32> -> vector<16x1xf32>
    %111 = vector.broadcast %110 : vector<16x1xf32> to vector<16x16xf32>
    %112 = arith.mulf %107, %111 : vector<16x16xf32>
    %113 = arith.truncf %112 : vector<16x16xf32> to vector<16x16xbf16>
    %cst_36 = arith.constant dense<0.000000e+00> : vector<16x128xf32>
    %114 = tpu.matmul %113, %99, %cst_36 {dimension_numbers = #tpu.dot_dimension_numbers<[1], [0], [0], [1], [0, 0, 1, 1], [], []>} : vector<16x16xbf16>, vector<16x128xbf16>, vector<16x128xf32> -> vector<16x128xf32>
    %115 = tpu.concatenate %93, %114 in 1 : vector<16x128xf32>, vector<16x128xf32> -> vector<16x256xf32>
    %116 = tpu.concatenate %72, %115 in 1 : vector<16x256xf32>, vector<16x256xf32> -> vector<16x512xf32>
    %117 = arith.truncf %116 : vector<16x512xf32> to vector<16x512xbf16>
    %c0_37 = arith.constant 0 : index
    %c0_38 = arith.constant 0 : index
    %c0_39 = arith.constant 0 : index
    %118 = vector.load %arg9[%c0_37, %c0_38, %c0_39] : memref<1x512x256xbf16, #tpu.memory_space<vmem>>, vector<1x512x256xbf16>
    %119 = vector.shape_cast %118 : vector<1x512x256xbf16> to vector<512x256xbf16>
    %cst_40 = arith.constant dense<0.000000e+00> : vector<16x256xf32>
    %120 = tpu.matmul %117, %119, %cst_40 {dimension_numbers = #tpu.dot_dimension_numbers<[1], [0], [0], [1], [0, 0, 1, 1], [], []>} : vector<16x512xbf16>, vector<512x256xbf16>, vector<16x256xf32> -> vector<16x256xf32>
    %c0_41 = arith.constant 0 : index
    %c0_42 = arith.constant 0 : index
    %c0_43 = arith.constant 0 : index
    %121 = vector.load %arg10[%c0_41, %c0_42, %c0_43] : memref<1x1x256xf32, #tpu.memory_space<vmem>>, vector<1x1x256xf32>
    %122 = vector.shape_cast %121 : vector<1x1x256xf32> to vector<1x256xf32>
    %123 = vector.broadcast %122 : vector<1x256xf32> to vector<16x256xf32>
    %124 = arith.addf %120, %123 : vector<16x256xf32>
    %125 = arith.addf %124, %3 : vector<16x256xf32>
    %c0_44 = arith.constant 0 : index
    %c0_45 = arith.constant 0 : index
    %c0_46 = arith.constant 0 : index
    %126 = vector.load %arg11[%c0_44, %c0_45, %c0_46] : memref<1x1x256xf32, #tpu.memory_space<vmem>>, vector<1x1x256xf32>
    %127 = vector.shape_cast %126 : vector<1x1x256xf32> to vector<1x256xf32>
    %c0_47 = arith.constant 0 : index
    %c0_48 = arith.constant 0 : index
    %c0_49 = arith.constant 0 : index
    %128 = vector.load %arg12[%c0_47, %c0_48, %c0_49] : memref<1x1x256xf32, #tpu.memory_space<vmem>>, vector<1x1x256xf32>
    %129 = vector.shape_cast %128 : vector<1x1x256xf32> to vector<1x256xf32>
    %cst_50 = arith.constant dense<0.000000e+00> : vector<16xf32>
    %130 = vector.multi_reduction <add>, %125, %cst_50 [1] : vector<16x256xf32> to vector<16xf32>
    %131 = vector.shape_cast %130 : vector<16xf32> to vector<16x1xf32>
    %cst_51 = arith.constant 2.560000e+02 : f32
    %132 = vector.broadcast %cst_51 : f32 to vector<16x1xf32>
    %133 = arith.divf %131, %132 : vector<16x1xf32>
    %134 = vector.broadcast %133 : vector<16x1xf32> to vector<16x256xf32>
    %135 = arith.subf %125, %134 : vector<16x256xf32>
    %136 = arith.mulf %135, %135 : vector<16x256xf32>
    %cst_52 = arith.constant dense<0.000000e+00> : vector<16xf32>
    %137 = vector.multi_reduction <add>, %136, %cst_52 [1] : vector<16x256xf32> to vector<16xf32>
    %138 = vector.shape_cast %137 : vector<16xf32> to vector<16x1xf32>
    %cst_53 = arith.constant 2.560000e+02 : f32
    %139 = vector.broadcast %cst_53 : f32 to vector<16x1xf32>
    %140 = arith.divf %138, %139 : vector<16x1xf32>
    %141 = vector.broadcast %133 : vector<16x1xf32> to vector<16x256xf32>
    %142 = arith.subf %125, %141 : vector<16x256xf32>
    %cst_54 = arith.constant 9.99999974E-6 : f32
    %143 = vector.broadcast %cst_54 : f32 to vector<16x1xf32>
    %144 = arith.addf %140, %143 : vector<16x1xf32>
    %145 = math.rsqrt %144 : vector<16x1xf32>
    %146 = vector.broadcast %145 : vector<16x1xf32> to vector<16x256xf32>
    %147 = arith.mulf %142, %146 : vector<16x256xf32>
    %148 = vector.broadcast %127 : vector<1x256xf32> to vector<16x256xf32>
    %149 = arith.mulf %147, %148 : vector<16x256xf32>
    %150 = vector.broadcast %129 : vector<1x256xf32> to vector<16x256xf32>
    %151 = arith.addf %149, %150 : vector<16x256xf32>
    %152 = arith.truncf %151 : vector<16x256xf32> to vector<16x256xbf16>
    %c0_55 = arith.constant 0 : index
    %c0_56 = arith.constant 0 : index
    %c0_57 = arith.constant 0 : index
    %153 = vector.load %arg13[%c0_55, %c0_56, %c0_57] : memref<1x256x512xbf16, #tpu.memory_space<vmem>>, vector<1x256x512xbf16>
    %154 = vector.shape_cast %153 : vector<1x256x512xbf16> to vector<256x512xbf16>
    %cst_58 = arith.constant dense<0.000000e+00> : vector<16x512xf32>
    %155 = tpu.matmul %152, %154, %cst_58 {dimension_numbers = #tpu.dot_dimension_numbers<[1], [0], [0], [1], [0, 0, 1, 1], [], []>} : vector<16x256xbf16>, vector<256x512xbf16>, vector<16x512xf32> -> vector<16x512xf32>
    %c0_59 = arith.constant 0 : index
    %c0_60 = arith.constant 0 : index
    %c0_61 = arith.constant 0 : index
    %156 = vector.load %arg14[%c0_59, %c0_60, %c0_61] : memref<1x1x512xf32, #tpu.memory_space<vmem>>, vector<1x1x512xf32>
    %157 = vector.shape_cast %156 : vector<1x1x512xf32> to vector<1x512xf32>
    %158 = vector.broadcast %157 : vector<1x512xf32> to vector<16x512xf32>
    %159 = arith.addf %155, %158 : vector<16x512xf32>
    %cst_62 = arith.constant 0.000000e+00 : f32
    %160 = vector.broadcast %cst_62 : f32 to vector<16x512xf32>
    %161 = arith.maximumf %159, %160 : vector<16x512xf32>
    %162 = arith.truncf %161 : vector<16x512xf32> to vector<16x512xbf16>
    %c0_63 = arith.constant 0 : index
    %c0_64 = arith.constant 0 : index
    %c0_65 = arith.constant 0 : index
    %163 = vector.load %arg15[%c0_63, %c0_64, %c0_65] : memref<1x512x256xbf16, #tpu.memory_space<vmem>>, vector<1x512x256xbf16>
    %164 = vector.shape_cast %163 : vector<1x512x256xbf16> to vector<512x256xbf16>
    %cst_66 = arith.constant dense<0.000000e+00> : vector<16x256xf32>
    %165 = tpu.matmul %162, %164, %cst_66 {dimension_numbers = #tpu.dot_dimension_numbers<[1], [0], [0], [1], [0, 0, 1, 1], [], []>} : vector<16x512xbf16>, vector<512x256xbf16>, vector<16x256xf32> -> vector<16x256xf32>
    %c0_67 = arith.constant 0 : index
    %c0_68 = arith.constant 0 : index
    %c0_69 = arith.constant 0 : index
    %166 = vector.load %arg16[%c0_67, %c0_68, %c0_69] : memref<1x1x256xf32, #tpu.memory_space<vmem>>, vector<1x1x256xf32>
    %167 = vector.shape_cast %166 : vector<1x1x256xf32> to vector<1x256xf32>
    %168 = vector.broadcast %167 : vector<1x256xf32> to vector<16x256xf32>
    %169 = arith.addf %165, %168 : vector<16x256xf32>
    %170 = arith.addf %169, %151 : vector<16x256xf32>
    %c0_70 = arith.constant 0 : index
    %c0_71 = arith.constant 0 : index
    %c0_72 = arith.constant 0 : index
    %171 = vector.load %arg17[%c0_70, %c0_71, %c0_72] : memref<1x1x256xf32, #tpu.memory_space<vmem>>, vector<1x1x256xf32>
    %172 = vector.shape_cast %171 : vector<1x1x256xf32> to vector<1x256xf32>
    %c0_73 = arith.constant 0 : index
    %c0_74 = arith.constant 0 : index
    %c0_75 = arith.constant 0 : index
    %173 = vector.load %arg18[%c0_73, %c0_74, %c0_75] : memref<1x1x256xf32, #tpu.memory_space<vmem>>, vector<1x1x256xf32>
    %174 = vector.shape_cast %173 : vector<1x1x256xf32> to vector<1x256xf32>
    %cst_76 = arith.constant dense<0.000000e+00> : vector<16xf32>
    %175 = vector.multi_reduction <add>, %170, %cst_76 [1] : vector<16x256xf32> to vector<16xf32>
    %176 = vector.shape_cast %175 : vector<16xf32> to vector<16x1xf32>
    %cst_77 = arith.constant 2.560000e+02 : f32
    %177 = vector.broadcast %cst_77 : f32 to vector<16x1xf32>
    %178 = arith.divf %176, %177 : vector<16x1xf32>
    %179 = vector.broadcast %178 : vector<16x1xf32> to vector<16x256xf32>
    %180 = arith.subf %170, %179 : vector<16x256xf32>
    %181 = arith.mulf %180, %180 : vector<16x256xf32>
    %cst_78 = arith.constant dense<0.000000e+00> : vector<16xf32>
    %182 = vector.multi_reduction <add>, %181, %cst_78 [1] : vector<16x256xf32> to vector<16xf32>
    %183 = vector.shape_cast %182 : vector<16xf32> to vector<16x1xf32>
    %cst_79 = arith.constant 2.560000e+02 : f32
    %184 = vector.broadcast %cst_79 : f32 to vector<16x1xf32>
    %185 = arith.divf %183, %184 : vector<16x1xf32>
    %186 = vector.broadcast %178 : vector<16x1xf32> to vector<16x256xf32>
    %187 = arith.subf %170, %186 : vector<16x256xf32>
    %cst_80 = arith.constant 9.99999974E-6 : f32
    %188 = vector.broadcast %cst_80 : f32 to vector<16x1xf32>
    %189 = arith.addf %185, %188 : vector<16x1xf32>
    %190 = math.rsqrt %189 : vector<16x1xf32>
    %191 = vector.broadcast %190 : vector<16x1xf32> to vector<16x256xf32>
    %192 = arith.mulf %187, %191 : vector<16x256xf32>
    %193 = vector.broadcast %172 : vector<1x256xf32> to vector<16x256xf32>
    %194 = arith.mulf %192, %193 : vector<16x256xf32>
    %195 = vector.broadcast %174 : vector<1x256xf32> to vector<16x256xf32>
    %196 = arith.addf %194, %195 : vector<16x256xf32>
    %c0_81 = arith.constant 0 : index
    %c0_82 = arith.constant 0 : index
    %197 = vector.load %arg20[%c0_81, %c0_82] : memref<16x256xf32, #tpu.memory_space<vmem>>, vector<16x256xf32>
    tpu.vector_store %arg20[%c0_81, %c0_82], %196 {strides = array<i32>} : memref<16x256xf32, #tpu.memory_space<vmem>>, vector<16x256xf32>,
    %c2_i32 = arith.constant 2 : i32
    %198 = arith.cmpi eq, %arg1, %c2_i32 : i32
    %199 = arith.extui %198 : i1 to i32
    %c0_i32_83 = arith.constant 0 : i32
    %200 = arith.cmpi ne, %199, %c0_i32_83 : i32
    scf.if %200 {
      %c0_84 = arith.constant 0 : index
      %c0_85 = arith.constant 0 : index
      %c0_86 = arith.constant 0 : index
      %201 = vector.load %arg19[%c0_84, %c0_85, %c0_86] : memref<1x16x256xf32, #tpu.memory_space<vmem>>, vector<1x16x256xf32>
      %202 = vector.shape_cast %201 : vector<1x16x256xf32> to vector<16x256xf32>
      %203 = vector.shape_cast %196 : vector<16x256xf32> to vector<1x16x256xf32>
      tpu.vector_store %arg19[%c0_84, %c0_85, %c0_86], %203 {strides = array<i32>} : memref<1x16x256xf32, #tpu.memory_space<vmem>>, vector<1x16x256xf32>,
    } else {
    }
    return
  }
  func.func @transform_0(%arg0: i32, %arg1: i32) -> (i32, i32, i32) {
    %c0_i32 = arith.constant 0 : i32
    %c0_i32_0 = arith.constant 0 : i32
    %c0_i32_1 = arith.constant 0 : i32
    return %arg0, %c0_i32, %c0_i32_0 : i32, i32, i32
  }
  func.func @transform_1(%arg0: i32, %arg1: i32) -> (i32, i32, i32) {
    %c0_i32 = arith.constant 0 : i32
    %c0_i32_0 = arith.constant 0 : i32
    %c0_i32_1 = arith.constant 0 : i32
    return %arg0, %c0_i32, %c0_i32_0 : i32, i32, i32
  }
  func.func @transform_2(%arg0: i32, %arg1: i32) -> (i32, i32, i32) {
    %c0_i32 = arith.constant 0 : i32
    %c0_i32_0 = arith.constant 0 : i32
    %c0_i32_1 = arith.constant 0 : i32
    return %arg0, %c0_i32, %c0_i32_0 : i32, i32, i32
  }
  func.func @transform_3(%arg0: i32, %arg1: i32) -> (i32, i32, i32) {
    %c0_i32 = arith.constant 0 : i32
    %c0_i32_0 = arith.constant 0 : i32
    %c0_i32_1 = arith.constant 0 : i32
    return %arg1, %c0_i32, %c0_i32_0 : i32, i32, i32
  }
  func.func @transform_4(%arg0: i32, %arg1: i32) -> (i32, i32, i32) {
    %c0_i32 = arith.constant 0 : i32
    %c0_i32_0 = arith.constant 0 : i32
    %c0_i32_1 = arith.constant 0 : i32
    return %arg1, %c0_i32, %c0_i32_0 : i32, i32, i32
  }
  func.func @transform_5(%arg0: i32, %arg1: i32) -> (i32, i32, i32) {
    %c0_i32 = arith.constant 0 : i32
    %c0_i32_0 = arith.constant 0 : i32
    %c0_i32_1 = arith.constant 0 : i32
    return %arg1, %c0_i32, %c0_i32_0 : i32, i32, i32
  }
  func.func @transform_6(%arg0: i32, %arg1: i32) -> (i32, i32, i32) {
    %c0_i32 = arith.constant 0 : i32
    %c0_i32_0 = arith.constant 0 : i32
    %c0_i32_1 = arith.constant 0 : i32
    return %arg1, %c0_i32, %c0_i32_0 : i32, i32, i32
  }
  func.func @transform_7(%arg0: i32, %arg1: i32) -> (i32, i32, i32) {
    %c0_i32 = arith.constant 0 : i32
    %c0_i32_0 = arith.constant 0 : i32
    %c0_i32_1 = arith.constant 0 : i32
    return %arg1, %c0_i32, %c0_i32_0 : i32, i32, i32
  }
  func.func @transform_8(%arg0: i32, %arg1: i32) -> (i32, i32, i32) {
    %c0_i32 = arith.constant 0 : i32
    %c0_i32_0 = arith.constant 0 : i32
    %c0_i32_1 = arith.constant 0 : i32
    return %arg1, %c0_i32, %c0_i32_0 : i32, i32, i32
  }
  func.func @transform_9(%arg0: i32, %arg1: i32) -> (i32, i32, i32) {
    %c0_i32 = arith.constant 0 : i32
    %c0_i32_0 = arith.constant 0 : i32
    %c0_i32_1 = arith.constant 0 : i32
    return %arg1, %c0_i32, %c0_i32_0 : i32, i32, i32
  }
  func.func @transform_10(%arg0: i32, %arg1: i32) -> (i32, i32, i32) {
    %c0_i32 = arith.constant 0 : i32
    %c0_i32_0 = arith.constant 0 : i32
    %c0_i32_1 = arith.constant 0 : i32
    return %arg1, %c0_i32, %c0_i32_0 : i32, i32, i32
  }
  func.func @transform_11(%arg0: i32, %arg1: i32) -> (i32, i32, i32) {
    %c0_i32 = arith.constant 0 : i32
    %c0_i32_0 = arith.constant 0 : i32
    %c0_i32_1 = arith.constant 0 : i32
    return %arg1, %c0_i32, %c0_i32_0 : i32, i32, i32
  }
  func.func @transform_12(%arg0: i32, %arg1: i32) -> (i32, i32, i32) {
    %c0_i32 = arith.constant 0 : i32
    %c0_i32_0 = arith.constant 0 : i32
    %c0_i32_1 = arith.constant 0 : i32
    return %arg1, %c0_i32, %c0_i32_0 : i32, i32, i32
  }
  func.func @transform_13(%arg0: i32, %arg1: i32) -> (i32, i32, i32) {
    %c0_i32 = arith.constant 0 : i32
    %c0_i32_0 = arith.constant 0 : i32
    %c0_i32_1 = arith.constant 0 : i32
    return %arg1, %c0_i32, %c0_i32_0 : i32, i32, i32
  }
  func.func @transform_14(%arg0: i32, %arg1: i32) -> (i32, i32, i32) {
    %c0_i32 = arith.constant 0 : i32
    %c0_i32_0 = arith.constant 0 : i32
    %c0_i32_1 = arith.constant 0 : i32
    return %arg1, %c0_i32, %c0_i32_0 : i32, i32, i32
  }
  func.func @transform_15(%arg0: i32, %arg1: i32) -> (i32, i32, i32) {
    %c0_i32 = arith.constant 0 : i32
    %c0_i32_0 = arith.constant 0 : i32
    %c0_i32_1 = arith.constant 0 : i32
    return %arg1, %c0_i32, %c0_i32_0 : i32, i32, i32
  }
  func.func @transform_16(%arg0: i32, %arg1: i32) -> (i32, i32, i32) {
    %c0_i32 = arith.constant 0 : i32
    %c0_i32_0 = arith.constant 0 : i32
    %c0_i32_1 = arith.constant 0 : i32
    return %arg1, %c0_i32, %c0_i32_0 : i32, i32, i32
  }
  func.func @transform_17(%arg0: i32, %arg1: i32) -> (i32, i32, i32) {
    %c0_i32 = arith.constant 0 : i32
    %c0_i32_0 = arith.constant 0 : i32
    %c0_i32_1 = arith.constant 0 : i32
    return %arg0, %c0_i32, %c0_i32_0 : i32, i32, i32
  }
}

</mosaic_0001>

<llo_original>
// kernel: transformer_encoder_pallas.1
$region0: #{transformer_encoder_pallas.1}
  #allocation0 [shape = 'u32[]', space=smem, size = 0x4, offset = 0x4, fixed_abs, tag = 'smem constant byte address 0x4 - core index']
  #allocation1 [shape = 'u32[72,128]{1,0:T(1,128)}', space=vmem, size = 0x9000, scoped, tag = 'internal scratch']
  #allocation2 [shape = 'f32[16,256]{1,0:T(8,128)}', space=vmem, size = 0x4000, scoped, tag = 'scratch operand']
  %s0 = inlined_call_operand.hbm [shape: f32[2,16,256], index: 0, kind: input, shape index: {}]
  %s1 = inlined_call_operand.hbm [shape: f32[2,16,256], index: 1, kind: input, shape index: {}]
  %s2 = inlined_call_operand.vmem [shape: f32[2,1,16], index: 2, kind: input, shape index: {}]
  %s3 = inlined_call_operand.hbm [shape: bf16[3,256,1024], index: 3, kind: input, shape index: {}]
  %s4 = inlined_call_operand.hbm [shape: f32[3,1,1024], index: 4, kind: input, shape index: {}]
  %s5 = inlined_call_operand.hbm [shape: bf16[3,256,512], index: 5, kind: input, shape index: {}]
  %s6 = inlined_call_operand.hbm [shape: f32[3,1,512], index: 6, kind: input, shape index: {}]
  %s7 = inlined_call_operand.hbm [shape: bf16[3,512,256], index: 7, kind: input, shape index: {}]
  %s8 = inlined_call_operand.hbm [shape: f32[3,1,256], index: 8, kind: input, shape index: {}]
  %s9 = inlined_call_operand.hbm [shape: f32[3,1,256], index: 9, kind: input, shape index: {}]
  %s10 = inlined_call_operand.hbm [shape: f32[3,1,256], index: 10, kind: input, shape index: {}]
  %s11 = inlined_call_operand.hbm [shape: bf16[3,256,512], index: 11, kind: input, shape index: {}]
  %s12 = inlined_call_operand.hbm [shape: f32[3,1,512], index: 12, kind: input, shape index: {}]
  %s13 = inlined_call_operand.hbm [shape: bf16[3,512,256], index: 13, kind: input, shape index: {}]
  %s14 = inlined_call_operand.hbm [shape: f32[3,1,256], index: 14, kind: input, shape index: {}]
  %s15 = inlined_call_operand.hbm [shape: f32[3,1,256], index: 15, kind: input, shape index: {}]
  %s16 = inlined_call_operand.hbm [shape: f32[3,1,256], index: 16, kind: input, shape index: {}]
  %s17 = inlined_call_operand.hbm [shape: f32[2,16,256], index: 17, kind: output, shape index: {}]
  %s18 = sld [smem:[#allocation0]]
  $region173: #{transformer_encoder_pallas.1} parent=0
    _
  %s20 = ssub.s32 1, %s18
  %s21 = scalar_select 0, %s20, %s18
  $region1: #{transformer_encoder_pallas.1} parent=0
    #allocation3 [shape = 'u8[32768]{0}', space=vmem, size = 0x8000, scoped, tag = 'input window, operand 0']
    #allocation4 [shape = 's32[2]{0}', space=sflag, size = 0x8, scoped, tag = 'scoped memory for transformer_encoder_pallas.1']
    #allocation5 [shape = 's32[2]{0}', space=sflag, size = 0x8, scoped, tag = 'scoped memory for transformer_encoder_pallas.1']
    #allocation6 [shape = 'u8[32768]{0}', space=vmem, size = 0x8000, scoped, tag = 'input window, operand 1']
    #allocation7 [shape = 's32[2]{0}', space=sflag, size = 0x8, scoped, tag = 'scoped memory for transformer_encoder_pallas.1']
    #allocation8 [shape = 'u8[1048576]{0}', space=vmem, size = 0x100000, scoped, tag = 'input window, operand 3']
    #allocation9 [shape = 'u8[8192]{0}', space=vmem, size = 0x2000, scoped, tag = 'input window, operand 4']
    #allocation10 [shape = 's32[2]{0}', space=sflag, size = 0x8, scoped, tag = 'scoped memory for transformer_encoder_pallas.1']
    #allocation11 [shape = 'u8[524288]{0}', space=vmem, size = 0x80000, scoped, tag = 'input window, operand 5']
    #allocation12 [shape = 'u8[4096]{0}', space=vmem, size = 0x1000, scoped, tag = 'input window, operand 6']
    #allocation13 [shape = 's32[2]{0}', space=sflag, size = 0x8, scoped, tag = 'scoped memory for transformer_encoder_pallas.1']
    #allocation14 [shape = 'u8[524288]{0}', space=vmem, size = 0x80000, scoped, tag = 'input window, operand 7']
    #allocation15 [shape = 'u8[2048]{0}', space=vmem, size = 0x800, scoped, tag = 'input window, operand 8']
    #allocation16 [shape = 's32[2]{0}', space=sflag, size = 0x8, scoped, tag = 'scoped memory for transformer_encoder_pallas.1']
    #allocation17 [shape = 'u8[2048]{0}', space=vmem, size = 0x800, scoped, tag = 'input window, operand 9']
    #allocation18 [shape = 'u8[2048]{0}', space=vmem, size = 0x800, scoped, tag = 'input window, operand 10']
    #allocation19 [shape = 's32[2]{0}', space=sflag, size = 0x8, scoped, tag = 'scoped memory for transformer_encoder_pallas.1']
    #allocation20 [shape = 'u8[524288]{0}', space=vmem, size = 0x80000, scoped, tag = 'input window, operand 11']
    #allocation21 [shape = 'u8[4096]{0}', space=vmem, size = 0x1000, scoped, tag = 'input window, operand 12']
    #allocation22 [shape = 's32[2]{0}', space=sflag, size = 0x8, scoped, tag = 'scoped memory for transformer_encoder_pallas.1']
    #allocation23 [shape = 'u8[524288]{0}', space=vmem, size = 0x80000, scoped, tag = 'input window, operand 13']
    #allocation24 [shape = 'u8[2048]{0}', space=vmem, size = 0x800, scoped, tag = 'input window, operand 14']
    #allocation25 [shape = 's32[2]{0}', space=sflag, size = 0x8, scoped, tag = 'scoped memory for transformer_encoder_pallas.1']
    #allocation26 [shape = 'u8[2048]{0}', space=vmem, size = 0x800, scoped, tag = 'input window, operand 15']
    #allocation27 [shape = 'u8[2048]{0}', space=vmem, size = 0x800, scoped, tag = 'input window, operand 16']
    #allocation28 [shape = 's32[2]{0}', space=sflag, size = 0x8, scoped, tag = 'scoped memory for transformer_encoder_pallas.1']
    #allocation29 [shape = 'u8[32768]{0}', space=vmem, size = 0x8000, scoped, tag = 'output window, operand 0']
    %22 = vsyncpa [#allocation4], 0
    %s23 = scalar_lea.sflag [#allocation4], 1
    %24 = vsyncpa %s23, 0
    %25 = vsyncpa [#allocation7], 0
    %s26 = scalar_lea.sflag [#allocation7], 1
    %27 = vsyncpa %s26, 0
    %28 = vsyncpa [#allocation10], 0
    %s29 = scalar_lea.sflag [#allocation10], 1
    %30 = vsyncpa %s29, 0
    %31 = vsyncpa [#allocation13], 0
    %s32 = scalar_lea.sflag [#allocation13], 1
    %33 = vsyncpa %s32, 0
    %34 = vsyncpa [#allocation16], 0
    %s35 = scalar_lea.sflag [#allocation16], 1
    %36 = vsyncpa %s35, 0
    %37 = vsyncpa [#allocation19], 0
    %s38 = scalar_lea.sflag [#allocation19], 1
    %39 = vsyncpa %s38, 0
    %40 = vsyncpa [#allocation22], 0
    %s41 = scalar_lea.sflag [#allocation22], 1
    %42 = vsyncpa %s41, 0
    %43 = vsyncpa [#allocation25], 0
    %s44 = scalar_lea.sflag [#allocation25], 1
    %45 = vsyncpa %s44, 0
    %46 = vsyncpa [#allocation28], 0
    %s47 = scalar_lea.sflag [#allocation28], 1
    %48 = vsyncpa %s47, 0
    %49 = vsyncpa [#allocation5], 0
    %s50 = scalar_lea.sflag [#allocation5], 1
    %51 = vsyncpa %s50, 0
    loop: start=0, step=1, limit=8
    $region2: #{transformer_encoder_pallas.1} parent=1 // loop_pre_header
      _
    $region3: #{transformer_encoder_pallas.1} parent=1 // loop_header
      %s53 = sphi 0, %s57
      %p54 = scmp.ge.s32.totalorder %s53, 8
      %s60 = sphi 0, %s72
      %s61 = sphi 0, %s68
      %s62 = sphi 0, %s60
      %s63 = sphi 0, %s61
      %s64 = sphi 0, %s62
      %s65 = sphi 0, %s63
      %s75 = sphi 0, %s77
      %s78 = sphi 0, %s75
      %s79 = sphi 0, %s78
      %s95 = sphi 0, %s79
      %s101 = sphi 0, %s103
      %s104 = sphi 0, %s101
      %s105 = sphi 0, %s104
      %s121 = sphi 0, %s105
      %s127 = sphi 0, %s129
      %s130 = sphi 0, %s127
      %s131 = sphi 0, %s130
      %s147 = sphi 0, %s131
      %s153 = sphi 0, %s155
      %s156 = sphi 0, %s153
      %s157 = sphi 0, %s156
      %s173 = sphi 0, %s157
      %s179 = sphi 0, %s181
      %s182 = sphi 0, %s179
      %s183 = sphi 0, %s182
      %s199 = sphi 0, %s183
      %s205 = sphi 0, %s207
      %s208 = sphi 0, %s205
      %s209 = sphi 0, %s208
      %s225 = sphi 0, %s209
      %s231 = sphi 0, %s233
      %s234 = sphi 0, %s231
      %s235 = sphi 0, %s234
      %s251 = sphi 0, %s235
      %s257 = sphi 0, %s259
      %s260 = sphi 0, %s257
      %s261 = sphi 0, %s260
      %s277 = sphi 0, %s261
      %s283 = sphi 0, %s285
      %s286 = sphi 0, %s283
      %s287 = sphi 0, %s286
      %s303 = sphi 0, %s287
      %s309 = sphi 0, %s311
      %s312 = sphi 0, %s309
      %s313 = sphi 0, %s312
      %s329 = sphi 0, %s313
      %s335 = sphi 0, %s337
      %s338 = sphi 0, %s335
      %s339 = sphi 0, %s338
      %s355 = sphi 0, %s339
      %s361 = sphi 0, %s363
      %s364 = sphi 0, %s361
      %s365 = sphi 0, %s364
      %s381 = sphi 0, %s365
      %s387 = sphi 0, %s389
      %s390 = sphi 0, %s387
      %s391 = sphi 0, %s390
      %s407 = sphi 0, %s391
      %s413 = sphi 0, %s415
      %s416 = sphi 0, %s413
      %s417 = sphi 0, %s416
      %s433 = sphi 0, %s417
      %s439 = sphi 0, %s441
      %s442 = sphi 0, %s439
      %s443 = sphi 0, %s442
      %s459 = sphi 0, %s443
      %s465 = sphi 0, %s467
      %s468 = sphi 0, %s465
      %s469 = sphi 0, %s468
      %s485 = sphi 0, %s469
      %s491 = sphi 0, %s493
      %s494 = sphi 0, %s491
      %s495 = sphi 0, %s494
      %s511 = sphi 0, %s495
      %s517 = sphi 0, %s519
      %s520 = sphi 0, %s517
      %s521 = sphi 0, %s520
      %s537 = sphi 0, %s521
    $region4: #{transformer_encoder_pallas.1} parent=1 // loop_header_branch
      %56 = sbr.rel (%p54) target = $region8
    $region5: #{transformer_encoder_pallas.1} parent=1 // loop_body
      %s58 = ssub.s32 %s53, 1
      %s59 = ssub.s32 %s53, 2
      %s66 = sadd.s32 1, %s61
      %p67 = scmp.ge.s32.totalorder %s66, 3
      %s68 = scalar_select %p67, 0, %s66
      %s69 = sadd.s32 1, %s60
      %s70 = scalar_select %p67, %s69, %s60
      %p71 = scmp.ge.s32.totalorder %s70, 2
      %s72 = scalar_select %p71, 0, %s70
      %s73 = ssub.s32 %s60, %s72
      %p74 = scmp.eq.s32.totalorder %s73, 0
      %s76 = sadd.s32 %s75, 1
      %s77 = scalar_select %p74, %s75, %s76
      %p80 = pneg %p74
      %p81 = scmp.eq.s32.totalorder %s53, 5
      %p82 = por %p80, %p81
      %p83 = scmp.ne.s32.totalorder %s75, %s78
      %p84 = scmp.eq.s32.totalorder %s53, 0
      %p85 = por %p83, %p84
      %p86 = scmp.ne.s32.totalorder %s75, %s78
      %p87 = scmp.eq.s32.totalorder %s58, 5
      %p88 = por %p86, %p87
      %p89 = scmp.ne.s32.totalorder %s78, %s79
      %p90 = scmp.eq.s32.totalorder %s58, 0
      %p91 = por %p89, %p90
      %p92 = scmp.ne.s32.totalorder %s78, %s79
      %p93 = scmp.eq.s32.totalorder %s59, 5
      %p94 = por %p92, %p93
      %p96 = scmp.ne.s32.totalorder %s79, %s95
      %p97 = scmp.eq.s32.totalorder %s59, 0
      %p98 = por %p96, %p97
      %s99 = ssub.s32 %s60, %s72
      %p100 = scmp.eq.s32.totalorder %s99, 0
      %s102 = sadd.s32 %s101, 1
      %s103 = scalar_select %p100, %s101, %s102
      %p106 = pneg %p100
      %p107 = scmp.eq.s32.totalorder %s53, 5
      %p108 = por %p106, %p107
      %p109 = scmp.ne.s32.totalorder %s101, %s104
      %p110 = scmp.eq.s32.totalorder %s53, 0
      %p111 = por %p109, %p110
      %p112 = scmp.ne.s32.totalorder %s101, %s104
      %p113 = scmp.eq.s32.totalorder %s58, 5
      %p114 = por %p112, %p113
      %p115 = scmp.ne.s32.totalorder %s104, %s105
      %p116 = scmp.eq.s32.totalorder %s58, 0
      %p117 = por %p115, %p116
      %p118 = scmp.ne.s32.totalorder %s104, %s105
      %p119 = scmp.eq.s32.totalorder %s59, 5
      %p120 = por %p118, %p119
      %p122 = scmp.ne.s32.totalorder %s105, %s121
      %p123 = scmp.eq.s32.totalorder %s59, 0
      %p124 = por %p122, %p123
      %s125 = ssub.s32 %s60, %s72
      %p126 = scmp.eq.s32.totalorder %s125, 0
      %s128 = sadd.s32 %s127, 1
      %s129 = scalar_select %p126, %s127, %s128
      %p132 = pneg %p126
      %p133 = scmp.eq.s32.totalorder %s53, 5
      %p134 = por %p132, %p133
      %p135 = scmp.ne.s32.totalorder %s127, %s130
      %p136 = scmp.eq.s32.totalorder %s53, 0
      %p137 = por %p135, %p136
      %p138 = scmp.ne.s32.totalorder %s127, %s130
      %p139 = scmp.eq.s32.totalorder %s58, 5
      %p140 = por %p138, %p139
      %p141 = scmp.ne.s32.totalorder %s130, %s131
      %p142 = scmp.eq.s32.totalorder %s58, 0
      %p143 = por %p141, %p142
      %p144 = scmp.ne.s32.totalorder %s130, %s131
      %p145 = scmp.eq.s32.totalorder %s59, 5
      %p146 = por %p144, %p145
      %p148 = scmp.ne.s32.totalorder %s131, %s147
      %p149 = scmp.eq.s32.totalorder %s59, 0
      %p150 = por %p148, %p149
      %s151 = ssub.s32 %s61, %s68
      %p152 = scmp.eq.s32.totalorder %s151, 0
      %s154 = sadd.s32 %s153, 1
      %s155 = scalar_select %p152, %s153, %s154
      %p158 = pneg %p152
      %p159 = scmp.eq.s32.totalorder %s53, 5
      %p160 = por %p158, %p159
      %p161 = scmp.ne.s32.totalorder %s153, %s156
      %p162 = scmp.eq.s32.totalorder %s53, 0
      %p163 = por %p161, %p162
      %p164 = scmp.ne.s32.totalorder %s153, %s156
      %p165 = scmp.eq.s32.totalorder %s58, 5
      %p166 = por %p164, %p165
      %p167 = scmp.ne.s32.totalorder %s156, %s157
      %p168 = scmp.eq.s32.totalorder %s58, 0
      %p169 = por %p167, %p168
      %p170 = scmp.ne.s32.totalorder %s156, %s157
      %p171 = scmp.eq.s32.totalorder %s59, 5
      %p172 = por %p170, %p171
      %p174 = scmp.ne.s32.totalorder %s157, %s173
      %p175 = scmp.eq.s32.totalorder %s59, 0
      %p176 = por %p174, %p175
      %s177 = ssub.s32 %s61, %s68
      %p178 = scmp.eq.s32.totalorder %s177, 0
      %s180 = sadd.s32 %s179, 1
      %s181 = scalar_select %p178, %s179, %s180
      %p184 = pneg %p178
      %p185 = scmp.eq.s32.totalorder %s53, 5
      %p186 = por %p184, %p185
      %p187 = scmp.ne.s32.totalorder %s179, %s182
      %p188 = scmp.eq.s32.totalorder %s53, 0
      %p189 = por %p187, %p188
      %p190 = scmp.ne.s32.totalorder %s179, %s182
      %p191 = scmp.eq.s32.totalorder %s58, 5
      %p192 = por %p190, %p191
      %p193 = scmp.ne.s32.totalorder %s182, %s183
      %p194 = scmp.eq.s32.totalorder %s58, 0
      %p195 = por %p193, %p194
      %p196 = scmp.ne.s32.totalorder %s182, %s183
      %p197 = scmp.eq.s32.totalorder %s59, 5
      %p198 = por %p196, %p197
      %p200 = scmp.ne.s32.totalorder %s183, %s199
      %p201 = scmp.eq.s32.totalorder %s59, 0
      %p202 = por %p200, %p201
      %s203 = ssub.s32 %s61, %s68
      %p204 = scmp.eq.s32.totalorder %s203, 0
      %s206 = sadd.s32 %s205, 1
      %s207 = scalar_select %p204, %s205, %s206
      %p210 = pneg %p204
      %p211 = scmp.eq.s32.totalorder %s53, 5
      %p212 = por %p210, %p211
      %p213 = scmp.ne.s32.totalorder %s205, %s208
      %p214 = scmp.eq.s32.totalorder %s53, 0
      %p215 = por %p213, %p214
      %p216 = scmp.ne.s32.totalorder %s205, %s208
      %p217 = scmp.eq.s32.totalorder %s58, 5
      %p218 = por %p216, %p217
      %p219 = scmp.ne.s32.totalorder %s208, %s209
      %p220 = scmp.eq.s32.totalorder %s58, 0
      %p221 = por %p219, %p220
      %p222 = scmp.ne.s32.totalorder %s208, %s209
      %p223 = scmp.eq.s32.totalorder %s59, 5
      %p224 = por %p222, %p223
      %p226 = scmp.ne.s32.totalorder %s209, %s225
      %p227 = scmp.eq.s32.totalorder %s59, 0
      %p228 = por %p226, %p227
      %s229 = ssub.s32 %s61, %s68
      %p230 = scmp.eq.s32.totalorder %s229, 0
      %s232 = sadd.s32 %s231, 1
      %s233 = scalar_select %p230, %s231, %s232
      %p236 = pneg %p230
      %p237 = scmp.eq.s32.totalorder %s53, 5
      %p238 = por %p236, %p237
      %p239 = scmp.ne.s32.totalorder %s231, %s234
      %p240 = scmp.eq.s32.totalorder %s53, 0
      %p241 = por %p239, %p240
      %p242 = scmp.ne.s32.totalorder %s231, %s234
      %p243 = scmp.eq.s32.totalorder %s58, 5
      %p244 = por %p242, %p243
      %p245 = scmp.ne.s32.totalorder %s234, %s235
      %p246 = scmp.eq.s32.totalorder %s58, 0
      %p247 = por %p245, %p246
      %p248 = scmp.ne.s32.totalorder %s234, %s235
      %p249 = scmp.eq.s32.totalorder %s59, 5
      %p250 = por %p248, %p249
      %p252 = scmp.ne.s32.totalorder %s235, %s251
      %p253 = scmp.eq.s32.totalorder %s59, 0
      %p254 = por %p252, %p253
      %s255 = ssub.s32 %s61, %s68
      %p256 = scmp.eq.s32.totalorder %s255, 0
      %s258 = sadd.s32 %s257, 1
      %s259 = scalar_select %p256, %s257, %s258
      %p262 = pneg %p256
      %p263 = scmp.eq.s32.totalorder %s53, 5
      %p264 = por %p262, %p263
      %p265 = scmp.ne.s32.totalorder %s257, %s260
      %p266 = scmp.eq.s32.totalorder %s53, 0
      %p267 = por %p265, %p266
      %p268 = scmp.ne.s32.totalorder %s257, %s260
      %p269 = scmp.eq.s32.totalorder %s58, 5
      %p270 = por %p268, %p269
      %p271 = scmp.ne.s32.totalorder %s260, %s261
      %p272 = scmp.eq.s32.totalorder %s58, 0
      %p273 = por %p271, %p272
      %p274 = scmp.ne.s32.totalorder %s260, %s261
      %p275 = scmp.eq.s32.totalorder %s59, 5
      %p276 = por %p274, %p275
      %p278 = scmp.ne.s32.totalorder %s261, %s277
      %p279 = scmp.eq.s32.totalorder %s59, 0
      %p280 = por %p278, %p279
      %s281 = ssub.s32 %s61, %s68
      %p282 = scmp.eq.s32.totalorder %s281, 0
      %s284 = sadd.s32 %s283, 1
      %s285 = scalar_select %p282, %s283, %s284
      %p288 = pneg %p282
      %p289 = scmp.eq.s32.totalorder %s53, 5
      %p290 = por %p288, %p289
      %p291 = scmp.ne.s32.totalorder %s283, %s286
      %p292 = scmp.eq.s32.totalorder %s53, 0
      %p293 = por %p291, %p292
      %p294 = scmp.ne.s32.totalorder %s283, %s286
      %p295 = scmp.eq.s32.totalorder %s58, 5
      %p296 = por %p294, %p295
      %p297 = scmp.ne.s32.totalorder %s286, %s287
      %p298 = scmp.eq.s32.totalorder %s58, 0
      %p299 = por %p297, %p298
      %p300 = scmp.ne.s32.totalorder %s286, %s287
      %p301 = scmp.eq.s32.totalorder %s59, 5
      %p302 = por %p300, %p301
      %p304 = scmp.ne.s32.totalorder %s287, %s303
      %p305 = scmp.eq.s32.totalorder %s59, 0
      %p306 = por %p304, %p305
      %s307 = ssub.s32 %s61, %s68
      %p308 = scmp.eq.s32.totalorder %s307, 0
      %s310 = sadd.s32 %s309, 1
      %s311 = scalar_select %p308, %s309, %s310
      %p314 = pneg %p308
      %p315 = scmp.eq.s32.totalorder %s53, 5
      %p316 = por %p314, %p315
      %p317 = scmp.ne.s32.totalorder %s309, %s312
      %p318 = scmp.eq.s32.totalorder %s53, 0
      %p319 = por %p317, %p318
      %p320 = scmp.ne.s32.totalorder %s309, %s312
      %p321 = scmp.eq.s32.totalorder %s58, 5
      %p322 = por %p320, %p321
      %p323 = scmp.ne.s32.totalorder %s312, %s313
      %p324 = scmp.eq.s32.totalorder %s58, 0
      %p325 = por %p323, %p324
      %p326 = scmp.ne.s32.totalorder %s312, %s313
      %p327 = scmp.eq.s32.totalorder %s59, 5
      %p328 = por %p326, %p327
      %p330 = scmp.ne.s32.totalorder %s313, %s329
      %p331 = scmp.eq.s32.totalorder %s59, 0
      %p332 = por %p330, %p331
      %s333 = ssub.s32 %s61, %s68
      %p334 = scmp.eq.s32.totalorder %s333, 0
      %s336 = sadd.s32 %s335, 1
      %s337 = scalar_select %p334, %s335, %s336
      %p340 = pneg %p334
      %p341 = scmp.eq.s32.totalorder %s53, 5
      %p342 = por %p340, %p341
      %p343 = scmp.ne.s32.totalorder %s335, %s338
      %p344 = scmp.eq.s32.totalorder %s53, 0
      %p345 = por %p343, %p344
      %p346 = scmp.ne.s32.totalorder %s335, %s338
      %p347 = scmp.eq.s32.totalorder %s58, 5
      %p348 = por %p346, %p347
      %p349 = scmp.ne.s32.totalorder %s338, %s339
      %p350 = scmp.eq.s32.totalorder %s58, 0
      %p351 = por %p349, %p350
      %p352 = scmp.ne.s32.totalorder %s338, %s339
      %p353 = scmp.eq.s32.totalorder %s59, 5
      %p354 = por %p352, %p353
      %p356 = scmp.ne.s32.totalorder %s339, %s355
      %p357 = scmp.eq.s32.totalorder %s59, 0
      %p358 = por %p356, %p357
      %s359 = ssub.s32 %s61, %s68
      %p360 = scmp.eq.s32.totalorder %s359, 0
      %s362 = sadd.s32 %s361, 1
      %s363 = scalar_select %p360, %s361, %s362
      %p366 = pneg %p360
      %p367 = scmp.eq.s32.totalorder %s53, 5
      %p368 = por %p366, %p367
      %p369 = scmp.ne.s32.totalorder %s361, %s364
      %p370 = scmp.eq.s32.totalorder %s53, 0
      %p371 = por %p369, %p370
      %p372 = scmp.ne.s32.totalorder %s361, %s364
      %p373 = scmp.eq.s32.totalorder %s58, 5
      %p374 = por %p372, %p373
      %p375 = scmp.ne.s32.totalorder %s364, %s365
      %p376 = scmp.eq.s32.totalorder %s58, 0
      %p377 = por %p375, %p376
      %p378 = scmp.ne.s32.totalorder %s364, %s365
      %p379 = scmp.eq.s32.totalorder %s59, 5
      %p380 = por %p378, %p379
      %p382 = scmp.ne.s32.totalorder %s365, %s381
      %p383 = scmp.eq.s32.totalorder %s59, 0
      %p384 = por %p382, %p383
      %s385 = ssub.s32 %s61, %s68
      %p386 = scmp.eq.s32.totalorder %s385, 0
      %s388 = sadd.s32 %s387, 1
      %s389 = scalar_select %p386, %s387, %s388
      %p392 = pneg %p386
      %p393 = scmp.eq.s32.totalorder %s53, 5
      %p394 = por %p392, %p393
      %p395 = scmp.ne.s32.totalorder %s387, %s390
      %p396 = scmp.eq.s32.totalorder %s53, 0
      %p397 = por %p395, %p396
      %p398 = scmp.ne.s32.totalorder %s387, %s390
      %p399 = scmp.eq.s32.totalorder %s58, 5
      %p400 = por %p398, %p399
      %p401 = scmp.ne.s32.totalorder %s390, %s391
      %p402 = scmp.eq.s32.totalorder %s58, 0
      %p403 = por %p401, %p402
      %p404 = scmp.ne.s32.totalorder %s390, %s391
      %p405 = scmp.eq.s32.totalorder %s59, 5
      %p406 = por %p404, %p405
      %p408 = scmp.ne.s32.totalorder %s391, %s407
      %p409 = scmp.eq.s32.totalorder %s59, 0
      %p410 = por %p408, %p409
      %s411 = ssub.s32 %s61, %s68
      %p412 = scmp.eq.s32.totalorder %s411, 0
      %s414 = sadd.s32 %s413, 1
      %s415 = scalar_select %p412, %s413, %s414
      %p418 = pneg %p412
      %p419 = scmp.eq.s32.totalorder %s53, 5
      %p420 = por %p418, %p419
      %p421 = scmp.ne.s32.totalorder %s413, %s416
      %p422 = scmp.eq.s32.totalorder %s53, 0
      %p423 = por %p421, %p422
      %p424 = scmp.ne.s32.totalorder %s413, %s416
      %p425 = scmp.eq.s32.totalorder %s58, 5
      %p426 = por %p424, %p425
      %p427 = scmp.ne.s32.totalorder %s416, %s417
      %p428 = scmp.eq.s32.totalorder %s58, 0
      %p429 = por %p427, %p428
      %p430 = scmp.ne.s32.totalorder %s416, %s417
      %p431 = scmp.eq.s32.totalorder %s59, 5
      %p432 = por %p430, %p431
      %p434 = scmp.ne.s32.totalorder %s417, %s433
      %p435 = scmp.eq.s32.totalorder %s59, 0
      %p436 = por %p434, %p435
      %s437 = ssub.s32 %s61, %s68
      %p438 = scmp.eq.s32.totalorder %s437, 0
      %s440 = sadd.s32 %s439, 1
      %s441 = scalar_select %p438, %s439, %s440
      %p444 = pneg %p438
      %p445 = scmp.eq.s32.totalorder %s53, 5
      %p446 = por %p444, %p445
      %p447 = scmp.ne.s32.totalorder %s439, %s442
      %p448 = scmp.eq.s32.totalorder %s53, 0
      %p449 = por %p447, %p448
      %p450 = scmp.ne.s32.totalorder %s439, %s442
      %p451 = scmp.eq.s32.totalorder %s58, 5
      %p452 = por %p450, %p451
      %p453 = scmp.ne.s32.totalorder %s442, %s443
      %p454 = scmp.eq.s32.totalorder %s58, 0
      %p455 = por %p453, %p454
      %p456 = scmp.ne.s32.totalorder %s442, %s443
      %p457 = scmp.eq.s32.totalorder %s59, 5
      %p458 = por %p456, %p457
      %p460 = scmp.ne.s32.totalorder %s443, %s459
      %p461 = scmp.eq.s32.totalorder %s59, 0
      %p462 = por %p460, %p461
      %s463 = ssub.s32 %s61, %s68
      %p464 = scmp.eq.s32.totalorder %s463, 0
      %s466 = sadd.s32 %s465, 1
      %s467 = scalar_select %p464, %s465, %s466
      %p470 = pneg %p464
      %p471 = scmp.eq.s32.totalorder %s53, 5
      %p472 = por %p470, %p471
      %p473 = scmp.ne.s32.totalorder %s465, %s468
      %p474 = scmp.eq.s32.totalorder %s53, 0
      %p475 = por %p473, %p474
      %p476 = scmp.ne.s32.totalorder %s465, %s468
      %p477 = scmp.eq.s32.totalorder %s58, 5
      %p478 = por %p476, %p477
      %p479 = scmp.ne.s32.totalorder %s468, %s469
      %p480 = scmp.eq.s32.totalorder %s58, 0
      %p481 = por %p479, %p480
      %p482 = scmp.ne.s32.totalorder %s468, %s469
      %p483 = scmp.eq.s32.totalorder %s59, 5
      %p484 = por %p482, %p483
      %p486 = scmp.ne.s32.totalorder %s469, %s485
      %p487 = scmp.eq.s32.totalorder %s59, 0
      %p488 = por %p486, %p487
      %s489 = ssub.s32 %s61, %s68
      %p490 = scmp.eq.s32.totalorder %s489, 0
      %s492 = sadd.s32 %s491, 1
      %s493 = scalar_select %p490, %s491, %s492
      %p496 = pneg %p490
      %p497 = scmp.eq.s32.totalorder %s53, 5
      %p498 = por %p496, %p497
      %p499 = scmp.ne.s32.totalorder %s491, %s494
      %p500 = scmp.eq.s32.totalorder %s53, 0
      %p501 = por %p499, %p500
      %p502 = scmp.ne.s32.totalorder %s491, %s494
      %p503 = scmp.eq.s32.totalorder %s58, 5
      %p504 = por %p502, %p503
      %p505 = scmp.ne.s32.totalorder %s494, %s495
      %p506 = scmp.eq.s32.totalorder %s58, 0
      %p507 = por %p505, %p506
      %p508 = scmp.ne.s32.totalorder %s494, %s495
      %p509 = scmp.eq.s32.totalorder %s59, 5
      %p510 = por %p508, %p509
      %p512 = scmp.ne.s32.totalorder %s495, %s511
      %p513 = scmp.eq.s32.totalorder %s59, 0
      %p514 = por %p512, %p513
      %s515 = ssub.s32 %s60, %s72
      %p516 = scmp.eq.s32.totalorder %s515, 0
      %s518 = sadd.s32 %s517, 1
      %s519 = scalar_select %p516, %s517, %s518
      %p522 = pneg %p516
      %p523 = scmp.eq.s32.totalorder %s53, 5
      %p524 = por %p522, %p523
      %p525 = scmp.ne.s32.totalorder %s517, %s520
      %p526 = scmp.eq.s32.totalorder %s53, 0
      %p527 = por %p525, %p526
      %p528 = scmp.ne.s32.totalorder %s517, %s520
      %p529 = scmp.eq.s32.totalorder %s58, 5
      %p530 = por %p528, %p529
      %p531 = scmp.ne.s32.totalorder %s520, %s521
      %p532 = scmp.eq.s32.totalorder %s58, 0
      %p533 = por %p531, %p532
      %p534 = scmp.ne.s32.totalorder %s520, %s521
      %p535 = scmp.eq.s32.totalorder %s59, 5
      %p536 = por %p534, %p535
      %p538 = scmp.ne.s32.totalorder %s521, %s537
      %p539 = scmp.eq.s32.totalorder %s59, 0
      %p540 = por %p538, %p539
      %p541 = scmp.le.s32.totalorder 1, %s53
      %p542 = scmp.lt.s32.totalorder %s53, 7
      %p543 = pnand %p541, %p542
      %p544 = pneg %p543
      // Predicated region
      $region9: #{transformer_encoder_pallas.1} parent=5 // pred_check
        _
      $region10: #{transformer_encoder_pallas.1} parent=5 // pred_check_branch
        %546 = sbr.rel (%p543) target = $region12
      $region11: #{transformer_encoder_pallas.1} parent=5 // pred_region
        %s547 = ssub.s32 %s53, 1
      $region12: #{transformer_encoder_pallas.1} parent=5 // pred_fallthru
        _
      %p548 = scmp.lt.s32.totalorder %s53, 6
      // Predicated region
      $region13: #{transformer_encoder_pallas.1} parent=5 // pred_check
        %p549 = pneg %p548
      $region14: #{transformer_encoder_pallas.1} parent=5 // pred_check_branch
        %551 = sbr.rel (%p549) target = $region16
      $region15: #{transformer_encoder_pallas.1} parent=5 // pred_region
        // Predicated region
        $region17: #{transformer_encoder_pallas.1} parent=15 // pred_check
          %p552 = pneg %p85
        $region18: #{transformer_encoder_pallas.1} parent=15 // pred_check_branch
          %554 = sbr.rel (%p552) target = $region20
        $region19: #{transformer_encoder_pallas.1} parent=15 // pred_region
          %s555 = sand.u32 %s75, 1
          %s556 = scalar_lea.sflag [#allocation4], %s555
          %s557 = sand.u32 %s75, 1
          %s558 = smul.addr %s557, 32
          %s559 = scalar_lea.vmem [#allocation3], %s558
          %561 = vsyncadd %s556, 0
          %s562 = smul.addr %s60, 4
          %s563 = smul.addr %s562, 8
          %s564 = scalar_lea.hbm %s0, %s563
          %s565 = sshll.u32 %s564, 4
          %s566 = int_to_ptr.hbm [resolvable:$true] %s565
          %s567 = sshll.u32 %s559, 4
          %s568 = int_to_ptr.vmem [resolvable:$true] %s567
          %573 = dma.hbm_to_vmem [thread:$0]  %s566, 512, %s568, %s556, 256, 256, 16
        $region20: #{transformer_encoder_pallas.1} parent=15 // pred_fallthru
          _
        // Predicated region
        $region21: #{transformer_encoder_pallas.1} parent=15 // pred_check
          %p574 = pneg %p111
        $region22: #{transformer_encoder_pallas.1} parent=15 // pred_check_branch
          %576 = sbr.rel (%p574) target = $region24
        $region23: #{transformer_encoder_pallas.1} parent=15 // pred_region
          %s577 = sand.u32 %s53, 1
          %s578 = scalar_lea.sflag [#allocation7], %s577
          %s579 = sand.u32 %s101, 1
          %s580 = smul.addr %s579, 32
          %s581 = scalar_lea.vmem [#allocation6], %s580
          %583 = vsyncadd %s578, 0
          %s584 = smul.addr %s60, 4
          %s585 = smul.addr %s584, 8
          %s586 = scalar_lea.hbm %s1, %s585
          %s587 = sshll.u32 %s586, 4
          %s588 = int_to_ptr.hbm [resolvable:$true] %s587
          %s589 = sshll.u32 %s581, 4
          %s590 = int_to_ptr.vmem [resolvable:$true] %s589
          %595 = dma.hbm_to_vmem [thread:$0]  %s588, 512, %s590, %s578, 256, 256, 16
        $region24: #{transformer_encoder_pallas.1} parent=15 // pred_fallthru
          _
        // Predicated region
        $region25: #{transformer_encoder_pallas.1} parent=15 // pred_check
          %p596 = pneg %p137
        $region26: #{transformer_encoder_pallas.1} parent=15 // pred_check_branch
          %598 = sbr.rel (%p596) target = $region28
        $region27: #{transformer_encoder_pallas.1} parent=15 // pred_region
          %p599 = scmp.lt.s32.totalorder %s60, 1
          %s600 = scalar_select %p599, %s60, 1
          %s601 = scalar_lea.vmem %s2, %s600
        $region28: #{transformer_encoder_pallas.1} parent=15 // pred_fallthru
          _
        // Predicated region
        $region29: #{transformer_encoder_pallas.1} parent=15 // pred_check
          %p602 = pneg %p163
        $region30: #{transformer_encoder_pallas.1} parent=15 // pred_check_branch
          %604 = sbr.rel (%p602) target = $region32
        $region31: #{transformer_encoder_pallas.1} parent=15 // pred_region
          %s605 = sand.u32 %s53, 1
          %s606 = scalar_lea.sflag [#allocation7], %s605
          %s607 = sand.u32 %s153, 1
          %s608 = smul.addr %s607, 1024
          %s609 = scalar_lea.vmem [#allocation8], %s608
          %611 = vsyncadd %s606, 0
          %s612 = smul.addr %s61, 256
          %s613 = smul.addr %s612, 4
          %s614 = scalar_lea.hbm %s3, %s613
          %s615 = sshll.u32 %s614, 4
          %s616 = int_to_ptr.hbm [resolvable:$true] %s615
          %s617 = sshll.u32 %s609, 4
          %s618 = int_to_ptr.vmem [resolvable:$true] %s617
          %623 = dma.hbm_to_vmem [thread:$0]  %s616, 16384, %s618, %s606, 512, 512, 32
        $region32: #{transformer_encoder_pallas.1} parent=15 // pred_fallthru
          _
        // Predicated region
        $region33: #{transformer_encoder_pallas.1} parent=15 // pred_check
          %p624 = pneg %p189
        $region34: #{transformer_encoder_pallas.1} parent=15 // pred_check_branch
          %626 = sbr.rel (%p624) target = $region36
        $region35: #{transformer_encoder_pallas.1} parent=15 // pred_region
          %s627 = sand.u32 %s53, 1
          %s628 = scalar_lea.sflag [#allocation10], %s627
          %s629 = sand.u32 %s179, 1
          %s630 = smul.addr %s629, 8
          %s631 = scalar_lea.vmem [#allocation9], %s630
          %633 = vsyncadd %s628, 0
          %s634 = smul.addr %s61, 8
          %s635 = scalar_lea.hbm %s4, %s634
          %s637 = sshll.u32 %s635, 4
          %s638 = int_to_ptr.hbm [resolvable:$true] %s637
          %s639 = sshll.u32 %s631, 4
          %s640 = int_to_ptr.vmem [resolvable:$true] %s639
          %642 = dma.hbm_to_vmem [thread:$0]  %s638, 128, %s640, %s628
        $region36: #{transformer_encoder_pallas.1} parent=15 // pred_fallthru
          _
        // Predicated region
        $region37: #{transformer_encoder_pallas.1} parent=15 // pred_check
          %p643 = pneg %p215
        $region38: #{transformer_encoder_pallas.1} parent=15 // pred_check_branch
          %645 = sbr.rel (%p643) target = $region40
        $region39: #{transformer_encoder_pallas.1} parent=15 // pred_region
          %s646 = sand.u32 %s53, 1
          %s647 = scalar_lea.sflag [#allocation10], %s646
          %s648 = sand.u32 %s205, 1
          %s649 = smul.addr %s648, 512
          %s650 = scalar_lea.vmem [#allocation11], %s649
          %652 = vsyncadd %s647, 0
          %s653 = smul.addr %s61, 128
          %s654 = smul.addr %s653, 4
          %s655 = scalar_lea.hbm %s5, %s654
          %s656 = sshll.u32 %s655, 4
          %s657 = int_to_ptr.hbm [resolvable:$true] %s656
          %s658 = sshll.u32 %s650, 4
          %s659 = int_to_ptr.vmem [resolvable:$true] %s658
          %664 = dma.hbm_to_vmem [thread:$0]  %s657, 8192, %s659, %s647, 256, 256, 16
        $region40: #{transformer_encoder_pallas.1} parent=15 // pred_fallthru
          _
        // Predicated region
        $region41: #{transformer_encoder_pallas.1} parent=15 // pred_check
          %p665 = pneg %p241
        $region42: #{transformer_encoder_pallas.1} parent=15 // pred_check_branch
          %667 = sbr.rel (%p665) target = $region44
        $region43: #{transformer_encoder_pallas.1} parent=15 // pred_region
          %s668 = sand.u32 %s53, 1
          %s669 = scalar_lea.sflag [#allocation13], %s668
          %s670 = sand.u32 %s231, 1
          %s671 = smul.addr %s670, 4
          %s672 = scalar_lea.vmem [#allocation12], %s671
          %674 = vsyncadd %s669, 0
          %s675 = smul.addr %s61, 4
          %s676 = scalar_lea.hbm %s6, %s675
          %s678 = sshll.u32 %s676, 4
          %s679 = int_to_ptr.hbm [resolvable:$true] %s678
          %s680 = sshll.u32 %s672, 4
          %s681 = int_to_ptr.vmem [resolvable:$true] %s680
          %683 = dma.hbm_to_vmem [thread:$0]  %s679, 64, %s681, %s669
        $region44: #{transformer_encoder_pallas.1} parent=15 // pred_fallthru
          _
        // Predicated region
        $region45: #{transformer_encoder_pallas.1} parent=15 // pred_check
          %p684 = pneg %p267
        $region46: #{transformer_encoder_pallas.1} parent=15 // pred_check_branch
          %686 = sbr.rel (%p684) target = $region48
        $region47: #{transformer_encoder_pallas.1} parent=15 // pred_region
          %s687 = sand.u32 %s53, 1
          %s688 = scalar_lea.sflag [#allocation13], %s687
          %s689 = sand.u32 %s257, 1
          %s690 = smul.addr %s689, 512
          %s691 = scalar_lea.vmem [#allocation14], %s690
          %693 = vsyncadd %s688, 0
          %s694 = smul.addr %s61, 128
          %s695 = smul.addr %s694, 4
          %s696 = scalar_lea.hbm %s7, %s695
          %s697 = sshll.u32 %s696, 4
          %s698 = int_to_ptr.hbm [resolvable:$true] %s697
          %s699 = sshll.u32 %s691, 4
          %s700 = int_to_ptr.vmem [resolvable:$true] %s699
          %705 = dma.hbm_to_vmem [thread:$0]  %s698, 8192, %s700, %s688, 128, 128, 8
        $region48: #{transformer_encoder_pallas.1} parent=15 // pred_fallthru
          _
        // Predicated region
        $region49: #{transformer_encoder_pallas.1} parent=15 // pred_check
          %p706 = pneg %p293
        $region50: #{transformer_encoder_pallas.1} parent=15 // pred_check_branch
          %708 = sbr.rel (%p706) target = $region52
        $region51: #{transformer_encoder_pallas.1} parent=15 // pred_region
          %s709 = sand.u32 %s53, 1
          %s710 = scalar_lea.sflag [#allocation16], %s709
          %s711 = sand.u32 %s283, 1
          %s712 = smul.addr %s711, 2
          %s713 = scalar_lea.vmem [#allocation15], %s712
          %715 = vsyncadd %s710, 0
          %s716 = smul.addr %s61, 2
          %s717 = scalar_lea.hbm %s8, %s716
          %s719 = sshll.u32 %s717, 4
          %s720 = int_to_ptr.hbm [resolvable:$true] %s719
          %s721 = sshll.u32 %s713, 4
          %s722 = int_to_ptr.vmem [resolvable:$true] %s721
          %724 = dma.hbm_to_vmem [thread:$0]  %s720, 32, %s722, %s710
        $region52: #{transformer_encoder_pallas.1} parent=15 // pred_fallthru
          _
        // Predicated region
        $region53: #{transformer_encoder_pallas.1} parent=15 // pred_check
          %p725 = pneg %p319
        $region54: #{transformer_encoder_pallas.1} parent=15 // pred_check_branch
          %727 = sbr.rel (%p725) target = $region56
        $region55: #{transformer_encoder_pallas.1} parent=15 // pred_region
          %s728 = sand.u32 %s53, 1
          %s729 = scalar_lea.sflag [#allocation16], %s728
          %s730 = sand.u32 %s309, 1
          %s731 = smul.addr %s730, 2
          %s732 = scalar_lea.vmem [#allocation17], %s731
          %734 = vsyncadd %s729, 0
          %s735 = smul.addr %s61, 2
          %s736 = scalar_lea.hbm %s9, %s735
          %s738 = sshll.u32 %s736, 4
          %s739 = int_to_ptr.hbm [resolvable:$true] %s738
          %s740 = sshll.u32 %s732, 4
          %s741 = int_to_ptr.vmem [resolvable:$true] %s740
          %743 = dma.hbm_to_vmem [thread:$0]  %s739, 32, %s741, %s729
        $region56: #{transformer_encoder_pallas.1} parent=15 // pred_fallthru
          _
        // Predicated region
        $region57: #{transformer_encoder_pallas.1} parent=15 // pred_check
          %p744 = pneg %p345
        $region58: #{transformer_encoder_pallas.1} parent=15 // pred_check_branch
          %746 = sbr.rel (%p744) target = $region60
        $region59: #{transformer_encoder_pallas.1} parent=15 // pred_region
          %s747 = sand.u32 %s53, 1
          %s748 = scalar_lea.sflag [#allocation19], %s747
          %s749 = sand.u32 %s335, 1
          %s750 = smul.addr %s749, 2
          %s751 = scalar_lea.vmem [#allocation18], %s750
          %753 = vsyncadd %s748, 0
          %s754 = smul.addr %s61, 2
          %s755 = scalar_lea.hbm %s10, %s754
          %s757 = sshll.u32 %s755, 4
          %s758 = int_to_ptr.hbm [resolvable:$true] %s757
          %s759 = sshll.u32 %s751, 4
          %s760 = int_to_ptr.vmem [resolvable:$true] %s759
          %762 = dma.hbm_to_vmem [thread:$0]  %s758, 32, %s760, %s748
        $region60: #{transformer_encoder_pallas.1} parent=15 // pred_fallthru
          _
        // Predicated region
        $region61: #{transformer_encoder_pallas.1} parent=15 // pred_check
          %p763 = pneg %p371
        $region62: #{transformer_encoder_pallas.1} parent=15 // pred_check_branch
          %765 = sbr.rel (%p763) target = $region64
        $region63: #{transformer_encoder_pallas.1} parent=15 // pred_region
          %s766 = sand.u32 %s53, 1
          %s767 = scalar_lea.sflag [#allocation19], %s766
          %s768 = sand.u32 %s361, 1
          %s769 = smul.addr %s768, 512
          %s770 = scalar_lea.vmem [#allocation20], %s769
          %772 = vsyncadd %s767, 0
          %s773 = smul.addr %s61, 128
          %s774 = smul.addr %s773, 4
          %s775 = scalar_lea.hbm %s11, %s774
          %s776 = sshll.u32 %s775, 4
          %s777 = int_to_ptr.hbm [resolvable:$true] %s776
          %s778 = sshll.u32 %s770, 4
          %s779 = int_to_ptr.vmem [resolvable:$true] %s778
          %784 = dma.hbm_to_vmem [thread:$0]  %s777, 8192, %s779, %s767, 256, 256, 16
        $region64: #{transformer_encoder_pallas.1} parent=15 // pred_fallthru
          _
        // Predicated region
        $region65: #{transformer_encoder_pallas.1} parent=15 // pred_check
          %p785 = pneg %p397
        $region66: #{transformer_encoder_pallas.1} parent=15 // pred_check_branch
          %787 = sbr.rel (%p785) target = $region68
        $region67: #{transformer_encoder_pallas.1} parent=15 // pred_region
          %s788 = sand.u32 %s53, 1
          %s789 = scalar_lea.sflag [#allocation22], %s788
          %s790 = sand.u32 %s387, 1
          %s791 = smul.addr %s790, 4
          %s792 = scalar_lea.vmem [#allocation21], %s791
          %794 = vsyncadd %s789, 0
          %s795 = smul.addr %s61, 4
          %s796 = scalar_lea.hbm %s12, %s795
          %s798 = sshll.u32 %s796, 4
          %s799 = int_to_ptr.hbm [resolvable:$true] %s798
          %s800 = sshll.u32 %s792, 4
          %s801 = int_to_ptr.vmem [resolvable:$true] %s800
          %803 = dma.hbm_to_vmem [thread:$0]  %s799, 64, %s801, %s789
        $region68: #{transformer_encoder_pallas.1} parent=15 // pred_fallthru
          _
        // Predicated region
        $region69: #{transformer_encoder_pallas.1} parent=15 // pred_check
          %p804 = pneg %p423
        $region70: #{transformer_encoder_pallas.1} parent=15 // pred_check_branch
          %806 = sbr.rel (%p804) target = $region72
        $region71: #{transformer_encoder_pallas.1} parent=15 // pred_region
          %s807 = sand.u32 %s53, 1
          %s808 = scalar_lea.sflag [#allocation22], %s807
          %s809 = sand.u32 %s413, 1
          %s810 = smul.addr %s809, 512
          %s811 = scalar_lea.vmem [#allocation23], %s810
          %813 = vsyncadd %s808, 0
          %s814 = smul.addr %s61, 128
          %s815 = smul.addr %s814, 4
          %s816 = scalar_lea.hbm %s13, %s815
          %s817 = sshll.u32 %s816, 4
          %s818 = int_to_ptr.hbm [resolvable:$true] %s817
          %s819 = sshll.u32 %s811, 4
          %s820 = int_to_ptr.vmem [resolvable:$true] %s819
          %825 = dma.hbm_to_vmem [thread:$0]  %s818, 8192, %s820, %s808, 128, 128, 8
        $region72: #{transformer_encoder_pallas.1} parent=15 // pred_fallthru
          _
        // Predicated region
        $region73: #{transformer_encoder_pallas.1} parent=15 // pred_check
          %p826 = pneg %p449
        $region74: #{transformer_encoder_pallas.1} parent=15 // pred_check_branch
          %828 = sbr.rel (%p826) target = $region76
        $region75: #{transformer_encoder_pallas.1} parent=15 // pred_region
          %s829 = sand.u32 %s53, 1
          %s830 = scalar_lea.sflag [#allocation25], %s829
          %s831 = sand.u32 %s439, 1
          %s832 = smul.addr %s831, 2
          %s833 = scalar_lea.vmem [#allocation24], %s832
          %835 = vsyncadd %s830, 0
          %s836 = smul.addr %s61, 2
          %s837 = scalar_lea.hbm %s14, %s836
          %s839 = sshll.u32 %s837, 4
          %s840 = int_to_ptr.hbm [resolvable:$true] %s839
          %s841 = sshll.u32 %s833, 4
          %s842 = int_to_ptr.vmem [resolvable:$true] %s841
          %844 = dma.hbm_to_vmem [thread:$0]  %s840, 32, %s842, %s830
        $region76: #{transformer_encoder_pallas.1} parent=15 // pred_fallthru
          _
        // Predicated region
        $region77: #{transformer_encoder_pallas.1} parent=15 // pred_check
          %p845 = pneg %p475
        $region78: #{transformer_encoder_pallas.1} parent=15 // pred_check_branch
          %847 = sbr.rel (%p845) target = $region80
        $region79: #{transformer_encoder_pallas.1} parent=15 // pred_region
          %s848 = sand.u32 %s53, 1
          %s849 = scalar_lea.sflag [#allocation25], %s848
          %s850 = sand.u32 %s465, 1
          %s851 = smul.addr %s850, 2
          %s852 = scalar_lea.vmem [#allocation26], %s851
          %854 = vsyncadd %s849, 0
          %s855 = smul.addr %s61, 2
          %s856 = scalar_lea.hbm %s15, %s855
          %s858 = sshll.u32 %s856, 4
          %s859 = int_to_ptr.hbm [resolvable:$true] %s858
          %s860 = sshll.u32 %s852, 4
          %s861 = int_to_ptr.vmem [resolvable:$true] %s860
          %863 = dma.hbm_to_vmem [thread:$0]  %s859, 32, %s861, %s849
        $region80: #{transformer_encoder_pallas.1} parent=15 // pred_fallthru
          _
        // Predicated region
        $region81: #{transformer_encoder_pallas.1} parent=15 // pred_check
          %p864 = pneg %p501
        $region82: #{transformer_encoder_pallas.1} parent=15 // pred_check_branch
          %866 = sbr.rel (%p864) target = $region84
        $region83: #{transformer_encoder_pallas.1} parent=15 // pred_region
          %s867 = sand.u32 %s491, 1
          %s868 = scalar_lea.sflag [#allocation28], %s867
          %s869 = sand.u32 %s491, 1
          %s870 = smul.addr %s869, 2
          %s871 = scalar_lea.vmem [#allocation27], %s870
          %873 = vsyncadd %s868, 0
          %s874 = smul.addr %s61, 2
          %s875 = scalar_lea.hbm %s16, %s874
          %s877 = sshll.u32 %s875, 4
          %s878 = int_to_ptr.hbm [resolvable:$true] %s877
          %s879 = sshll.u32 %s871, 4
          %s880 = int_to_ptr.vmem [resolvable:$true] %s879
          %882 = dma.hbm_to_vmem [thread:$0]  %s878, 32, %s880, %s868
        $region84: #{transformer_encoder_pallas.1} parent=15 // pred_fallthru
          _
      $region16: #{transformer_encoder_pallas.1} parent=5 // pred_fallthru
        _
      %p883 = scmp.le.s32.totalorder 1, %s53
      %p884 = scmp.lt.s32.totalorder %s53, 7
      %p885 = pnand %p883, %p884
      %p886 = pneg %p885
      // Predicated region
      $region85: #{transformer_encoder_pallas.1} parent=5 // pred_check
        _
      $region86: #{transformer_encoder_pallas.1} parent=5 // pred_check_branch
        %888 = sbr.rel (%p885) target = $region88
      $region87: #{transformer_encoder_pallas.1} parent=5 // pred_region
        %s889 = ssub.s32 %s53, 1
        %s890 = sand.u32 %s78, 1
        %s891 = scalar_lea.sflag [#allocation4], %s890
        %s892 = sand.u32 %s78, 1
        %s893 = smul.addr %s892, 32
        %s894 = scalar_lea.vmem [#allocation3], %s893
        // Predicated region
        $region89: #{transformer_encoder_pallas.1} parent=87 // pred_check
          %p895 = pneg %p91
        $region90: #{transformer_encoder_pallas.1} parent=87 // pred_check_branch
          %897 = sbr.rel (%p895) target = $region92
        $region91: #{transformer_encoder_pallas.1} parent=87 // pred_region
          %899 = dma.done %s891, 512
        $region92: #{transformer_encoder_pallas.1} parent=87 // pred_fallthru
          _
        %s900 = sand.u32 %s58, 1
        %s901 = scalar_lea.sflag [#allocation7], %s900
        %s902 = sand.u32 %s104, 1
        %s903 = smul.addr %s902, 32
        %s904 = scalar_lea.vmem [#allocation6], %s903
        // Predicated region
        $region93: #{transformer_encoder_pallas.1} parent=87 // pred_check
          %p905 = pneg %p117
        $region94: #{transformer_encoder_pallas.1} parent=87 // pred_check_branch
          %907 = sbr.rel (%p905) target = $region96
        $region95: #{transformer_encoder_pallas.1} parent=87 // pred_region
          %909 = dma.done %s901, 512
        $region96: #{transformer_encoder_pallas.1} parent=87 // pred_fallthru
          _
        %s910 = sand.u32 %s58, 1
        %s911 = scalar_lea.sflag [#allocation7], %s910
        %s912 = sand.u32 %s156, 1
        %s913 = smul.addr %s912, 1024
        %s914 = scalar_lea.vmem [#allocation8], %s913
        // Predicated region
        $region97: #{transformer_encoder_pallas.1} parent=87 // pred_check
          %p915 = pneg %p169
        $region98: #{transformer_encoder_pallas.1} parent=87 // pred_check_branch
          %917 = sbr.rel (%p915) target = $region100
        $region99: #{transformer_encoder_pallas.1} parent=87 // pred_region
          %919 = dma.done %s911, 16384
        $region100: #{transformer_encoder_pallas.1} parent=87 // pred_fallthru
          _
        %s920 = sand.u32 %s58, 1
        %s921 = scalar_lea.sflag [#allocation10], %s920
        %s922 = sand.u32 %s182, 1
        %s923 = smul.addr %s922, 8
        %s924 = scalar_lea.vmem [#allocation9], %s923
        // Predicated region
        $region101: #{transformer_encoder_pallas.1} parent=87 // pred_check
          %p925 = pneg %p195
        $region102: #{transformer_encoder_pallas.1} parent=87 // pred_check_branch
          %927 = sbr.rel (%p925) target = $region104
        $region103: #{transformer_encoder_pallas.1} parent=87 // pred_region
          %929 = dma.done %s921, 128
        $region104: #{transformer_encoder_pallas.1} parent=87 // pred_fallthru
          _
        %s930 = sand.u32 %s58, 1
        %s931 = scalar_lea.sflag [#allocation10], %s930
        %s932 = sand.u32 %s208, 1
        %s933 = smul.addr %s932, 512
        %s934 = scalar_lea.vmem [#allocation11], %s933
        // Predicated region
        $region105: #{transformer_encoder_pallas.1} parent=87 // pred_check
          %p935 = pneg %p221
        $region106: #{transformer_encoder_pallas.1} parent=87 // pred_check_branch
          %937 = sbr.rel (%p935) target = $region108
        $region107: #{transformer_encoder_pallas.1} parent=87 // pred_region
          %939 = dma.done %s931, 8192
        $region108: #{transformer_encoder_pallas.1} parent=87 // pred_fallthru
          _
        %s940 = sand.u32 %s58, 1
        %s941 = scalar_lea.sflag [#allocation13], %s940
        %s942 = sand.u32 %s234, 1
        %s943 = smul.addr %s942, 4
        %s944 = scalar_lea.vmem [#allocation12], %s943
        // Predicated region
        $region109: #{transformer_encoder_pallas.1} parent=87 // pred_check
          %p945 = pneg %p247
        $region110: #{transformer_encoder_pallas.1} parent=87 // pred_check_branch
          %947 = sbr.rel (%p945) target = $region112
        $region111: #{transformer_encoder_pallas.1} parent=87 // pred_region
          %949 = dma.done %s941, 64
        $region112: #{transformer_encoder_pallas.1} parent=87 // pred_fallthru
          _
        %s950 = sand.u32 %s58, 1
        %s951 = scalar_lea.sflag [#allocation13], %s950
        %s952 = sand.u32 %s260, 1
        %s953 = smul.addr %s952, 512
        %s954 = scalar_lea.vmem [#allocation14], %s953
        // Predicated region
        $region113: #{transformer_encoder_pallas.1} parent=87 // pred_check
          %p955 = pneg %p273
        $region114: #{transformer_encoder_pallas.1} parent=87 // pred_check_branch
          %957 = sbr.rel (%p955) target = $region116
        $region115: #{transformer_encoder_pallas.1} parent=87 // pred_region
          %959 = dma.done %s951, 8192
        $region116: #{transformer_encoder_pallas.1} parent=87 // pred_fallthru
          _
        %s960 = sand.u32 %s58, 1
        %s961 = scalar_lea.sflag [#allocation16], %s960
        %s962 = sand.u32 %s286, 1
        %s963 = smul.addr %s962, 2
        %s964 = scalar_lea.vmem [#allocation15], %s963
        // Predicated region
        $region117: #{transformer_encoder_pallas.1} parent=87 // pred_check
          %p965 = pneg %p299
        $region118: #{transformer_encoder_pallas.1} parent=87 // pred_check_branch
          %967 = sbr.rel (%p965) target = $region120
        $region119: #{transformer_encoder_pallas.1} parent=87 // pred_region
          %969 = dma.done %s961, 32
        $region120: #{transformer_encoder_pallas.1} parent=87 // pred_fallthru
          _
        %s970 = sand.u32 %s58, 1
        %s971 = scalar_lea.sflag [#allocation16], %s970
        %s972 = sand.u32 %s312, 1
        %s973 = smul.addr %s972, 2
        %s974 = scalar_lea.vmem [#allocation17], %s973
        // Predicated region
        $region121: #{transformer_encoder_pallas.1} parent=87 // pred_check
          %p975 = pneg %p325
        $region122: #{transformer_encoder_pallas.1} parent=87 // pred_check_branch
          %977 = sbr.rel (%p975) target = $region124
        $region123: #{transformer_encoder_pallas.1} parent=87 // pred_region
          %979 = dma.done %s971, 32
        $region124: #{transformer_encoder_pallas.1} parent=87 // pred_fallthru
          _
        %s980 = sand.u32 %s58, 1
        %s981 = scalar_lea.sflag [#allocation19], %s980
        %s982 = sand.u32 %s338, 1
        %s983 = smul.addr %s982, 2
        %s984 = scalar_lea.vmem [#allocation18], %s983
        // Predicated region
        $region125: #{transformer_encoder_pallas.1} parent=87 // pred_check
          %p985 = pneg %p351
        $region126: #{transformer_encoder_pallas.1} parent=87 // pred_check_branch
          %987 = sbr.rel (%p985) target = $region128
        $region127: #{transformer_encoder_pallas.1} parent=87 // pred_region
          %989 = dma.done %s981, 32
        $region128: #{transformer_encoder_pallas.1} parent=87 // pred_fallthru
          _
        %s990 = sand.u32 %s58, 1
        %s991 = scalar_lea.sflag [#allocation19], %s990
        %s992 = sand.u32 %s364, 1
        %s993 = smul.addr %s992, 512
        %s994 = scalar_lea.vmem [#allocation20], %s993
        // Predicated region
        $region129: #{transformer_encoder_pallas.1} parent=87 // pred_check
          %p995 = pneg %p377
        $region130: #{transformer_encoder_pallas.1} parent=87 // pred_check_branch
          %997 = sbr.rel (%p995) target = $region132
        $region131: #{transformer_encoder_pallas.1} parent=87 // pred_region
          %999 = dma.done %s991, 8192
        $region132: #{transformer_encoder_pallas.1} parent=87 // pred_fallthru
          _
        %s1000 = sand.u32 %s58, 1
        %s1001 = scalar_lea.sflag [#allocation22], %s1000
        %s1002 = sand.u32 %s390, 1
        %s1003 = smul.addr %s1002, 4
        %s1004 = scalar_lea.vmem [#allocation21], %s1003
        // Predicated region
        $region133: #{transformer_encoder_pallas.1} parent=87 // pred_check
          %p1005 = pneg %p403
        $region134: #{transformer_encoder_pallas.1} parent=87 // pred_check_branch
          %1007 = sbr.rel (%p1005) target = $region136
        $region135: #{transformer_encoder_pallas.1} parent=87 // pred_region
          %1009 = dma.done %s1001, 64
        $region136: #{transformer_encoder_pallas.1} parent=87 // pred_fallthru
          _
        %s1010 = sand.u32 %s58, 1
        %s1011 = scalar_lea.sflag [#allocation22], %s1010
        %s1012 = sand.u32 %s416, 1
        %s1013 = smul.addr %s1012, 512
        %s1014 = scalar_lea.vmem [#allocation23], %s1013
        // Predicated region
        $region137: #{transformer_encoder_pallas.1} parent=87 // pred_check
          %p1015 = pneg %p429
        $region138: #{transformer_encoder_pallas.1} parent=87 // pred_check_branch
          %1017 = sbr.rel (%p1015) target = $region140
        $region139: #{transformer_encoder_pallas.1} parent=87 // pred_region
          %1019 = dma.done %s1011, 8192
        $region140: #{transformer_encoder_pallas.1} parent=87 // pred_fallthru
          _
        %s1020 = sand.u32 %s58, 1
        %s1021 = scalar_lea.sflag [#allocation25], %s1020
        %s1022 = sand.u32 %s442, 1
        %s1023 = smul.addr %s1022, 2
        %s1024 = scalar_lea.vmem [#allocation24], %s1023
        // Predicated region
        $region141: #{transformer_encoder_pallas.1} parent=87 // pred_check
          %p1025 = pneg %p455
        $region142: #{transformer_encoder_pallas.1} parent=87 // pred_check_branch
          %1027 = sbr.rel (%p1025) target = $region144
        $region143: #{transformer_encoder_pallas.1} parent=87 // pred_region
          %1029 = dma.done %s1021, 32
        $region144: #{transformer_encoder_pallas.1} parent=87 // pred_fallthru
          _
        %s1030 = sand.u32 %s58, 1
        %s1031 = scalar_lea.sflag [#allocation25], %s1030
        %s1032 = sand.u32 %s468, 1
        %s1033 = smul.addr %s1032, 2
        %s1034 = scalar_lea.vmem [#allocation26], %s1033
        // Predicated region
        $region145: #{transformer_encoder_pallas.1} parent=87 // pred_check
          %p1035 = pneg %p481
        $region146: #{transformer_encoder_pallas.1} parent=87 // pred_check_branch
          %1037 = sbr.rel (%p1035) target = $region148
        $region147: #{transformer_encoder_pallas.1} parent=87 // pred_region
          %1039 = dma.done %s1031, 32
        $region148: #{transformer_encoder_pallas.1} parent=87 // pred_fallthru
          _
        %s1040 = sand.u32 %s494, 1
        %s1041 = scalar_lea.sflag [#allocation28], %s1040
        %s1042 = sand.u32 %s494, 1
        %s1043 = smul.addr %s1042, 2
        %s1044 = scalar_lea.vmem [#allocation27], %s1043
        // Predicated region
        $region149: #{transformer_encoder_pallas.1} parent=87 // pred_check
          %p1045 = pneg %p507
        $region150: #{transformer_encoder_pallas.1} parent=87 // pred_check_branch
          %1047 = sbr.rel (%p1045) target = $region152
        $region151: #{transformer_encoder_pallas.1} parent=87 // pred_region
          %1049 = dma.done %s1041, 32
        $region152: #{transformer_encoder_pallas.1} parent=87 // pred_fallthru
          _
        %s1050 = sand.u32 %s78, 1
        %s1051 = scalar_lea.sflag [#allocation4], %s1050
        %s1052 = sand.u32 %s78, 1
        %s1053 = smul.addr %s1052, 32
        %s1054 = scalar_lea.vmem [#allocation3], %s1053
        %p1055 = pneg %p91
        %p1056 = pneg %p88
        %s1057 = sand.u32 %s58, 1
        %s1058 = scalar_lea.sflag [#allocation7], %s1057
        %s1059 = sand.u32 %s104, 1
        %s1060 = smul.addr %s1059, 32
        %s1061 = scalar_lea.vmem [#allocation6], %s1060
        %p1062 = pneg %p117
        %p1063 = pneg %p114
        %p1064 = scmp.lt.s32.totalorder %s62, 1
        %s1065 = scalar_select %p1064, %s62, 1
        %s1066 = scalar_lea.vmem %s2, %s1065
        %p1067 = pneg %p143
        %p1068 = pneg %p140
        %s1069 = sand.u32 %s58, 1
        %s1070 = scalar_lea.sflag [#allocation7], %s1069
        %s1071 = sand.u32 %s156, 1
        %s1072 = smul.addr %s1071, 1024
        %s1073 = scalar_lea.vmem [#allocation8], %s1072
        %p1074 = pneg %p169
        %p1075 = pneg %p166
        %s1076 = sand.u32 %s58, 1
        %s1077 = scalar_lea.sflag [#allocation10], %s1076
        %s1078 = sand.u32 %s182, 1
        %s1079 = smul.addr %s1078, 8
        %s1080 = scalar_lea.vmem [#allocation9], %s1079
        %p1081 = pneg %p195
        %p1082 = pneg %p192
        %s1083 = sand.u32 %s58, 1
        %s1084 = scalar_lea.sflag [#allocation10], %s1083
        %s1085 = sand.u32 %s208, 1
        %s1086 = smul.addr %s1085, 512
        %s1087 = scalar_lea.vmem [#allocation11], %s1086
        %p1088 = pneg %p221
        %p1089 = pneg %p218
        %s1090 = sand.u32 %s58, 1
        %s1091 = scalar_lea.sflag [#allocation13], %s1090
        %s1092 = sand.u32 %s234, 1
        %s1093 = smul.addr %s1092, 4
        %s1094 = scalar_lea.vmem [#allocation12], %s1093
        %p1095 = pneg %p247
        %p1096 = pneg %p244
        %s1097 = sand.u32 %s58, 1
        %s1098 = scalar_lea.sflag [#allocation13], %s1097
        %s1099 = sand.u32 %s260, 1
        %s1100 = smul.addr %s1099, 512
        %s1101 = scalar_lea.vmem [#allocation14], %s1100
        %p1102 = pneg %p273
        %p1103 = pneg %p270
        %s1104 = sand.u32 %s58, 1
        %s1105 = scalar_lea.sflag [#allocation16], %s1104
        %s1106 = sand.u32 %s286, 1
        %s1107 = smul.addr %s1106, 2
        %s1108 = scalar_lea.vmem [#allocation15], %s1107
        %p1109 = pneg %p299
        %p1110 = pneg %p296
        %s1111 = sand.u32 %s58, 1
        %s1112 = scalar_lea.sflag [#allocation16], %s1111
        %s1113 = sand.u32 %s312, 1
        %s1114 = smul.addr %s1113, 2
        %s1115 = scalar_lea.vmem [#allocation17], %s1114
        %p1116 = pneg %p325
        %p1117 = pneg %p322
        %s1118 = sand.u32 %s58, 1
        %s1119 = scalar_lea.sflag [#allocation19], %s1118
        %s1120 = sand.u32 %s338, 1
        %s1121 = smul.addr %s1120, 2
        %s1122 = scalar_lea.vmem [#allocation18], %s1121
        %p1123 = pneg %p351
        %p1124 = pneg %p348
        %s1125 = sand.u32 %s58, 1
        %s1126 = scalar_lea.sflag [#allocation19], %s1125
        %s1127 = sand.u32 %s364, 1
        %s1128 = smul.addr %s1127, 512
        %s1129 = scalar_lea.vmem [#allocation20], %s1128
        %p1130 = pneg %p377
        %p1131 = pneg %p374
        %s1132 = sand.u32 %s58, 1
        %s1133 = scalar_lea.sflag [#allocation22], %s1132
        %s1134 = sand.u32 %s390, 1
        %s1135 = smul.addr %s1134, 4
        %s1136 = scalar_lea.vmem [#allocation21], %s1135
        %p1137 = pneg %p403
        %p1138 = pneg %p400
        %s1139 = sand.u32 %s58, 1
        %s1140 = scalar_lea.sflag [#allocation22], %s1139
        %s1141 = sand.u32 %s416, 1
        %s1142 = smul.addr %s1141, 512
        %s1143 = scalar_lea.vmem [#allocation23], %s1142
        %p1144 = pneg %p429
        %p1145 = pneg %p426
        %s1146 = sand.u32 %s58, 1
        %s1147 = scalar_lea.sflag [#allocation25], %s1146
        %s1148 = sand.u32 %s442, 1
        %s1149 = smul.addr %s1148, 2
        %s1150 = scalar_lea.vmem [#allocation24], %s1149
        %p1151 = pneg %p455
        %p1152 = pneg %p452
        %s1153 = sand.u32 %s58, 1
        %s1154 = scalar_lea.sflag [#allocation25], %s1153
        %s1155 = sand.u32 %s468, 1
        %s1156 = smul.addr %s1155, 2
        %s1157 = scalar_lea.vmem [#allocation26], %s1156
        %p1158 = pneg %p481
        %p1159 = pneg %p478
        %s1160 = sand.u32 %s494, 1
        %s1161 = scalar_lea.sflag [#allocation28], %s1160
        %s1162 = sand.u32 %s494, 1
        %s1163 = smul.addr %s1162, 2
        %s1164 = scalar_lea.vmem [#allocation27], %s1163
        %p1165 = pneg %p507
        %p1166 = pneg %p504
        %p1167 = pneg %p533
        %p1168 = pneg %p530
        %s1169 = sand.u32 %s520, 1
        %s1170 = scalar_lea.sflag [#allocation5], %s1169
        %s1171 = sand.u32 %s520, 1
        %s1172 = smul.addr %s1171, 32
        %s1173 = scalar_lea.vmem [#allocation29], %s1172
        %p1174 = scmp.lt.s32.totalorder %s62, 1
        %s1175 = scalar_select %p1174, %s62, 1
        %s1176 = scalar_lea.vmem %s2, %s1175
        %p1178 = scmp.eq.s32.totalorder %s63, 0
        // Predicated region
        $region153: #{transformer_encoder_pallas.1} parent=87 // pred_check
          %p1179 = pneg %p1178
        $region154: #{transformer_encoder_pallas.1} parent=87 // pred_check_branch
          %1181 = sbr.rel (%p1179) target = $region156
        $region155: #{transformer_encoder_pallas.1} parent=87 // pred_region
          %v1182 = vld [vmem:[%s894] sm:$0xff]
          %v1183 = vld [vmem:[%s894 + $0x8] sm:$0xff]
          %v1184 = vld [vmem:[%s894 + $0x10] sm:$0xff]
          %v1185 = vld [vmem:[%s894 + $0x18] sm:$0xff]
          %1186 = vst [vmem:[#allocation2] sm:$0xff] %v1182
          %1187 = vst [vmem:[#allocation2 + $0x8] sm:$0xff] %v1183
          %1188 = vst [vmem:[#allocation2 + $0x10] sm:$0xff] %v1184
          %1189 = vst [vmem:[#allocation2 + $0x18] sm:$0xff] %v1185
        $region156: #{transformer_encoder_pallas.1} parent=87 // pred_fallthru
          _
        %v1190 = vld [vmem:[#allocation2] sm:$0xff]
        %v1191 = vld [vmem:[#allocation2 + $0x8] sm:$0xff]
        %v1192 = vld [vmem:[#allocation2 + $0x10] sm:$0xff]
        %v1193 = vld [vmem:[#allocation2 + $0x18] sm:$0xff]
        %v1194 = vpack.c.bf16 %v1192, %v1190
        %v1195 = vpack.c.bf16 %v1193, %v1191
        %v1196 = vld [vmem:[%s904] sm:$0xff]
        %v1197 = vld [vmem:[%s904 + $0x8] sm:$0xff]
        %v1198 = vld [vmem:[%s904 + $0x10] sm:$0xff]
        %v1199 = vld [vmem:[%s904 + $0x18] sm:$0xff]
        %v1200 = vpack.c.bf16 %v1198, %v1196
        %v1201 = vpack.c.bf16 %v1199, %v1197
        %v1202 = vld [vmem:[%s1176] sm:$0x1]
        %v1203 = vld [vmem:[%s914] sm:$0xff]
        %v1204 = vld [vmem:[%s914 + $0x8] sm:$0xff]
        %v1205 = vld [vmem:[%s914 + $0x10] sm:$0xff]
        %v1206 = vld [vmem:[%s914 + $0x18] sm:$0xff]
        %v1207 = vld [vmem:[%s914 + $0x20] sm:$0xff]
        %v1208 = vld [vmem:[%s914 + $0x28] sm:$0xff]
        %v1209 = vld [vmem:[%s914 + $0x30] sm:$0xff]
        %v1210 = vld [vmem:[%s914 + $0x38] sm:$0xff]
        %v1211 = vld [vmem:[%s914 + $0x40] sm:$0xff]
        %v1212 = vld [vmem:[%s914 + $0x48] sm:$0xff]
        %v1213 = vld [vmem:[%s914 + $0x50] sm:$0xff]
        %v1214 = vld [vmem:[%s914 + $0x58] sm:$0xff]
        %v1215 = vld [vmem:[%s914 + $0x60] sm:$0xff]
        %v1216 = vld [vmem:[%s914 + $0x68] sm:$0xff]
        %v1217 = vld [vmem:[%s914 + $0x70] sm:$0xff]
        %v1218 = vld [vmem:[%s914 + $0x78] sm:$0xff]
        %v1219 = vld [vmem:[%s914 + $0x80] sm:$0xff]
        %v1220 = vld [vmem:[%s914 + $0x88] sm:$0xff]
        %v1221 = vld [vmem:[%s914 + $0x90] sm:$0xff]
        %v1222 = vld [vmem:[%s914 + $0x98] sm:$0xff]
        %v1223 = vld [vmem:[%s914 + $0xa0] sm:$0xff]
        %v1224 = vld [vmem:[%s914 + $0xa8] sm:$0xff]
        %v1225 = vld [vmem:[%s914 + $0xb0] sm:$0xff]
        %v1226 = vld [vmem:[%s914 + $0xb8] sm:$0xff]
        %v1227 = vld [vmem:[%s914 + $0xc0] sm:$0xff]
        %v1228 = vld [vmem:[%s914 + $0xc8] sm:$0xff]
        %v1229 = vld [vmem:[%s914 + $0xd0] sm:$0xff]
        %v1230 = vld [vmem:[%s914 + $0xd8] sm:$0xff]
        %v1231 = vld [vmem:[%s914 + $0xe0] sm:$0xff]
        %v1232 = vld [vmem:[%s914 + $0xe8] sm:$0xff]
        %v1233 = vld [vmem:[%s914 + $0xf0] sm:$0xff]
        %v1234 = vld [vmem:[%s914 + $0xf8] sm:$0xff]
        %v1235 = vld [vmem:[%s914 + $0x100] sm:$0xff]
        %v1236 = vld [vmem:[%s914 + $0x108] sm:$0xff]
        %v1237 = vld [vmem:[%s914 + $0x110] sm:$0xff]
        %v1238 = vld [vmem:[%s914 + $0x118] sm:$0xff]
        %v1239 = vld [vmem:[%s914 + $0x120] sm:$0xff]
        %v1240 = vld [vmem:[%s914 + $0x128] sm:$0xff]
        %v1241 = vld [vmem:[%s914 + $0x130] sm:$0xff]
        %v1242 = vld [vmem:[%s914 + $0x138] sm:$0xff]
        %v1243 = vld [vmem:[%s914 + $0x140] sm:$0xff]
        %v1244 = vld [vmem:[%s914 + $0x148] sm:$0xff]
        %v1245 = vld [vmem:[%s914 + $0x150] sm:$0xff]
        %v1246 = vld [vmem:[%s914 + $0x158] sm:$0xff]
        %v1247 = vld [vmem:[%s914 + $0x160] sm:$0xff]
        %v1248 = vld [vmem:[%s914 + $0x168] sm:$0xff]
        %v1249 = vld [vmem:[%s914 + $0x170] sm:$0xff]
        %v1250 = vld [vmem:[%s914 + $0x178] sm:$0xff]
        %v1251 = vld [vmem:[%s914 + $0x180] sm:$0xff]
        %v1252 = vld [vmem:[%s914 + $0x188] sm:$0xff]
        %v1253 = vld [vmem:[%s914 + $0x190] sm:$0xff]
        %v1254 = vld [vmem:[%s914 + $0x198] sm:$0xff]
        %v1255 = vld [vmem:[%s914 + $0x1a0] sm:$0xff]
        %v1256 = vld [vmem:[%s914 + $0x1a8] sm:$0xff]
        %v1257 = vld [vmem:[%s914 + $0x1b0] sm:$0xff]
        %v1258 = vld [vmem:[%s914 + $0x1b8] sm:$0xff]
        %v1259 = vld [vmem:[%s914 + $0x1c0] sm:$0xff]
        %v1260 = vld [vmem:[%s914 + $0x1c8] sm:$0xff]
        %v1261 = vld [vmem:[%s914 + $0x1d0] sm:$0xff]
        %v1262 = vld [vmem:[%s914 + $0x1d8] sm:$0xff]
        %v1263 = vld [vmem:[%s914 + $0x1e0] sm:$0xff]
        %v1264 = vld [vmem:[%s914 + $0x1e8] sm:$0xff]
        %v1265 = vld [vmem:[%s914 + $0x1f0] sm:$0xff]
        %v1266 = vld [vmem:[%s914 + $0x1f8] sm:$0xff]
        %v1267 = vld [vmem:[%s914 + $0x200] sm:$0xff]
        %v1268 = vld [vmem:[%s914 + $0x208] sm:$0xff]
        %v1269 = vld [vmem:[%s914 + $0x210] sm:$0xff]
        %v1270 = vld [vmem:[%s914 + $0x218] sm:$0xff]
        %v1271 = vld [vmem:[%s914 + $0x220] sm:$0xff]
        %v1272 = vld [vmem:[%s914 + $0x228] sm:$0xff]
        %v1273 = vld [vmem:[%s914 + $0x230] sm:$0xff]
        %v1274 = vld [vmem:[%s914 + $0x238] sm:$0xff]
        %v1275 = vld [vmem:[%s914 + $0x240] sm:$0xff]
        %v1276 = vld [vmem:[%s914 + $0x248] sm:$0xff]
        %v1277 = vld [vmem:[%s914 + $0x250] sm:$0xff]
        %v1278 = vld [vmem:[%s914 + $0x258] sm:$0xff]
        %v1279 = vld [vmem:[%s914 + $0x260] sm:$0xff]
        %v1280 = vld [vmem:[%s914 + $0x268] sm:$0xff]
        %v1281 = vld [vmem:[%s914 + $0x270] sm:$0xff]
        %v1282 = vld [vmem:[%s914 + $0x278] sm:$0xff]
        %v1283 = vld [vmem:[%s914 + $0x280] sm:$0xff]
        %v1284 = vld [vmem:[%s914 + $0x288] sm:$0xff]
        %v1285 = vld [vmem:[%s914 + $0x290] sm:$0xff]
        %v1286 = vld [vmem:[%s914 + $0x298] sm:$0xff]
        %v1287 = vld [vmem:[%s914 + $0x2a0] sm:$0xff]
        %v1288 = vld [vmem:[%s914 + $0x2a8] sm:$0xff]
        %v1289 = vld [vmem:[%s914 + $0x2b0] sm:$0xff]
        %v1290 = vld [vmem:[%s914 + $0x2b8] sm:$0xff]
        %v1291 = vld [vmem:[%s914 + $0x2c0] sm:$0xff]
        %v1292 = vld [vmem:[%s914 + $0x2c8] sm:$0xff]
        %v1293 = vld [vmem:[%s914 + $0x2d0] sm:$0xff]
        %v1294 = vld [vmem:[%s914 + $0x2d8] sm:$0xff]
        %v1295 = vld [vmem:[%s914 + $0x2e0] sm:$0xff]
        %v1296 = vld [vmem:[%s914 + $0x2e8] sm:$0xff]
        %v1297 = vld [vmem:[%s914 + $0x2f0] sm:$0xff]
        %v1298 = vld [vmem:[%s914 + $0x2f8] sm:$0xff]
        %v1299 = vld [vmem:[%s914 + $0x300] sm:$0xff]
        %v1300 = vld [vmem:[%s914 + $0x308] sm:$0xff]
        %v1301 = vld [vmem:[%s914 + $0x310] sm:$0xff]
        %v1302 = vld [vmem:[%s914 + $0x318] sm:$0xff]
        %v1303 = vld [vmem:[%s914 + $0x320] sm:$0xff]
        %v1304 = vld [vmem:[%s914 + $0x328] sm:$0xff]
        %v1305 = vld [vmem:[%s914 + $0x330] sm:$0xff]
        %v1306 = vld [vmem:[%s914 + $0x338] sm:$0xff]
        %v1307 = vld [vmem:[%s914 + $0x340] sm:$0xff]
        %v1308 = vld [vmem:[%s914 + $0x348] sm:$0xff]
        %v1309 = vld [vmem:[%s914 + $0x350] sm:$0xff]
        %v1310 = vld [vmem:[%s914 + $0x358] sm:$0xff]
        %v1311 = vld [vmem:[%s914 + $0x360] sm:$0xff]
        %v1312 = vld [vmem:[%s914 + $0x368] sm:$0xff]
        %v1313 = vld [vmem:[%s914 + $0x370] sm:$0xff]
        %v1314 = vld [vmem:[%s914 + $0x378] sm:$0xff]
        %v1315 = vld [vmem:[%s914 + $0x380] sm:$0xff]
        %v1316 = vld [vmem:[%s914 + $0x388] sm:$0xff]
        %v1317 = vld [vmem:[%s914 + $0x390] sm:$0xff]
        %v1318 = vld [vmem:[%s914 + $0x398] sm:$0xff]
        %v1319 = vld [vmem:[%s914 + $0x3a0] sm:$0xff]
        %v1320 = vld [vmem:[%s914 + $0x3a8] sm:$0xff]
        %v1321 = vld [vmem:[%s914 + $0x3b0] sm:$0xff]
        %v1322 = vld [vmem:[%s914 + $0x3b8] sm:$0xff]
        %v1323 = vld [vmem:[%s914 + $0x3c0] sm:$0xff]
        %v1324 = vld [vmem:[%s914 + $0x3c8] sm:$0xff]
        %v1325 = vld [vmem:[%s914 + $0x3d0] sm:$0xff]
        %v1326 = vld [vmem:[%s914 + $0x3d8] sm:$0xff]
        %v1327 = vld [vmem:[%s914 + $0x3e0] sm:$0xff]
        %v1328 = vld [vmem:[%s914 + $0x3e8] sm:$0xff]
        %v1329 = vld [vmem:[%s914 + $0x3f0] sm:$0xff]
        %v1330 = vld [vmem:[%s914 + $0x3f8] sm:$0xff]
        %v1331 = vld [vmem:[%s924] sm:$0xff]
        %v1333 = vperm.slane %v1331, 0
        %v1334 = vperm.slane %v1331, 1
        %v1335 = vperm.slane %v1331, 2
        %v1336 = vperm.slane %v1331, 3
        %v1337 = vperm.slane %v1331, 4
        %v1338 = vperm.slane %v1331, 5
        %v1339 = vperm.slane %v1331, 6
        %v1340 = vperm.slane %v1331, 7
        %v1477 = vunpack.c.l.b16 %v1203
        %v1478 = vunpack.c.h.b16 %v1203
        %v1479 = vunpack.c.l.b16 %v1204
        %v1480 = vunpack.c.h.b16 %v1204
        %v1481 = vunpack.c.l.b16 %v1205
        %v1482 = vunpack.c.h.b16 %v1205
        %v1483 = vunpack.c.l.b16 %v1206
        %v1484 = vunpack.c.h.b16 %v1206
        %v1485 = vunpack.c.l.b16 %v1207
        %v1486 = vunpack.c.h.b16 %v1207
        %v1487 = vunpack.c.l.b16 %v1208
        %v1488 = vunpack.c.h.b16 %v1208
        %v1489 = vunpack.c.l.b16 %v1209
        %v1490 = vunpack.c.h.b16 %v1209
        %v1491 = vunpack.c.l.b16 %v1210
        %v1492 = vunpack.c.h.b16 %v1210
        %v1493 = vunpack.c.l.b16 %v1211
        %v1494 = vunpack.c.h.b16 %v1211
        %v1495 = vunpack.c.l.b16 %v1212
        %v1496 = vunpack.c.h.b16 %v1212
        %v1497 = vunpack.c.l.b16 %v1213
        %v1498 = vunpack.c.h.b16 %v1213
        %v1499 = vunpack.c.l.b16 %v1214
        %v1500 = vunpack.c.h.b16 %v1214
        %v1501 = vunpack.c.l.b16 %v1215
        %v1502 = vunpack.c.h.b16 %v1215
        %v1503 = vunpack.c.l.b16 %v1216
        %v1504 = vunpack.c.h.b16 %v1216
        %v1505 = vunpack.c.l.b16 %v1217
        %v1506 = vunpack.c.h.b16 %v1217
        %v1507 = vunpack.c.l.b16 %v1218
        %v1508 = vunpack.c.h.b16 %v1218
        %v1509 = vunpack.c.l.b16 %v1219
        %v1510 = vunpack.c.h.b16 %v1219
        %v1511 = vunpack.c.l.b16 %v1220
        %v1512 = vunpack.c.h.b16 %v1220
        %v1513 = vunpack.c.l.b16 %v1221
        %v1514 = vunpack.c.h.b16 %v1221
        %v1515 = vunpack.c.l.b16 %v1222
        %v1516 = vunpack.c.h.b16 %v1222
        %v1517 = vunpack.c.l.b16 %v1223
        %v1518 = vunpack.c.h.b16 %v1223
        %v1519 = vunpack.c.l.b16 %v1224
        %v1520 = vunpack.c.h.b16 %v1224
        %v1521 = vunpack.c.l.b16 %v1225
        %v1522 = vunpack.c.h.b16 %v1225
        %v1523 = vunpack.c.l.b16 %v1226
        %v1524 = vunpack.c.h.b16 %v1226
        %v1525 = vunpack.c.l.b16 %v1227
        %v1526 = vunpack.c.h.b16 %v1227
        %v1527 = vunpack.c.l.b16 %v1228
        %v1528 = vunpack.c.h.b16 %v1228
        %v1529 = vunpack.c.l.b16 %v1229
        %v1530 = vunpack.c.h.b16 %v1229
        %v1531 = vunpack.c.l.b16 %v1230
        %v1532 = vunpack.c.h.b16 %v1230
        %v1533 = vunpack.c.l.b16 %v1231
        %v1534 = vunpack.c.h.b16 %v1231
        %v1535 = vunpack.c.l.b16 %v1232
        %v1536 = vunpack.c.h.b16 %v1232
        %v1537 = vunpack.c.l.b16 %v1233
        %v1538 = vunpack.c.h.b16 %v1233
        %v1539 = vunpack.c.l.b16 %v1234
        %v1540 = vunpack.c.h.b16 %v1234
        %v1541 = vunpack.c.l.b16 %v1235
        %v1542 = vunpack.c.h.b16 %v1235
        %v1543 = vunpack.c.l.b16 %v1236
        %v1544 = vunpack.c.h.b16 %v1236
        %v1545 = vunpack.c.l.b16 %v1237
        %v1546 = vunpack.c.h.b16 %v1237
        %v1547 = vunpack.c.l.b16 %v1238
        %v1548 = vunpack.c.h.b16 %v1238
        %v1549 = vunpack.c.l.b16 %v1239
        %v1550 = vunpack.c.h.b16 %v1239
        %v1551 = vunpack.c.l.b16 %v1240
        %v1552 = vunpack.c.h.b16 %v1240
        %v1553 = vunpack.c.l.b16 %v1241
        %v1554 = vunpack.c.h.b16 %v1241
        %v1555 = vunpack.c.l.b16 %v1242
        %v1556 = vunpack.c.h.b16 %v1242
        %v1557 = vunpack.c.l.b16 %v1243
        %v1558 = vunpack.c.h.b16 %v1243
        %v1559 = vunpack.c.l.b16 %v1244
        %v1560 = vunpack.c.h.b16 %v1244
        %v1561 = vunpack.c.l.b16 %v1245
        %v1562 = vunpack.c.h.b16 %v1245
        %v1563 = vunpack.c.l.b16 %v1246
        %v1564 = vunpack.c.h.b16 %v1246
        %v1565 = vunpack.c.l.b16 %v1247
        %v1566 = vunpack.c.h.b16 %v1247
        %v1567 = vunpack.c.l.b16 %v1248
        %v1568 = vunpack.c.h.b16 %v1248
        %v1569 = vunpack.c.l.b16 %v1249
        %v1570 = vunpack.c.h.b16 %v1249
        %v1571 = vunpack.c.l.b16 %v1250
        %v1572 = vunpack.c.h.b16 %v1250
        %v1573 = vunpack.c.l.b16 %v1251
        %v1574 = vunpack.c.h.b16 %v1251
        %v1575 = vunpack.c.l.b16 %v1252
        %v1576 = vunpack.c.h.b16 %v1252
        %v1577 = vunpack.c.l.b16 %v1253
        %v1578 = vunpack.c.h.b16 %v1253
        %v1579 = vunpack.c.l.b16 %v1254
        %v1580 = vunpack.c.h.b16 %v1254
        %v1581 = vunpack.c.l.b16 %v1255
        %v1582 = vunpack.c.h.b16 %v1255
        %v1583 = vunpack.c.l.b16 %v1256
        %v1584 = vunpack.c.h.b16 %v1256
        %v1585 = vunpack.c.l.b16 %v1257
        %v1586 = vunpack.c.h.b16 %v1257
        %v1587 = vunpack.c.l.b16 %v1258
        %v1588 = vunpack.c.h.b16 %v1258
        %v1589 = vunpack.c.l.b16 %v1259
        %v1590 = vunpack.c.h.b16 %v1259
        %v1591 = vunpack.c.l.b16 %v1260
        %v1592 = vunpack.c.h.b16 %v1260
        %v1593 = vunpack.c.l.b16 %v1261
        %v1594 = vunpack.c.h.b16 %v1261
        %v1595 = vunpack.c.l.b16 %v1262
        %v1596 = vunpack.c.h.b16 %v1262
        %v1597 = vunpack.c.l.b16 %v1263
        %v1598 = vunpack.c.h.b16 %v1263
        %v1599 = vunpack.c.l.b16 %v1264
        %v1600 = vunpack.c.h.b16 %v1264
        %v1601 = vunpack.c.l.b16 %v1265
        %v1602 = vunpack.c.h.b16 %v1265
        %v1603 = vunpack.c.l.b16 %v1266
        %v1604 = vunpack.c.h.b16 %v1266
        %v1605 = vunpack.c.l.b16 %v1267
        %v1606 = vunpack.c.h.b16 %v1267
        %v1607 = vunpack.c.l.b16 %v1268
        %v1608 = vunpack.c.h.b16 %v1268
        %v1609 = vunpack.c.l.b16 %v1269
        %v1610 = vunpack.c.h.b16 %v1269
        %v1611 = vunpack.c.l.b16 %v1270
        %v1612 = vunpack.c.h.b16 %v1270
        %v1613 = vunpack.c.l.b16 %v1271
        %v1614 = vunpack.c.h.b16 %v1271
        %v1615 = vunpack.c.l.b16 %v1272
        %v1616 = vunpack.c.h.b16 %v1272
        %v1617 = vunpack.c.l.b16 %v1273
        %v1618 = vunpack.c.h.b16 %v1273
        %v1619 = vunpack.c.l.b16 %v1274
        %v1620 = vunpack.c.h.b16 %v1274
        %v1621 = vunpack.c.l.b16 %v1275
        %v1622 = vunpack.c.h.b16 %v1275
        %v1623 = vunpack.c.l.b16 %v1276
        %v1624 = vunpack.c.h.b16 %v1276
        %v1625 = vunpack.c.l.b16 %v1277
        %v1626 = vunpack.c.h.b16 %v1277
        %v1627 = vunpack.c.l.b16 %v1278
        %v1628 = vunpack.c.h.b16 %v1278
        %v1629 = vunpack.c.l.b16 %v1279
        %v1630 = vunpack.c.h.b16 %v1279
        %v1631 = vunpack.c.l.b16 %v1280
        %v1632 = vunpack.c.h.b16 %v1280
        %v1633 = vunpack.c.l.b16 %v1281
        %v1634 = vunpack.c.h.b16 %v1281
        %v1635 = vunpack.c.l.b16 %v1282
        %v1636 = vunpack.c.h.b16 %v1282
        %v1637 = vunpack.c.l.b16 %v1283
        %v1638 = vunpack.c.h.b16 %v1283
        %v1639 = vunpack.c.l.b16 %v1284
        %v1640 = vunpack.c.h.b16 %v1284
        %v1641 = vunpack.c.l.b16 %v1285
        %v1642 = vunpack.c.h.b16 %v1285
        %v1643 = vunpack.c.l.b16 %v1286
        %v1644 = vunpack.c.h.b16 %v1286
        %v1645 = vunpack.c.l.b16 %v1287
        %v1646 = vunpack.c.h.b16 %v1287
        %v1647 = vunpack.c.l.b16 %v1288
        %v1648 = vunpack.c.h.b16 %v1288
        %v1649 = vunpack.c.l.b16 %v1289
        %v1650 = vunpack.c.h.b16 %v1289
        %v1651 = vunpack.c.l.b16 %v1290
        %v1652 = vunpack.c.h.b16 %v1290
        %v1653 = vunpack.c.l.b16 %v1291
        %v1654 = vunpack.c.h.b16 %v1291
        %v1655 = vunpack.c.l.b16 %v1292
        %v1656 = vunpack.c.h.b16 %v1292
        %v1657 = vunpack.c.l.b16 %v1293
        %v1658 = vunpack.c.h.b16 %v1293
        %v1659 = vunpack.c.l.b16 %v1294
        %v1660 = vunpack.c.h.b16 %v1294
        %v1661 = vunpack.c.l.b16 %v1295
        %v1662 = vunpack.c.h.b16 %v1295
        %v1663 = vunpack.c.l.b16 %v1296
        %v1664 = vunpack.c.h.b16 %v1296
        %v1665 = vunpack.c.l.b16 %v1297
        %v1666 = vunpack.c.h.b16 %v1297
        %v1667 = vunpack.c.l.b16 %v1298
        %v1668 = vunpack.c.h.b16 %v1298
        %v1669 = vunpack.c.l.b16 %v1299
        %v1670 = vunpack.c.h.b16 %v1299
        %v1671 = vunpack.c.l.b16 %v1300
        %v1672 = vunpack.c.h.b16 %v1300
        %v1673 = vunpack.c.l.b16 %v1301
        %v1674 = vunpack.c.h.b16 %v1301
        %v1675 = vunpack.c.l.b16 %v1302
        %v1676 = vunpack.c.h.b16 %v1302
        %v1677 = vunpack.c.l.b16 %v1303
        %v1678 = vunpack.c.h.b16 %v1303
        %v1679 = vunpack.c.l.b16 %v1304
        %v1680 = vunpack.c.h.b16 %v1304
        %v1681 = vunpack.c.l.b16 %v1305
        %v1682 = vunpack.c.h.b16 %v1305
        %v1683 = vunpack.c.l.b16 %v1306
        %v1684 = vunpack.c.h.b16 %v1306
        %v1685 = vunpack.c.l.b16 %v1307
        %v1686 = vunpack.c.h.b16 %v1307
        %v1687 = vunpack.c.l.b16 %v1308
        %v1688 = vunpack.c.h.b16 %v1308
        %v1689 = vunpack.c.l.b16 %v1309
        %v1690 = vunpack.c.h.b16 %v1309
        %v1691 = vunpack.c.l.b16 %v1310
        %v1692 = vunpack.c.h.b16 %v1310
        %v1693 = vunpack.c.l.b16 %v1311
        %v1694 = vunpack.c.h.b16 %v1311
        %v1695 = vunpack.c.l.b16 %v1312
        %v1696 = vunpack.c.h.b16 %v1312
        %v1697 = vunpack.c.l.b16 %v1313
        %v1698 = vunpack.c.h.b16 %v1313
        %v1699 = vunpack.c.l.b16 %v1314
        %v1700 = vunpack.c.h.b16 %v1314
        %v1701 = vunpack.c.l.b16 %v1315
        %v1702 = vunpack.c.h.b16 %v1315
        %v1703 = vunpack.c.l.b16 %v1316
        %v1704 = vunpack.c.h.b16 %v1316
        %v1705 = vunpack.c.l.b16 %v1317
        %v1706 = vunpack.c.h.b16 %v1317
        %v1707 = vunpack.c.l.b16 %v1318
        %v1708 = vunpack.c.h.b16 %v1318
        %v1709 = vunpack.c.l.b16 %v1319
        %v1710 = vunpack.c.h.b16 %v1319
        %v1711 = vunpack.c.l.b16 %v1320
        %v1712 = vunpack.c.h.b16 %v1320
        %v1713 = vunpack.c.l.b16 %v1321
        %v1714 = vunpack.c.h.b16 %v1321
        %v1715 = vunpack.c.l.b16 %v1322
        %v1716 = vunpack.c.h.b16 %v1322
        %v1717 = vunpack.c.l.b16 %v1323
        %v1718 = vunpack.c.h.b16 %v1323
        %v1719 = vunpack.c.l.b16 %v1324
        %v1720 = vunpack.c.h.b16 %v1324
        %v1721 = vunpack.c.l.b16 %v1325
        %v1722 = vunpack.c.h.b16 %v1325
        %v1723 = vunpack.c.l.b16 %v1326
        %v1724 = vunpack.c.h.b16 %v1326
        %v1725 = vunpack.c.l.b16 %v1327
        %v1726 = vunpack.c.h.b16 %v1327
        %v1727 = vunpack.c.l.b16 %v1328
        %v1728 = vunpack.c.h.b16 %v1328
        %v1729 = vunpack.c.l.b16 %v1329
        %v1730 = vunpack.c.h.b16 %v1329
        %v1731 = vunpack.c.l.b16 %v1330
        %v1732 = vunpack.c.h.b16 %v1330
        %v1733 = vpack.c.b16 %v1485, %v1477
        %v1734 = vpack.c.b16 %v1486, %v1478
        %v1735 = vpack.c.b16 %v1487, %v1479
        %v1736 = vpack.c.b16 %v1488, %v1480
        %v1737 = vpack.c.b16 %v1489, %v1481
        %v1738 = vpack.c.b16 %v1490, %v1482
        %v1739 = vpack.c.b16 %v1491, %v1483
        %v1740 = vpack.c.b16 %v1492, %v1484
        %v1741 = vpack.c.b16 %v1501, %v1493
        %v1742 = vpack.c.b16 %v1502, %v1494
        %v1743 = vpack.c.b16 %v1503, %v1495
        %v1744 = vpack.c.b16 %v1504, %v1496
        %v1745 = vpack.c.b16 %v1505, %v1497
        %v1746 = vpack.c.b16 %v1506, %v1498
        %v1747 = vpack.c.b16 %v1507, %v1499
        %v1748 = vpack.c.b16 %v1508, %v1500
        %v1749 = vpack.c.b16 %v1517, %v1509
        %v1750 = vpack.c.b16 %v1518, %v1510
        %v1751 = vpack.c.b16 %v1519, %v1511
        %v1752 = vpack.c.b16 %v1520, %v1512
        %v1753 = vpack.c.b16 %v1521, %v1513
        %v1754 = vpack.c.b16 %v1522, %v1514
        %v1755 = vpack.c.b16 %v1523, %v1515
        %v1756 = vpack.c.b16 %v1524, %v1516
        %v1757 = vpack.c.b16 %v1533, %v1525
        %v1758 = vpack.c.b16 %v1534, %v1526
        %v1759 = vpack.c.b16 %v1535, %v1527
        %v1760 = vpack.c.b16 %v1536, %v1528
        %v1761 = vpack.c.b16 %v1537, %v1529
        %v1762 = vpack.c.b16 %v1538, %v1530
        %v1763 = vpack.c.b16 %v1539, %v1531
        %v1764 = vpack.c.b16 %v1540, %v1532
        %v1765 = vpack.c.b16 %v1549, %v1541
        %v1766 = vpack.c.b16 %v1550, %v1542
        %v1767 = vpack.c.b16 %v1551, %v1543
        %v1768 = vpack.c.b16 %v1552, %v1544
        %v1769 = vpack.c.b16 %v1553, %v1545
        %v1770 = vpack.c.b16 %v1554, %v1546
        %v1771 = vpack.c.b16 %v1555, %v1547
        %v1772 = vpack.c.b16 %v1556, %v1548
        %v1773 = vpack.c.b16 %v1565, %v1557
        %v1774 = vpack.c.b16 %v1566, %v1558
        %v1775 = vpack.c.b16 %v1567, %v1559
        %v1776 = vpack.c.b16 %v1568, %v1560
        %v1777 = vpack.c.b16 %v1569, %v1561
        %v1778 = vpack.c.b16 %v1570, %v1562
        %v1779 = vpack.c.b16 %v1571, %v1563
        %v1780 = vpack.c.b16 %v1572, %v1564
        %v1781 = vpack.c.b16 %v1581, %v1573
        %v1782 = vpack.c.b16 %v1582, %v1574
        %v1783 = vpack.c.b16 %v1583, %v1575
        %v1784 = vpack.c.b16 %v1584, %v1576
        %v1785 = vpack.c.b16 %v1585, %v1577
        %v1786 = vpack.c.b16 %v1586, %v1578
        %v1787 = vpack.c.b16 %v1587, %v1579
        %v1788 = vpack.c.b16 %v1588, %v1580
        %v1789 = vpack.c.b16 %v1597, %v1589
        %v1790 = vpack.c.b16 %v1598, %v1590
        %v1791 = vpack.c.b16 %v1599, %v1591
        %v1792 = vpack.c.b16 %v1600, %v1592
        %v1793 = vpack.c.b16 %v1601, %v1593
        %v1794 = vpack.c.b16 %v1602, %v1594
        %v1795 = vpack.c.b16 %v1603, %v1595
        %v1796 = vpack.c.b16 %v1604, %v1596
        %v1797 = vpack.c.b16 %v1613, %v1605
        %v1798 = vpack.c.b16 %v1614, %v1606
        %v1799 = vpack.c.b16 %v1615, %v1607
        %v1800 = vpack.c.b16 %v1616, %v1608
        %v1801 = vpack.c.b16 %v1617, %v1609
        %v1802 = vpack.c.b16 %v1618, %v1610
        %v1803 = vpack.c.b16 %v1619, %v1611
        %v1804 = vpack.c.b16 %v1620, %v1612
        %v1805 = vpack.c.b16 %v1629, %v1621
        %v1806 = vpack.c.b16 %v1630, %v1622
        %v1807 = vpack.c.b16 %v1631, %v1623
        %v1808 = vpack.c.b16 %v1632, %v1624
        %v1809 = vpack.c.b16 %v1633, %v1625
        %v1810 = vpack.c.b16 %v1634, %v1626
        %v1811 = vpack.c.b16 %v1635, %v1627
        %v1812 = vpack.c.b16 %v1636, %v1628
        %v1813 = vpack.c.b16 %v1645, %v1637
        %v1814 = vpack.c.b16 %v1646, %v1638
        %v1815 = vpack.c.b16 %v1647, %v1639
        %v1816 = vpack.c.b16 %v1648, %v1640
        %v1817 = vpack.c.b16 %v1649, %v1641
        %v1818 = vpack.c.b16 %v1650, %v1642
        %v1819 = vpack.c.b16 %v1651, %v1643
        %v1820 = vpack.c.b16 %v1652, %v1644
        %v1821 = vpack.c.b16 %v1661, %v1653
        %v1822 = vpack.c.b16 %v1662, %v1654
        %v1823 = vpack.c.b16 %v1663, %v1655
        %v1824 = vpack.c.b16 %v1664, %v1656
        %v1825 = vpack.c.b16 %v1665, %v1657
        %v1826 = vpack.c.b16 %v1666, %v1658
        %v1827 = vpack.c.b16 %v1667, %v1659
        %v1828 = vpack.c.b16 %v1668, %v1660
        %v1829 = vpack.c.b16 %v1677, %v1669
        %v1830 = vpack.c.b16 %v1678, %v1670
        %v1831 = vpack.c.b16 %v1679, %v1671
        %v1832 = vpack.c.b16 %v1680, %v1672
        %v1833 = vpack.c.b16 %v1681, %v1673
        %v1834 = vpack.c.b16 %v1682, %v1674
        %v1835 = vpack.c.b16 %v1683, %v1675
        %v1836 = vpack.c.b16 %v1684, %v1676
        %v1837 = vpack.c.b16 %v1693, %v1685
        %v1838 = vpack.c.b16 %v1694, %v1686
        %v1839 = vpack.c.b16 %v1695, %v1687
        %v1840 = vpack.c.b16 %v1696, %v1688
        %v1841 = vpack.c.b16 %v1697, %v1689
        %v1842 = vpack.c.b16 %v1698, %v1690
        %v1843 = vpack.c.b16 %v1699, %v1691
        %v1844 = vpack.c.b16 %v1700, %v1692
        %v1845 = vpack.c.b16 %v1709, %v1701
        %v1846 = vpack.c.b16 %v1710, %v1702
        %v1847 = vpack.c.b16 %v1711, %v1703
        %v1848 = vpack.c.b16 %v1712, %v1704
        %v1849 = vpack.c.b16 %v1713, %v1705
        %v1850 = vpack.c.b16 %v1714, %v1706
        %v1851 = vpack.c.b16 %v1715, %v1707
        %v1852 = vpack.c.b16 %v1716, %v1708
        %v1853 = vpack.c.b16 %v1725, %v1717
        %v1854 = vpack.c.b16 %v1726, %v1718
        %v1855 = vpack.c.b16 %v1727, %v1719
        %v1856 = vpack.c.b16 %v1728, %v1720
        %v1857 = vpack.c.b16 %v1729, %v1721
        %v1858 = vpack.c.b16 %v1730, %v1722
        %v1859 = vpack.c.b16 %v1731, %v1723
        %v1860 = vpack.c.b16 %v1732, %v1724
        %1989 = vmatpush.bf16.msra.mxu0 %v1789
        %1990 = vmatpush.bf16.msra.mxu0 %v1781
        %1991 = vmatpush.bf16.msra.mxu0 %v1773
        %1992 = vmatpush.bf16.msra.mxu0 %v1765
        %1993 = vmatpush.bf16.msra.mxu0 %v1757
        %1994 = vmatpush.bf16.msra.mxu0 %v1749
        %1995 = vmatpush.bf16.msra.mxu0 %v1741
        %1996 = vmatpush.bf16.msra.mxu0 %v1733
        %1997 = vmatmul.bf16.gmra.mxu0 %v1194
        %v1998 = vpop.f32.mrf.mxu0
        %v1999 = vadd.f32 %v1333, %v1998
        %v2000 = vpop.f32.mrf.mxu0
        %v2001 = vadd.f32 %v1333, %v2000
        %2002 = vdwg.mxu0
        %2003 = vmatpush.bf16.msra.mxu0 %v1853
        %2004 = vmatpush.bf16.msra.mxu0 %v1845
        %2005 = vmatpush.bf16.msra.mxu0 %v1837
        %2006 = vmatpush.bf16.msra.mxu0 %v1829
        %2007 = vmatpush.bf16.msra.mxu0 %v1821
        %2008 = vmatpush.bf16.msra.mxu0 %v1813
        %2009 = vmatpush.bf16.msra.mxu0 %v1805
        %2010 = vmatpush.bf16.msra.mxu0 %v1797
        %2011 = vmatmul.bf16.gmra.mxu0 %v1195
        %v2012 = vpop.f32.mrf.mxu0
        %v2013 = vadd.f32 %v1999, %v2012
        %v2014 = vpop.f32.mrf.mxu0
        %v2015 = vadd.f32 %v2001, %v2014
        %2016 = vdwg.mxu0
        %2017 = vmatpush.bf16.msra.mxu0 %v1790
        %2018 = vmatpush.bf16.msra.mxu0 %v1782
        %2019 = vmatpush.bf16.msra.mxu0 %v1774
        %2020 = vmatpush.bf16.msra.mxu0 %v1766
        %2021 = vmatpush.bf16.msra.mxu0 %v1758
        %2022 = vmatpush.bf16.msra.mxu0 %v1750
        %2023 = vmatpush.bf16.msra.mxu0 %v1742
        %2024 = vmatpush.bf16.msra.mxu0 %v1734
        %2025 = vmatmul.bf16.gmra.mxu0 %v1194
        %v2026 = vpop.f32.mrf.mxu0
        %v2027 = vadd.f32 %v1334, %v2026
        %v2028 = vpop.f32.mrf.mxu0
        %v2029 = vadd.f32 %v1334, %v2028
        %2030 = vdwg.mxu0
        %2031 = vmatpush.bf16.msra.mxu0 %v1854
        %2032 = vmatpush.bf16.msra.mxu0 %v1846
        %2033 = vmatpush.bf16.msra.mxu0 %v1838
        %2034 = vmatpush.bf16.msra.mxu0 %v1830
        %2035 = vmatpush.bf16.msra.mxu0 %v1822
        %2036 = vmatpush.bf16.msra.mxu0 %v1814
        %2037 = vmatpush.bf16.msra.mxu0 %v1806
        %2038 = vmatpush.bf16.msra.mxu0 %v1798
        %2039 = vmatmul.bf16.gmra.mxu0 %v1195
        %v2040 = vpop.f32.mrf.mxu0
        %v2041 = vadd.f32 %v2027, %v2040
        %v2042 = vpop.f32.mrf.mxu0
        %v2043 = vadd.f32 %v2029, %v2042
        %2044 = vdwg.mxu0
        %2045 = vmatpush.bf16.msra.mxu0 %v1791
        %2046 = vmatpush.bf16.msra.mxu0 %v1783
        %2047 = vmatpush.bf16.msra.mxu0 %v1775
        %2048 = vmatpush.bf16.msra.mxu0 %v1767
        %2049 = vmatpush.bf16.msra.mxu0 %v1759
        %2050 = vmatpush.bf16.msra.mxu0 %v1751
        %2051 = vmatpush.bf16.msra.mxu0 %v1743
        %2052 = vmatpush.bf16.msra.mxu0 %v1735
        %2053 = vmatmul.bf16.gmra.mxu0 %v1194
        %v2054 = vpop.f32.mrf.mxu0
        %v2055 = vadd.f32 %v1335, %v2054
        %v2056 = vpop.f32.mrf.mxu0
        %v2057 = vadd.f32 %v1335, %v2056
        %2058 = vdwg.mxu0
        %2059 = vmatpush.bf16.msra.mxu0 %v1855
        %2060 = vmatpush.bf16.msra.mxu0 %v1847
        %2061 = vmatpush.bf16.msra.mxu0 %v1839
        %2062 = vmatpush.bf16.msra.mxu0 %v1831
        %2063 = vmatpush.bf16.msra.mxu0 %v1823
        %2064 = vmatpush.bf16.msra.mxu0 %v1815
        %2065 = vmatpush.bf16.msra.mxu0 %v1807
        %2066 = vmatpush.bf16.msra.mxu0 %v1799
        %2067 = vmatmul.bf16.gmra.mxu0 %v1195
        %v2068 = vpop.f32.mrf.mxu0
        %v2069 = vadd.f32 %v2055, %v2068
        %v2070 = vpop.f32.mrf.mxu0
        %v2071 = vadd.f32 %v2057, %v2070
        %2072 = vdwg.mxu0
        %2073 = vmatpush.bf16.msra.mxu0 %v1792
        %2074 = vmatpush.bf16.msra.mxu0 %v1784
        %2075 = vmatpush.bf16.msra.mxu0 %v1776
        %2076 = vmatpush.bf16.msra.mxu0 %v1768
        %2077 = vmatpush.bf16.msra.mxu0 %v1760
        %2078 = vmatpush.bf16.msra.mxu0 %v1752
        %2079 = vmatpush.bf16.msra.mxu0 %v1744
        %2080 = vmatpush.bf16.msra.mxu0 %v1736
        %2081 = vmatmul.bf16.gmra.mxu0 %v1194
        %v2082 = vpop.f32.mrf.mxu0
        %v2083 = vadd.f32 %v1336, %v2082
        %v2084 = vpop.f32.mrf.mxu0
        %v2085 = vadd.f32 %v1336, %v2084
        %2086 = vdwg.mxu0
        %2087 = vmatpush.bf16.msra.mxu0 %v1856
        %2088 = vmatpush.bf16.msra.mxu0 %v1848
        %2089 = vmatpush.bf16.msra.mxu0 %v1840
        %2090 = vmatpush.bf16.msra.mxu0 %v1832
        %2091 = vmatpush.bf16.msra.mxu0 %v1824
        %2092 = vmatpush.bf16.msra.mxu0 %v1816
        %2093 = vmatpush.bf16.msra.mxu0 %v1808
        %2094 = vmatpush.bf16.msra.mxu0 %v1800
        %2095 = vmatmul.bf16.gmra.mxu0 %v1195
        %v2096 = vpop.f32.mrf.mxu0
        %v2097 = vadd.f32 %v2083, %v2096
        %v2098 = vpop.f32.mrf.mxu0
        %v2099 = vadd.f32 %v2085, %v2098
        %2100 = vdwg.mxu0
        %2101 = vmatpush.bf16.msra.mxu0 %v1793
        %2102 = vmatpush.bf16.msra.mxu0 %v1785
        %2103 = vmatpush.bf16.msra.mxu0 %v1777
        %2104 = vmatpush.bf16.msra.mxu0 %v1769
        %2105 = vmatpush.bf16.msra.mxu0 %v1761
        %2106 = vmatpush.bf16.msra.mxu0 %v1753
        %2107 = vmatpush.bf16.msra.mxu0 %v1745
        %2108 = vmatpush.bf16.msra.mxu0 %v1737
        %2109 = vmatmul.bf16.gmra.mxu0 %v1194
        %v2110 = vpop.f32.mrf.mxu0
        %v2111 = vadd.f32 %v1337, %v2110
        %v2112 = vpop.f32.mrf.mxu0
        %v2113 = vadd.f32 %v1337, %v2112
        %2114 = vdwg.mxu0
        %2115 = vmatpush.bf16.msra.mxu0 %v1857
        %2116 = vmatpush.bf16.msra.mxu0 %v1849
        %2117 = vmatpush.bf16.msra.mxu0 %v1841
        %2118 = vmatpush.bf16.msra.mxu0 %v1833
        %2119 = vmatpush.bf16.msra.mxu0 %v1825
        %2120 = vmatpush.bf16.msra.mxu0 %v1817
        %2121 = vmatpush.bf16.msra.mxu0 %v1809
        %2122 = vmatpush.bf16.msra.mxu0 %v1801
        %2123 = vmatmul.bf16.gmra.mxu0 %v1195
        %v2124 = vpop.f32.mrf.mxu0
        %v2125 = vadd.f32 %v2111, %v2124
        %v2126 = vpop.f32.mrf.mxu0
        %v2127 = vadd.f32 %v2113, %v2126
        %2128 = vdwg.mxu0
        %2129 = vmatpush.bf16.msra.mxu0 %v1794
        %2130 = vmatpush.bf16.msra.mxu0 %v1786
        %2131 = vmatpush.bf16.msra.mxu0 %v1778
        %2132 = vmatpush.bf16.msra.mxu0 %v1770
        %2133 = vmatpush.bf16.msra.mxu0 %v1762
        %2134 = vmatpush.bf16.msra.mxu0 %v1754
        %2135 = vmatpush.bf16.msra.mxu0 %v1746
        %2136 = vmatpush.bf16.msra.mxu0 %v1738
        %2137 = vmatmul.bf16.gmra.mxu0 %v1194
        %v2138 = vpop.f32.mrf.mxu0
        %v2139 = vadd.f32 %v1338, %v2138
        %v2140 = vpop.f32.mrf.mxu0
        %v2141 = vadd.f32 %v1338, %v2140
        %2142 = vdwg.mxu0
        %2143 = vmatpush.bf16.msra.mxu0 %v1858
        %2144 = vmatpush.bf16.msra.mxu0 %v1850
        %2145 = vmatpush.bf16.msra.mxu0 %v1842
        %2146 = vmatpush.bf16.msra.mxu0 %v1834
        %2147 = vmatpush.bf16.msra.mxu0 %v1826
        %2148 = vmatpush.bf16.msra.mxu0 %v1818
        %2149 = vmatpush.bf16.msra.mxu0 %v1810
        %2150 = vmatpush.bf16.msra.mxu0 %v1802
        %2151 = vmatmul.bf16.gmra.mxu0 %v1195
        %v2152 = vpop.f32.mrf.mxu0
        %v2153 = vadd.f32 %v2139, %v2152
        %v2154 = vpop.f32.mrf.mxu0
        %v2155 = vadd.f32 %v2141, %v2154
        %2156 = vdwg.mxu0
        %2157 = vmatpush.bf16.msra.mxu0 %v1795
        %2158 = vmatpush.bf16.msra.mxu0 %v1787
        %2159 = vmatpush.bf16.msra.mxu0 %v1779
        %2160 = vmatpush.bf16.msra.mxu0 %v1771
        %2161 = vmatpush.bf16.msra.mxu0 %v1763
        %2162 = vmatpush.bf16.msra.mxu0 %v1755
        %2163 = vmatpush.bf16.msra.mxu0 %v1747
        %2164 = vmatpush.bf16.msra.mxu0 %v1739
        %2165 = vmatmul.bf16.gmra.mxu0 %v1194
        %v2166 = vpop.f32.mrf.mxu0
        %v2167 = vadd.f32 %v1339, %v2166
        %v2168 = vpop.f32.mrf.mxu0
        %v2169 = vadd.f32 %v1339, %v2168
        %2170 = vdwg.mxu0
        %2171 = vmatpush.bf16.msra.mxu0 %v1859
        %2172 = vmatpush.bf16.msra.mxu0 %v1851
        %2173 = vmatpush.bf16.msra.mxu0 %v1843
        %2174 = vmatpush.bf16.msra.mxu0 %v1835
        %2175 = vmatpush.bf16.msra.mxu0 %v1827
        %2176 = vmatpush.bf16.msra.mxu0 %v1819
        %2177 = vmatpush.bf16.msra.mxu0 %v1811
        %2178 = vmatpush.bf16.msra.mxu0 %v1803
        %2179 = vmatmul.bf16.gmra.mxu0 %v1195
        %v2180 = vpop.f32.mrf.mxu0
        %v2181 = vadd.f32 %v2167, %v2180
        %v2182 = vpop.f32.mrf.mxu0
        %v2183 = vadd.f32 %v2169, %v2182
        %2184 = vdwg.mxu0
        %2185 = vmatpush.bf16.msra.mxu0 %v1796
        %2186 = vmatpush.bf16.msra.mxu0 %v1788
        %2187 = vmatpush.bf16.msra.mxu0 %v1780
        %2188 = vmatpush.bf16.msra.mxu0 %v1772
        %2189 = vmatpush.bf16.msra.mxu0 %v1764
        %2190 = vmatpush.bf16.msra.mxu0 %v1756
        %2191 = vmatpush.bf16.msra.mxu0 %v1748
        %2192 = vmatpush.bf16.msra.mxu0 %v1740
        %2193 = vmatmul.bf16.gmra.mxu0 %v1194
        %v2194 = vpop.f32.mrf.mxu0
        %v2195 = vadd.f32 %v1340, %v2194
        %v2196 = vpop.f32.mrf.mxu0
        %v2197 = vadd.f32 %v1340, %v2196
        %2198 = vdwg.mxu0
        %2199 = vmatpush.bf16.msra.mxu0 %v1860
        %2200 = vmatpush.bf16.msra.mxu0 %v1852
        %2201 = vmatpush.bf16.msra.mxu0 %v1844
        %2202 = vmatpush.bf16.msra.mxu0 %v1836
        %2203 = vmatpush.bf16.msra.mxu0 %v1828
        %2204 = vmatpush.bf16.msra.mxu0 %v1820
        %2205 = vmatpush.bf16.msra.mxu0 %v1812
        %2206 = vmatpush.bf16.msra.mxu0 %v1804
        %2207 = vmatmul.bf16.gmra.mxu0 %v1195
        %v2208 = vpop.f32.mrf.mxu0
        %v2209 = vadd.f32 %v2195, %v2208
        %v2210 = vpop.f32.mrf.mxu0
        %v2211 = vadd.f32 %v2197, %v2210
        %2212 = vdwg.mxu0
        %v2213 = vld [vmem:[%s934] sm:$0xff]
        %v2214 = vld [vmem:[%s934 + $0x8] sm:$0xff]
        %v2215 = vld [vmem:[%s934 + $0x10] sm:$0xff]
        %v2216 = vld [vmem:[%s934 + $0x18] sm:$0xff]
        %v2217 = vld [vmem:[%s934 + $0x20] sm:$0xff]
        %v2218 = vld [vmem:[%s934 + $0x28] sm:$0xff]
        %v2219 = vld [vmem:[%s934 + $0x30] sm:$0xff]
        %v2220 = vld [vmem:[%s934 + $0x38] sm:$0xff]
        %v2221 = vld [vmem:[%s934 + $0x40] sm:$0xff]
        %v2222 = vld [vmem:[%s934 + $0x48] sm:$0xff]
        %v2223 = vld [vmem:[%s934 + $0x50] sm:$0xff]
        %v2224 = vld [vmem:[%s934 + $0x58] sm:$0xff]
        %v2225 = vld [vmem:[%s934 + $0x60] sm:$0xff]
        %v2226 = vld [vmem:[%s934 + $0x68] sm:$0xff]
        %v2227 = vld [vmem:[%s934 + $0x70] sm:$0xff]
        %v2228 = vld [vmem:[%s934 + $0x78] sm:$0xff]
        %v2229 = vld [vmem:[%s934 + $0x80] sm:$0xff]
        %v2230 = vld [vmem:[%s934 + $0x88] sm:$0xff]
        %v2231 = vld [vmem:[%s934 + $0x90] sm:$0xff]
        %v2232 = vld [vmem:[%s934 + $0x98] sm:$0xff]
        %v2233 = vld [vmem:[%s934 + $0xa0] sm:$0xff]
        %v2234 = vld [vmem:[%s934 + $0xa8] sm:$0xff]
        %v2235 = vld [vmem:[%s934 + $0xb0] sm:$0xff]
        %v2236 = vld [vmem:[%s934 + $0xb8] sm:$0xff]
        %v2237 = vld [vmem:[%s934 + $0xc0] sm:$0xff]
        %v2238 = vld [vmem:[%s934 + $0xc8] sm:$0xff]
        %v2239 = vld [vmem:[%s934 + $0xd0] sm:$0xff]
        %v2240 = vld [vmem:[%s934 + $0xd8] sm:$0xff]
        %v2241 = vld [vmem:[%s934 + $0xe0] sm:$0xff]
        %v2242 = vld [vmem:[%s934 + $0xe8] sm:$0xff]
        %v2243 = vld [vmem:[%s934 + $0xf0] sm:$0xff]
        %v2244 = vld [vmem:[%s934 + $0xf8] sm:$0xff]
        %v2245 = vld [vmem:[%s934 + $0x100] sm:$0xff]
        %v2246 = vld [vmem:[%s934 + $0x108] sm:$0xff]
        %v2247 = vld [vmem:[%s934 + $0x110] sm:$0xff]
        %v2248 = vld [vmem:[%s934 + $0x118] sm:$0xff]
        %v2249 = vld [vmem:[%s934 + $0x120] sm:$0xff]
        %v2250 = vld [vmem:[%s934 + $0x128] sm:$0xff]
        %v2251 = vld [vmem:[%s934 + $0x130] sm:$0xff]
        %v2252 = vld [vmem:[%s934 + $0x138] sm:$0xff]
        %v2253 = vld [vmem:[%s934 + $0x140] sm:$0xff]
        %v2254 = vld [vmem:[%s934 + $0x148] sm:$0xff]
        %v2255 = vld [vmem:[%s934 + $0x150] sm:$0xff]
        %v2256 = vld [vmem:[%s934 + $0x158] sm:$0xff]
        %v2257 = vld [vmem:[%s934 + $0x160] sm:$0xff]
        %v2258 = vld [vmem:[%s934 + $0x168] sm:$0xff]
        %v2259 = vld [vmem:[%s934 + $0x170] sm:$0xff]
        %v2260 = vld [vmem:[%s934 + $0x178] sm:$0xff]
        %v2261 = vld [vmem:[%s934 + $0x180] sm:$0xff]
        %v2262 = vld [vmem:[%s934 + $0x188] sm:$0xff]
        %v2263 = vld [vmem:[%s934 + $0x190] sm:$0xff]
        %v2264 = vld [vmem:[%s934 + $0x198] sm:$0xff]
        %v2265 = vld [vmem:[%s934 + $0x1a0] sm:$0xff]
        %v2266 = vld [vmem:[%s934 + $0x1a8] sm:$0xff]
        %v2267 = vld [vmem:[%s934 + $0x1b0] sm:$0xff]
        %v2268 = vld [vmem:[%s934 + $0x1b8] sm:$0xff]
        %v2269 = vld [vmem:[%s934 + $0x1c0] sm:$0xff]
        %v2270 = vld [vmem:[%s934 + $0x1c8] sm:$0xff]
        %v2271 = vld [vmem:[%s934 + $0x1d0] sm:$0xff]
        %v2272 = vld [vmem:[%s934 + $0x1d8] sm:$0xff]
        %v2273 = vld [vmem:[%s934 + $0x1e0] sm:$0xff]
        %v2274 = vld [vmem:[%s934 + $0x1e8] sm:$0xff]
        %v2275 = vld [vmem:[%s934 + $0x1f0] sm:$0xff]
        %v2276 = vld [vmem:[%s934 + $0x1f8] sm:$0xff]
        %v2277 = vld [vmem:[%s944] sm:$0xf]
        %v2279 = vperm.slane %v2277, 0
        %v2280 = vperm.slane %v2277, 1
        %v2281 = vperm.slane %v2277, 2
        %v2282 = vperm.slane %v2277, 3
        %v2351 = vunpack.c.l.b16 %v2213
        %v2352 = vunpack.c.h.b16 %v2213
        %v2353 = vunpack.c.l.b16 %v2214
        %v2354 = vunpack.c.h.b16 %v2214
        %v2355 = vunpack.c.l.b16 %v2215
        %v2356 = vunpack.c.h.b16 %v2215
        %v2357 = vunpack.c.l.b16 %v2216
        %v2358 = vunpack.c.h.b16 %v2216
        %v2359 = vunpack.c.l.b16 %v2217
        %v2360 = vunpack.c.h.b16 %v2217
        %v2361 = vunpack.c.l.b16 %v2218
        %v2362 = vunpack.c.h.b16 %v2218
        %v2363 = vunpack.c.l.b16 %v2219
        %v2364 = vunpack.c.h.b16 %v2219
        %v2365 = vunpack.c.l.b16 %v2220
        %v2366 = vunpack.c.h.b16 %v2220
        %v2367 = vunpack.c.l.b16 %v2221
        %v2368 = vunpack.c.h.b16 %v2221
        %v2369 = vunpack.c.l.b16 %v2222
        %v2370 = vunpack.c.h.b16 %v2222
        %v2371 = vunpack.c.l.b16 %v2223
        %v2372 = vunpack.c.h.b16 %v2223
        %v2373 = vunpack.c.l.b16 %v2224
        %v2374 = vunpack.c.h.b16 %v2224
        %v2375 = vunpack.c.l.b16 %v2225
        %v2376 = vunpack.c.h.b16 %v2225
        %v2377 = vunpack.c.l.b16 %v2226
        %v2378 = vunpack.c.h.b16 %v2226
        %v2379 = vunpack.c.l.b16 %v2227
        %v2380 = vunpack.c.h.b16 %v2227
        %v2381 = vunpack.c.l.b16 %v2228
        %v2382 = vunpack.c.h.b16 %v2228
        %v2383 = vunpack.c.l.b16 %v2229
        %v2384 = vunpack.c.h.b16 %v2229
        %v2385 = vunpack.c.l.b16 %v2230
        %v2386 = vunpack.c.h.b16 %v2230
        %v2387 = vunpack.c.l.b16 %v2231
        %v2388 = vunpack.c.h.b16 %v2231
        %v2389 = vunpack.c.l.b16 %v2232
        %v2390 = vunpack.c.h.b16 %v2232
        %v2391 = vunpack.c.l.b16 %v2233
        %v2392 = vunpack.c.h.b16 %v2233
        %v2393 = vunpack.c.l.b16 %v2234
        %v2394 = vunpack.c.h.b16 %v2234
        %v2395 = vunpack.c.l.b16 %v2235
        %v2396 = vunpack.c.h.b16 %v2235
        %v2397 = vunpack.c.l.b16 %v2236
        %v2398 = vunpack.c.h.b16 %v2236
        %v2399 = vunpack.c.l.b16 %v2237
        %v2400 = vunpack.c.h.b16 %v2237
        %v2401 = vunpack.c.l.b16 %v2238
        %v2402 = vunpack.c.h.b16 %v2238
        %v2403 = vunpack.c.l.b16 %v2239
        %v2404 = vunpack.c.h.b16 %v2239
        %v2405 = vunpack.c.l.b16 %v2240
        %v2406 = vunpack.c.h.b16 %v2240
        %v2407 = vunpack.c.l.b16 %v2241
        %v2408 = vunpack.c.h.b16 %v2241
        %v2409 = vunpack.c.l.b16 %v2242
        %v2410 = vunpack.c.h.b16 %v2242
        %v2411 = vunpack.c.l.b16 %v2243
        %v2412 = vunpack.c.h.b16 %v2243
        %v2413 = vunpack.c.l.b16 %v2244
        %v2414 = vunpack.c.h.b16 %v2244
        %v2415 = vunpack.c.l.b16 %v2245
        %v2416 = vunpack.c.h.b16 %v2245
        %v2417 = vunpack.c.l.b16 %v2246
        %v2418 = vunpack.c.h.b16 %v2246
        %v2419 = vunpack.c.l.b16 %v2247
        %v2420 = vunpack.c.h.b16 %v2247
        %v2421 = vunpack.c.l.b16 %v2248
        %v2422 = vunpack.c.h.b16 %v2248
        %v2423 = vunpack.c.l.b16 %v2249
        %v2424 = vunpack.c.h.b16 %v2249
        %v2425 = vunpack.c.l.b16 %v2250
        %v2426 = vunpack.c.h.b16 %v2250
        %v2427 = vunpack.c.l.b16 %v2251
        %v2428 = vunpack.c.h.b16 %v2251
        %v2429 = vunpack.c.l.b16 %v2252
        %v2430 = vunpack.c.h.b16 %v2252
        %v2431 = vunpack.c.l.b16 %v2253
        %v2432 = vunpack.c.h.b16 %v2253
        %v2433 = vunpack.c.l.b16 %v2254
        %v2434 = vunpack.c.h.b16 %v2254
        %v2435 = vunpack.c.l.b16 %v2255
        %v2436 = vunpack.c.h.b16 %v2255
        %v2437 = vunpack.c.l.b16 %v2256
        %v2438 = vunpack.c.h.b16 %v2256
        %v2439 = vunpack.c.l.b16 %v2257
        %v2440 = vunpack.c.h.b16 %v2257
        %v2441 = vunpack.c.l.b16 %v2258
        %v2442 = vunpack.c.h.b16 %v2258
        %v2443 = vunpack.c.l.b16 %v2259
        %v2444 = vunpack.c.h.b16 %v2259
        %v2445 = vunpack.c.l.b16 %v2260
        %v2446 = vunpack.c.h.b16 %v2260
        %v2447 = vunpack.c.l.b16 %v2261
        %v2448 = vunpack.c.h.b16 %v2261
        %v2449 = vunpack.c.l.b16 %v2262
        %v2450 = vunpack.c.h.b16 %v2262
        %v2451 = vunpack.c.l.b16 %v2263
        %v2452 = vunpack.c.h.b16 %v2263
        %v2453 = vunpack.c.l.b16 %v2264
        %v2454 = vunpack.c.h.b16 %v2264
        %v2455 = vunpack.c.l.b16 %v2265
        %v2456 = vunpack.c.h.b16 %v2265
        %v2457 = vunpack.c.l.b16 %v2266
        %v2458 = vunpack.c.h.b16 %v2266
        %v2459 = vunpack.c.l.b16 %v2267
        %v2460 = vunpack.c.h.b16 %v2267
        %v2461 = vunpack.c.l.b16 %v2268
        %v2462 = vunpack.c.h.b16 %v2268
        %v2463 = vunpack.c.l.b16 %v2269
        %v2464 = vunpack.c.h.b16 %v2269
        %v2465 = vunpack.c.l.b16 %v2270
        %v2466 = vunpack.c.h.b16 %v2270
        %v2467 = vunpack.c.l.b16 %v2271
        %v2468 = vunpack.c.h.b16 %v2271
        %v2469 = vunpack.c.l.b16 %v2272
        %v2470 = vunpack.c.h.b16 %v2272
        %v2471 = vunpack.c.l.b16 %v2273
        %v2472 = vunpack.c.h.b16 %v2273
        %v2473 = vunpack.c.l.b16 %v2274
        %v2474 = vunpack.c.h.b16 %v2274
        %v2475 = vunpack.c.l.b16 %v2275
        %v2476 = vunpack.c.h.b16 %v2275
        %v2477 = vunpack.c.l.b16 %v2276
        %v2478 = vunpack.c.h.b16 %v2276
        %v2479 = vpack.c.b16 %v2355, %v2351
        %v2480 = vpack.c.b16 %v2356, %v2352
        %v2481 = vpack.c.b16 %v2357, %v2353
        %v2482 = vpack.c.b16 %v2358, %v2354
        %v2483 = vpack.c.b16 %v2363, %v2359
        %v2484 = vpack.c.b16 %v2364, %v2360
        %v2485 = vpack.c.b16 %v2365, %v2361
        %v2486 = vpack.c.b16 %v2366, %v2362
        %v2487 = vpack.c.b16 %v2371, %v2367
        %v2488 = vpack.c.b16 %v2372, %v2368
        %v2489 = vpack.c.b16 %v2373, %v2369
        %v2490 = vpack.c.b16 %v2374, %v2370
        %v2491 = vpack.c.b16 %v2379, %v2375
        %v2492 = vpack.c.b16 %v2380, %v2376
        %v2493 = vpack.c.b16 %v2381, %v2377
        %v2494 = vpack.c.b16 %v2382, %v2378
        %v2495 = vpack.c.b16 %v2387, %v2383
        %v2496 = vpack.c.b16 %v2388, %v2384
        %v2497 = vpack.c.b16 %v2389, %v2385
        %v2498 = vpack.c.b16 %v2390, %v2386
        %v2499 = vpack.c.b16 %v2395, %v2391
        %v2500 = vpack.c.b16 %v2396, %v2392
        %v2501 = vpack.c.b16 %v2397, %v2393
        %v2502 = vpack.c.b16 %v2398, %v2394
        %v2503 = vpack.c.b16 %v2403, %v2399
        %v2504 = vpack.c.b16 %v2404, %v2400
        %v2505 = vpack.c.b16 %v2405, %v2401
        %v2506 = vpack.c.b16 %v2406, %v2402
        %v2507 = vpack.c.b16 %v2411, %v2407
        %v2508 = vpack.c.b16 %v2412, %v2408
        %v2509 = vpack.c.b16 %v2413, %v2409
        %v2510 = vpack.c.b16 %v2414, %v2410
        %v2511 = vpack.c.b16 %v2419, %v2415
        %v2512 = vpack.c.b16 %v2420, %v2416
        %v2513 = vpack.c.b16 %v2421, %v2417
        %v2514 = vpack.c.b16 %v2422, %v2418
        %v2515 = vpack.c.b16 %v2427, %v2423
        %v2516 = vpack.c.b16 %v2428, %v2424
        %v2517 = vpack.c.b16 %v2429, %v2425
        %v2518 = vpack.c.b16 %v2430, %v2426
        %v2519 = vpack.c.b16 %v2435, %v2431
        %v2520 = vpack.c.b16 %v2436, %v2432
        %v2521 = vpack.c.b16 %v2437, %v2433
        %v2522 = vpack.c.b16 %v2438, %v2434
        %v2523 = vpack.c.b16 %v2443, %v2439
        %v2524 = vpack.c.b16 %v2444, %v2440
        %v2525 = vpack.c.b16 %v2445, %v2441
        %v2526 = vpack.c.b16 %v2446, %v2442
        %v2527 = vpack.c.b16 %v2451, %v2447
        %v2528 = vpack.c.b16 %v2452, %v2448
        %v2529 = vpack.c.b16 %v2453, %v2449
        %v2530 = vpack.c.b16 %v2454, %v2450
        %v2531 = vpack.c.b16 %v2459, %v2455
        %v2532 = vpack.c.b16 %v2460, %v2456
        %v2533 = vpack.c.b16 %v2461, %v2457
        %v2534 = vpack.c.b16 %v2462, %v2458
        %v2535 = vpack.c.b16 %v2467, %v2463
        %v2536 = vpack.c.b16 %v2468, %v2464
        %v2537 = vpack.c.b16 %v2469, %v2465
        %v2538 = vpack.c.b16 %v2470, %v2466
        %v2539 = vpack.c.b16 %v2475, %v2471
        %v2540 = vpack.c.b16 %v2476, %v2472
        %v2541 = vpack.c.b16 %v2477, %v2473
        %v2542 = vpack.c.b16 %v2478, %v2474
        %2607 = vmatpush.bf16.msra.mxu0 %v2507
        %2608 = vmatpush.bf16.msra.mxu0 %v2503
        %2609 = vmatpush.bf16.msra.mxu0 %v2499
        %2610 = vmatpush.bf16.msra.mxu0 %v2495
        %2611 = vmatpush.bf16.msra.mxu0 %v2491
        %2612 = vmatpush.bf16.msra.mxu0 %v2487
        %2613 = vmatpush.bf16.msra.mxu0 %v2483
        %2614 = vmatpush.bf16.msra.mxu0 %v2479
        %2615 = vmatmul.bf16.gmra.mxu0 %v1200
        %v2616 = vpop.f32.mrf.mxu0
        %v2617 = vadd.f32 %v2279, %v2616
        %v2618 = vpop.f32.mrf.mxu0
        %v2619 = vadd.f32 %v2279, %v2618
        %2620 = vdwg.mxu0
        %2621 = vmatpush.bf16.msra.mxu0 %v2539
        %2622 = vmatpush.bf16.msra.mxu0 %v2535
        %2623 = vmatpush.bf16.msra.mxu0 %v2531
        %2624 = vmatpush.bf16.msra.mxu0 %v2527
        %2625 = vmatpush.bf16.msra.mxu0 %v2523
        %2626 = vmatpush.bf16.msra.mxu0 %v2519
        %2627 = vmatpush.bf16.msra.mxu0 %v2515
        %2628 = vmatpush.bf16.msra.mxu0 %v2511
        %2629 = vmatmul.bf16.gmra.mxu0 %v1201
        %v2630 = vpop.f32.mrf.mxu0
        %v2631 = vadd.f32 %v2617, %v2630
        %v2632 = vpop.f32.mrf.mxu0
        %v2633 = vadd.f32 %v2619, %v2632
        %2634 = vdwg.mxu0
        %2635 = vmatpush.bf16.msra.mxu0 %v2508
        %2636 = vmatpush.bf16.msra.mxu0 %v2504
        %2637 = vmatpush.bf16.msra.mxu0 %v2500
        %2638 = vmatpush.bf16.msra.mxu0 %v2496
        %2639 = vmatpush.bf16.msra.mxu0 %v2492
        %2640 = vmatpush.bf16.msra.mxu0 %v2488
        %2641 = vmatpush.bf16.msra.mxu0 %v2484
        %2642 = vmatpush.bf16.msra.mxu0 %v2480
        %2643 = vmatmul.bf16.gmra.mxu0 %v1200
        %v2644 = vpop.f32.mrf.mxu0
        %v2645 = vadd.f32 %v2280, %v2644
        %v2646 = vpop.f32.mrf.mxu0
        %v2647 = vadd.f32 %v2280, %v2646
        %2648 = vdwg.mxu0
        %2649 = vmatpush.bf16.msra.mxu0 %v2540
        %2650 = vmatpush.bf16.msra.mxu0 %v2536
        %2651 = vmatpush.bf16.msra.mxu0 %v2532
        %2652 = vmatpush.bf16.msra.mxu0 %v2528
        %2653 = vmatpush.bf16.msra.mxu0 %v2524
        %2654 = vmatpush.bf16.msra.mxu0 %v2520
        %2655 = vmatpush.bf16.msra.mxu0 %v2516
        %2656 = vmatpush.bf16.msra.mxu0 %v2512
        %2657 = vmatmul.bf16.gmra.mxu0 %v1201
        %v2658 = vpop.f32.mrf.mxu0
        %v2659 = vadd.f32 %v2645, %v2658
        %v2660 = vpop.f32.mrf.mxu0
        %v2661 = vadd.f32 %v2647, %v2660
        %2662 = vdwg.mxu0
        %2663 = vmatpush.bf16.msra.mxu0 %v2509
        %2664 = vmatpush.bf16.msra.mxu0 %v2505
        %2665 = vmatpush.bf16.msra.mxu0 %v2501
        %2666 = vmatpush.bf16.msra.mxu0 %v2497
        %2667 = vmatpush.bf16.msra.mxu0 %v2493
        %2668 = vmatpush.bf16.msra.mxu0 %v2489
        %2669 = vmatpush.bf16.msra.mxu0 %v2485
        %2670 = vmatpush.bf16.msra.mxu0 %v2481
        %2671 = vmatmul.bf16.gmra.mxu0 %v1200
        %v2672 = vpop.f32.mrf.mxu0
        %v2673 = vadd.f32 %v2281, %v2672
        %v2674 = vpop.f32.mrf.mxu0
        %v2675 = vadd.f32 %v2281, %v2674
        %2676 = vdwg.mxu0
        %2677 = vmatpush.bf16.msra.mxu0 %v2541
        %2678 = vmatpush.bf16.msra.mxu0 %v2537
        %2679 = vmatpush.bf16.msra.mxu0 %v2533
        %2680 = vmatpush.bf16.msra.mxu0 %v2529
        %2681 = vmatpush.bf16.msra.mxu0 %v2525
        %2682 = vmatpush.bf16.msra.mxu0 %v2521
        %2683 = vmatpush.bf16.msra.mxu0 %v2517
        %2684 = vmatpush.bf16.msra.mxu0 %v2513
        %2685 = vmatmul.bf16.gmra.mxu0 %v1201
        %v2686 = vpop.f32.mrf.mxu0
        %v2687 = vadd.f32 %v2673, %v2686
        %v2688 = vpop.f32.mrf.mxu0
        %v2689 = vadd.f32 %v2675, %v2688
        %2690 = vdwg.mxu0
        %2691 = vmatpush.bf16.msra.mxu0 %v2510
        %2692 = vmatpush.bf16.msra.mxu0 %v2506
        %2693 = vmatpush.bf16.msra.mxu0 %v2502
        %2694 = vmatpush.bf16.msra.mxu0 %v2498
        %2695 = vmatpush.bf16.msra.mxu0 %v2494
        %2696 = vmatpush.bf16.msra.mxu0 %v2490
        %2697 = vmatpush.bf16.msra.mxu0 %v2486
        %2698 = vmatpush.bf16.msra.mxu0 %v2482
        %2699 = vmatmul.bf16.gmra.mxu0 %v1200
        %v2700 = vpop.f32.mrf.mxu0
        %v2701 = vadd.f32 %v2282, %v2700
        %v2702 = vpop.f32.mrf.mxu0
        %v2703 = vadd.f32 %v2282, %v2702
        %2704 = vdwg.mxu0
        %2705 = vmatpush.bf16.msra.mxu0 %v2542
        %2706 = vmatpush.bf16.msra.mxu0 %v2538
        %2707 = vmatpush.bf16.msra.mxu0 %v2534
        %2708 = vmatpush.bf16.msra.mxu0 %v2530
        %2709 = vmatpush.bf16.msra.mxu0 %v2526
        %2710 = vmatpush.bf16.msra.mxu0 %v2522
        %2711 = vmatpush.bf16.msra.mxu0 %v2518
        %2712 = vmatpush.bf16.msra.mxu0 %v2514
        %2713 = vmatmul.bf16.gmra.mxu0 %v1201
        %v2714 = vpop.f32.mrf.mxu0
        %v2715 = vadd.f32 %v2701, %v2714
        %v2716 = vpop.f32.mrf.mxu0
        %v2717 = vadd.f32 %v2703, %v2716
        %2718 = vdwg.mxu0
        %v2719 = vpack.c.bf16 %v2015, %v2013
        %v2720 = vpack.c.bf16 %v2071, %v2069
        %v2721 = vpack.c.bf16 %v2127, %v2125
        %v2723 = vperm.slane %v1202, 0
        %2725 = vmatpush.bf16.xpose.msra.mxu0 0
        %2726 = vmatpush.bf16.xpose.msra.mxu0 0
        %2727 = vmatpush.bf16.xpose.msra.mxu0 0
        %2728 = vmatpush.bf16.xpose.msra.mxu0 0
        %2729 = vmatpush.bf16.xpose.msra.mxu0 0
        %2730 = vmatpush.bf16.xpose.msra.mxu0 0
        %2731 = vmatpush.bf16.xpose.msra.mxu0 0
        %2732 = vmatpush.bf16.xpose.msra.mxu0 %v2720
        %2733 = vmatmul.bf16.gmra.mxu0 %v2719
        %v2734 = vpop.f32.mrf.mxu0
        %v2735 = vadd.f32 %v2723, %v2734
        %v2736 = vpop.f32.mrf.mxu0
        %v2737 = vadd.f32 %v2723, %v2736
        %2738 = vdwg.mxu0
        %vm2739 = vcmask 130048
        %v2740 = vsel %vm2739, %v2735, -inf
        %2741 = vmax.xlane.f32.xlu0 %v2740
        %v2742 = vpop.xlane.xlu0 %2741
        %v2743 = vsel %vm2739, %v2737, -inf
        %2744 = vmax.xlane.f32.xlu0 %v2743
        %v2745 = vpop.xlane.xlu0 %2744
        %v2746 = vsub.f32 %v2735, %v2742
        %v2747 = vsub.f32 %v2737, %v2745
        %v2748 = vmul.f32 %v2746, 1.442695
        %v2749 = vpow.pop %v2748
        %v2750 = vmul.f32 %v2747, 1.442695
        %v2751 = vpow.pop %v2750
        %v2752 = vsel %vm2739, %v2749, 0.0
        %2753 = vadd.xlane.f32.xlu0 %v2752
        %v2754 = vpop.xlane.xlu0 %2753
        %v2755 = vsel %vm2739, %v2751, 0.0
        %2756 = vadd.xlane.f32.xlu0 %v2755
        %v2757 = vpop.xlane.xlu0 %2756
        %v2758 = vrcp.pop %v2754
        %v2759 = vrcp.pop %v2757
        %v2760 = vmul.f32 %v2749, %v2758
        %v2761 = vmul.f32 %v2751, %v2759
        %v2762 = vpack.c.bf16 %v2761, %v2760
        %v2764 = vsel %vm2739, %v2762, 0
        %2766 = vmatpush.bf16.msra.mxu0 0
        %2767 = vmatpush.bf16.msra.mxu0 0
        %2768 = vmatpush.bf16.msra.mxu0 0
        %2769 = vmatpush.bf16.msra.mxu0 0
        %2770 = vmatpush.bf16.msra.mxu0 0
        %2771 = vmatpush.bf16.msra.mxu0 0
        %2772 = vmatpush.bf16.msra.mxu0 0
        %2773 = vmatpush.bf16.msra.mxu0 %v2721
        %2774 = vmatmul.bf16.gmra.mxu0 %v2764
        %v2775 = vpop.f32.mrf.mxu0
        %v2776 = vadd.f32 0.0, %v2775
        %v2777 = vpop.f32.mrf.mxu0
        %v2778 = vadd.f32 0.0, %v2777
        %2779 = vdwg.mxu0
        %v2780 = vpack.c.bf16 %v2043, %v2041
        %v2781 = vpack.c.bf16 %v2099, %v2097
        %v2782 = vpack.c.bf16 %v2155, %v2153
        %2783 = vmatpush.bf16.xpose.msra.mxu0 0
        %2784 = vmatpush.bf16.xpose.msra.mxu0 0
        %2785 = vmatpush.bf16.xpose.msra.mxu0 0
        %2786 = vmatpush.bf16.xpose.msra.mxu0 0
        %2787 = vmatpush.bf16.xpose.msra.mxu0 0
        %2788 = vmatpush.bf16.xpose.msra.mxu0 0
        %2789 = vmatpush.bf16.xpose.msra.mxu0 0
        %2790 = vmatpush.bf16.xpose.msra.mxu0 %v2781
        %2791 = vmatmul.bf16.gmra.mxu0 %v2780
        %v2792 = vpop.f32.mrf.mxu0
        %v2793 = vadd.f32 %v2723, %v2792
        %v2794 = vpop.f32.mrf.mxu0
        %v2795 = vadd.f32 %v2723, %v2794
        %2796 = vdwg.mxu0
        %v2797 = vsel %vm2739, %v2793, -inf
        %2798 = vmax.xlane.f32.xlu0 %v2797
        %v2799 = vpop.xlane.xlu0 %2798
        %v2800 = vsel %vm2739, %v2795, -inf
        %2801 = vmax.xlane.f32.xlu0 %v2800
        %v2802 = vpop.xlane.xlu0 %2801
        %v2803 = vsub.f32 %v2793, %v2799
        %v2804 = vsub.f32 %v2795, %v2802
        %v2805 = vmul.f32 %v2803, 1.442695
        %v2806 = vpow.pop %v2805
        %v2807 = vmul.f32 %v2804, 1.442695
        %v2808 = vpow.pop %v2807
        %v2809 = vsel %vm2739, %v2806, 0.0
        %2810 = vadd.xlane.f32.xlu0 %v2809
        %v2811 = vpop.xlane.xlu0 %2810
        %v2812 = vsel %vm2739, %v2808, 0.0
        %2813 = vadd.xlane.f32.xlu0 %v2812
        %v2814 = vpop.xlane.xlu0 %2813
        %v2815 = vrcp.pop %v2811
        %v2816 = vrcp.pop %v2814
        %v2817 = vmul.f32 %v2806, %v2815
        %v2818 = vmul.f32 %v2808, %v2816
        %v2819 = vpack.c.bf16 %v2818, %v2817
        %v2821 = vsel %vm2739, %v2819, 0
        %2823 = vmatpush.bf16.msra.mxu0 0
        %2824 = vmatpush.bf16.msra.mxu0 0
        %2825 = vmatpush.bf16.msra.mxu0 0
        %2826 = vmatpush.bf16.msra.mxu0 0
        %2827 = vmatpush.bf16.msra.mxu0 0
        %2828 = vmatpush.bf16.msra.mxu0 0
        %2829 = vmatpush.bf16.msra.mxu0 0
        %2830 = vmatpush.bf16.msra.mxu0 %v2782
        %2831 = vmatmul.bf16.gmra.mxu0 %v2821
        %v2832 = vpop.f32.mrf.mxu0
        %v2833 = vadd.f32 0.0, %v2832
        %v2834 = vpop.f32.mrf.mxu0
        %v2835 = vadd.f32 0.0, %v2834
        %2836 = vdwg.mxu0
        %v2837 = vpack.c.bf16 %v2183, %v2181
        %v2838 = vpack.c.bf16 %v2633, %v2631
        %v2839 = vpack.c.bf16 %v2689, %v2687
        %2840 = vmatpush.bf16.xpose.msra.mxu0 0
        %2841 = vmatpush.bf16.xpose.msra.mxu0 0
        %2842 = vmatpush.bf16.xpose.msra.mxu0 0
        %2843 = vmatpush.bf16.xpose.msra.mxu0 0
        %2844 = vmatpush.bf16.xpose.msra.mxu0 0
        %2845 = vmatpush.bf16.xpose.msra.mxu0 0
        %2846 = vmatpush.bf16.xpose.msra.mxu0 0
        %2847 = vmatpush.bf16.xpose.msra.mxu0 %v2838
        %2848 = vmatmul.bf16.gmra.mxu0 %v2837
        %v2849 = vpop.f32.mrf.mxu0
        %v2850 = vadd.f32 %v2723, %v2849
        %v2851 = vpop.f32.mrf.mxu0
        %v2852 = vadd.f32 %v2723, %v2851
        %2853 = vdwg.mxu0
        %v2854 = vsel %vm2739, %v2850, -inf
        %2855 = vmax.xlane.f32.xlu0 %v2854
        %v2856 = vpop.xlane.xlu0 %2855
        %v2857 = vsel %vm2739, %v2852, -inf
        %2858 = vmax.xlane.f32.xlu0 %v2857
        %v2859 = vpop.xlane.xlu0 %2858
        %v2860 = vsub.f32 %v2850, %v2856
        %v2861 = vsub.f32 %v2852, %v2859
        %v2862 = vmul.f32 %v2860, 1.442695
        %v2863 = vpow.pop %v2862
        %v2864 = vmul.f32 %v2861, 1.442695
        %v2865 = vpow.pop %v2864
        %v2866 = vsel %vm2739, %v2863, 0.0
        %2867 = vadd.xlane.f32.xlu0 %v2866
        %v2868 = vpop.xlane.xlu0 %2867
        %v2869 = vsel %vm2739, %v2865, 0.0
        %2870 = vadd.xlane.f32.xlu0 %v2869
        %v2871 = vpop.xlane.xlu0 %2870
        %v2872 = vrcp.pop %v2868
        %v2873 = vrcp.pop %v2871
        %v2874 = vmul.f32 %v2863, %v2872
        %v2875 = vmul.f32 %v2865, %v2873
        %v2876 = vpack.c.bf16 %v2875, %v2874
        %v2878 = vsel %vm2739, %v2876, 0
        %2880 = vmatpush.bf16.msra.mxu0 0
        %2881 = vmatpush.bf16.msra.mxu0 0
        %2882 = vmatpush.bf16.msra.mxu0 0
        %2883 = vmatpush.bf16.msra.mxu0 0
        %2884 = vmatpush.bf16.msra.mxu0 0
        %2885 = vmatpush.bf16.msra.mxu0 0
        %2886 = vmatpush.bf16.msra.mxu0 0
        %2887 = vmatpush.bf16.msra.mxu0 %v2839
        %2888 = vmatmul.bf16.gmra.mxu0 %v2878
        %v2889 = vpop.f32.mrf.mxu0
        %v2890 = vadd.f32 0.0, %v2889
        %v2891 = vpop.f32.mrf.mxu0
        %v2892 = vadd.f32 0.0, %v2891
        %2893 = vdwg.mxu0
        %v2894 = vpack.c.bf16 %v2211, %v2209
        %v2895 = vpack.c.bf16 %v2661, %v2659
        %v2896 = vpack.c.bf16 %v2717, %v2715
        %2897 = vmatpush.bf16.xpose.msra.mxu0 0
        %2898 = vmatpush.bf16.xpose.msra.mxu0 0
        %2899 = vmatpush.bf16.xpose.msra.mxu0 0
        %2900 = vmatpush.bf16.xpose.msra.mxu0 0
        %2901 = vmatpush.bf16.xpose.msra.mxu0 0
        %2902 = vmatpush.bf16.xpose.msra.mxu0 0
        %2903 = vmatpush.bf16.xpose.msra.mxu0 0
        %2904 = vmatpush.bf16.xpose.msra.mxu0 %v2895
        %2905 = vmatmul.bf16.gmra.mxu0 %v2894
        %v2906 = vpop.f32.mrf.mxu0
        %v2907 = vadd.f32 %v2723, %v2906
        %v2908 = vpop.f32.mrf.mxu0
        %v2909 = vadd.f32 %v2723, %v2908
        %2910 = vdwg.mxu0
        %v2911 = vsel %vm2739, %v2907, -inf
        %2912 = vmax.xlane.f32.xlu0 %v2911
        %v2913 = vpop.xlane.xlu0 %2912
        %v2914 = vsel %vm2739, %v2909, -inf
        %2915 = vmax.xlane.f32.xlu0 %v2914
        %v2916 = vpop.xlane.xlu0 %2915
        %v2917 = vsub.f32 %v2907, %v2913
        %v2918 = vsub.f32 %v2909, %v2916
        %v2919 = vmul.f32 %v2917, 1.442695
        %v2920 = vpow.pop %v2919
        %v2921 = vmul.f32 %v2918, 1.442695
        %v2922 = vpow.pop %v2921
        %v2923 = vsel %vm2739, %v2920, 0.0
        %2924 = vadd.xlane.f32.xlu0 %v2923
        %v2925 = vpop.xlane.xlu0 %2924
        %v2926 = vsel %vm2739, %v2922, 0.0
        %2927 = vadd.xlane.f32.xlu0 %v2926
        %v2928 = vpop.xlane.xlu0 %2927
        %v2929 = vrcp.pop %v2925
        %v2930 = vrcp.pop %v2928
        %v2931 = vmul.f32 %v2920, %v2929
        %v2932 = vmul.f32 %v2922, %v2930
        %v2933 = vpack.c.bf16 %v2932, %v2931
        %v2935 = vsel %vm2739, %v2933, 0
        %2937 = vmatpush.bf16.msra.mxu0 0
        %2938 = vmatpush.bf16.msra.mxu0 0
        %2939 = vmatpush.bf16.msra.mxu0 0
        %2940 = vmatpush.bf16.msra.mxu0 0
        %2941 = vmatpush.bf16.msra.mxu0 0
        %2942 = vmatpush.bf16.msra.mxu0 0
        %2943 = vmatpush.bf16.msra.mxu0 0
        %2944 = vmatpush.bf16.msra.mxu0 %v2896
        %2945 = vmatmul.bf16.gmra.mxu0 %v2935
        %v2946 = vpop.f32.mrf.mxu0
        %v2947 = vadd.f32 0.0, %v2946
        %v2948 = vpop.f32.mrf.mxu0
        %v2949 = vadd.f32 0.0, %v2948
        %2950 = vdwg.mxu0
        %v2951 = vpack.c.bf16 %v2778, %v2776
        %v2952 = vpack.c.bf16 %v2835, %v2833
        %v2953 = vpack.c.bf16 %v2892, %v2890
        %v2954 = vpack.c.bf16 %v2949, %v2947
        %v2955 = vld [vmem:[%s954] sm:$0xff]
        %v2956 = vld [vmem:[%s954 + $0x8] sm:$0xff]
        %v2957 = vld [vmem:[%s954 + $0x10] sm:$0xff]
        %v2958 = vld [vmem:[%s954 + $0x18] sm:$0xff]
        %v2959 = vld [vmem:[%s954 + $0x20] sm:$0xff]
        %v2960 = vld [vmem:[%s954 + $0x28] sm:$0xff]
        %v2961 = vld [vmem:[%s954 + $0x30] sm:$0xff]
        %v2962 = vld [vmem:[%s954 + $0x38] sm:$0xff]
        %v2963 = vld [vmem:[%s954 + $0x40] sm:$0xff]
        %v2964 = vld [vmem:[%s954 + $0x48] sm:$0xff]
        %v2965 = vld [vmem:[%s954 + $0x50] sm:$0xff]
        %v2966 = vld [vmem:[%s954 + $0x58] sm:$0xff]
        %v2967 = vld [vmem:[%s954 + $0x60] sm:$0xff]
        %v2968 = vld [vmem:[%s954 + $0x68] sm:$0xff]
        %v2969 = vld [vmem:[%s954 + $0x70] sm:$0xff]
        %v2970 = vld [vmem:[%s954 + $0x78] sm:$0xff]
        %v2971 = vld [vmem:[%s954 + $0x80] sm:$0xff]
        %v2972 = vld [vmem:[%s954 + $0x88] sm:$0xff]
        %v2973 = vld [vmem:[%s954 + $0x90] sm:$0xff]
        %v2974 = vld [vmem:[%s954 + $0x98] sm:$0xff]
        %v2975 = vld [vmem:[%s954 + $0xa0] sm:$0xff]
        %v2976 = vld [vmem:[%s954 + $0xa8] sm:$0xff]
        %v2977 = vld [vmem:[%s954 + $0xb0] sm:$0xff]
        %v2978 = vld [vmem:[%s954 + $0xb8] sm:$0xff]
        %v2979 = vld [vmem:[%s954 + $0xc0] sm:$0xff]
        %v2980 = vld [vmem:[%s954 + $0xc8] sm:$0xff]
        %v2981 = vld [vmem:[%s954 + $0xd0] sm:$0xff]
        %v2982 = vld [vmem:[%s954 + $0xd8] sm:$0xff]
        %v2983 = vld [vmem:[%s954 + $0xe0] sm:$0xff]
        %v2984 = vld [vmem:[%s954 + $0xe8] sm:$0xff]
        %v2985 = vld [vmem:[%s954 + $0xf0] sm:$0xff]
        %v2986 = vld [vmem:[%s954 + $0xf8] sm:$0xff]
        %v2987 = vld [vmem:[%s954 + $0x100] sm:$0xff]
        %v2988 = vld [vmem:[%s954 + $0x108] sm:$0xff]
        %v2989 = vld [vmem:[%s954 + $0x110] sm:$0xff]
        %v2990 = vld [vmem:[%s954 + $0x118] sm:$0xff]
        %v2991 = vld [vmem:[%s954 + $0x120] sm:$0xff]
        %v2992 = vld [vmem:[%s954 + $0x128] sm:$0xff]
        %v2993 = vld [vmem:[%s954 + $0x130] sm:$0xff]
        %v2994 = vld [vmem:[%s954 + $0x138] sm:$0xff]
        %v2995 = vld [vmem:[%s954 + $0x140] sm:$0xff]
        %v2996 = vld [vmem:[%s954 + $0x148] sm:$0xff]
        %v2997 = vld [vmem:[%s954 + $0x150] sm:$0xff]
        %v2998 = vld [vmem:[%s954 + $0x158] sm:$0xff]
        %v2999 = vld [vmem:[%s954 + $0x160] sm:$0xff]
        %v3000 = vld [vmem:[%s954 + $0x168] sm:$0xff]
        %v3001 = vld [vmem:[%s954 + $0x170] sm:$0xff]
        %v3002 = vld [vmem:[%s954 + $0x178] sm:$0xff]
        %v3003 = vld [vmem:[%s954 + $0x180] sm:$0xff]
        %v3004 = vld [vmem:[%s954 + $0x188] sm:$0xff]
        %v3005 = vld [vmem:[%s954 + $0x190] sm:$0xff]
        %v3006 = vld [vmem:[%s954 + $0x198] sm:$0xff]
        %v3007 = vld [vmem:[%s954 + $0x1a0] sm:$0xff]
        %v3008 = vld [vmem:[%s954 + $0x1a8] sm:$0xff]
        %v3009 = vld [vmem:[%s954 + $0x1b0] sm:$0xff]
        %v3010 = vld [vmem:[%s954 + $0x1b8] sm:$0xff]
        %v3011 = vld [vmem:[%s954 + $0x1c0] sm:$0xff]
        %v3012 = vld [vmem:[%s954 + $0x1c8] sm:$0xff]
        %v3013 = vld [vmem:[%s954 + $0x1d0] sm:$0xff]
        %v3014 = vld [vmem:[%s954 + $0x1d8] sm:$0xff]
        %v3015 = vld [vmem:[%s954 + $0x1e0] sm:$0xff]
        %v3016 = vld [vmem:[%s954 + $0x1e8] sm:$0xff]
        %v3017 = vld [vmem:[%s954 + $0x1f0] sm:$0xff]
        %v3018 = vld [vmem:[%s954 + $0x1f8] sm:$0xff]
        %v3019 = vld [vmem:[%s964] sm:$0x3]
        %v3021 = vperm.slane %v3019, 0
        %v3022 = vperm.slane %v3019, 1
        %v3089 = vunpack.c.l.b16 %v2955
        %v3090 = vunpack.c.h.b16 %v2955
        %v3091 = vunpack.c.l.b16 %v2956
        %v3092 = vunpack.c.h.b16 %v2956
        %v3093 = vunpack.c.l.b16 %v2957
        %v3094 = vunpack.c.h.b16 %v2957
        %v3095 = vunpack.c.l.b16 %v2958
        %v3096 = vunpack.c.h.b16 %v2958
        %v3097 = vunpack.c.l.b16 %v2959
        %v3098 = vunpack.c.h.b16 %v2959
        %v3099 = vunpack.c.l.b16 %v2960
        %v3100 = vunpack.c.h.b16 %v2960
        %v3101 = vunpack.c.l.b16 %v2961
        %v3102 = vunpack.c.h.b16 %v2961
        %v3103 = vunpack.c.l.b16 %v2962
        %v3104 = vunpack.c.h.b16 %v2962
        %v3105 = vunpack.c.l.b16 %v2963
        %v3106 = vunpack.c.h.b16 %v2963
        %v3107 = vunpack.c.l.b16 %v2964
        %v3108 = vunpack.c.h.b16 %v2964
        %v3109 = vunpack.c.l.b16 %v2965
        %v3110 = vunpack.c.h.b16 %v2965
        %v3111 = vunpack.c.l.b16 %v2966
        %v3112 = vunpack.c.h.b16 %v2966
        %v3113 = vunpack.c.l.b16 %v2967
        %v3114 = vunpack.c.h.b16 %v2967
        %v3115 = vunpack.c.l.b16 %v2968
        %v3116 = vunpack.c.h.b16 %v2968
        %v3117 = vunpack.c.l.b16 %v2969
        %v3118 = vunpack.c.h.b16 %v2969
        %v3119 = vunpack.c.l.b16 %v2970
        %v3120 = vunpack.c.h.b16 %v2970
        %v3121 = vunpack.c.l.b16 %v2971
        %v3122 = vunpack.c.h.b16 %v2971
        %v3123 = vunpack.c.l.b16 %v2972
        %v3124 = vunpack.c.h.b16 %v2972
        %v3125 = vunpack.c.l.b16 %v2973
        %v3126 = vunpack.c.h.b16 %v2973
        %v3127 = vunpack.c.l.b16 %v2974
        %v3128 = vunpack.c.h.b16 %v2974
        %v3129 = vunpack.c.l.b16 %v2975
        %v3130 = vunpack.c.h.b16 %v2975
        %v3131 = vunpack.c.l.b16 %v2976
        %v3132 = vunpack.c.h.b16 %v2976
        %v3133 = vunpack.c.l.b16 %v2977
        %v3134 = vunpack.c.h.b16 %v2977
        %v3135 = vunpack.c.l.b16 %v2978
        %v3136 = vunpack.c.h.b16 %v2978
        %v3137 = vunpack.c.l.b16 %v2979
        %v3138 = vunpack.c.h.b16 %v2979
        %v3139 = vunpack.c.l.b16 %v2980
        %v3140 = vunpack.c.h.b16 %v2980
        %v3141 = vunpack.c.l.b16 %v2981
        %v3142 = vunpack.c.h.b16 %v2981
        %v3143 = vunpack.c.l.b16 %v2982
        %v3144 = vunpack.c.h.b16 %v2982
        %v3145 = vunpack.c.l.b16 %v2983
        %v3146 = vunpack.c.h.b16 %v2983
        %v3147 = vunpack.c.l.b16 %v2984
        %v3148 = vunpack.c.h.b16 %v2984
        %v3149 = vunpack.c.l.b16 %v2985
        %v3150 = vunpack.c.h.b16 %v2985
        %v3151 = vunpack.c.l.b16 %v2986
        %v3152 = vunpack.c.h.b16 %v2986
        %v3153 = vunpack.c.l.b16 %v2987
        %v3154 = vunpack.c.h.b16 %v2987
        %v3155 = vunpack.c.l.b16 %v2988
        %v3156 = vunpack.c.h.b16 %v2988
        %v3157 = vunpack.c.l.b16 %v2989
        %v3158 = vunpack.c.h.b16 %v2989
        %v3159 = vunpack.c.l.b16 %v2990
        %v3160 = vunpack.c.h.b16 %v2990
        %v3161 = vunpack.c.l.b16 %v2991
        %v3162 = vunpack.c.h.b16 %v2991
        %v3163 = vunpack.c.l.b16 %v2992
        %v3164 = vunpack.c.h.b16 %v2992
        %v3165 = vunpack.c.l.b16 %v2993
        %v3166 = vunpack.c.h.b16 %v2993
        %v3167 = vunpack.c.l.b16 %v2994
        %v3168 = vunpack.c.h.b16 %v2994
        %v3169 = vunpack.c.l.b16 %v2995
        %v3170 = vunpack.c.h.b16 %v2995
        %v3171 = vunpack.c.l.b16 %v2996
        %v3172 = vunpack.c.h.b16 %v2996
        %v3173 = vunpack.c.l.b16 %v2997
        %v3174 = vunpack.c.h.b16 %v2997
        %v3175 = vunpack.c.l.b16 %v2998
        %v3176 = vunpack.c.h.b16 %v2998
        %v3177 = vunpack.c.l.b16 %v2999
        %v3178 = vunpack.c.h.b16 %v2999
        %v3179 = vunpack.c.l.b16 %v3000
        %v3180 = vunpack.c.h.b16 %v3000
        %v3181 = vunpack.c.l.b16 %v3001
        %v3182 = vunpack.c.h.b16 %v3001
        %v3183 = vunpack.c.l.b16 %v3002
        %v3184 = vunpack.c.h.b16 %v3002
        %v3185 = vunpack.c.l.b16 %v3003
        %v3186 = vunpack.c.h.b16 %v3003
        %v3187 = vunpack.c.l.b16 %v3004
        %v3188 = vunpack.c.h.b16 %v3004
        %v3189 = vunpack.c.l.b16 %v3005
        %v3190 = vunpack.c.h.b16 %v3005
        %v3191 = vunpack.c.l.b16 %v3006
        %v3192 = vunpack.c.h.b16 %v3006
        %v3193 = vunpack.c.l.b16 %v3007
        %v3194 = vunpack.c.h.b16 %v3007
        %v3195 = vunpack.c.l.b16 %v3008
        %v3196 = vunpack.c.h.b16 %v3008
        %v3197 = vunpack.c.l.b16 %v3009
        %v3198 = vunpack.c.h.b16 %v3009
        %v3199 = vunpack.c.l.b16 %v3010
        %v3200 = vunpack.c.h.b16 %v3010
        %v3201 = vunpack.c.l.b16 %v3011
        %v3202 = vunpack.c.h.b16 %v3011
        %v3203 = vunpack.c.l.b16 %v3012
        %v3204 = vunpack.c.h.b16 %v3012
        %v3205 = vunpack.c.l.b16 %v3013
        %v3206 = vunpack.c.h.b16 %v3013
        %v3207 = vunpack.c.l.b16 %v3014
        %v3208 = vunpack.c.h.b16 %v3014
        %v3209 = vunpack.c.l.b16 %v3015
        %v3210 = vunpack.c.h.b16 %v3015
        %v3211 = vunpack.c.l.b16 %v3016
        %v3212 = vunpack.c.h.b16 %v3016
        %v3213 = vunpack.c.l.b16 %v3017
        %v3214 = vunpack.c.h.b16 %v3017
        %v3215 = vunpack.c.l.b16 %v3018
        %v3216 = vunpack.c.h.b16 %v3018
        %v3217 = vpack.c.b16 %v3091, %v3089
        %v3218 = vpack.c.b16 %v3092, %v3090
        %v3219 = vpack.c.b16 %v3095, %v3093
        %v3220 = vpack.c.b16 %v3096, %v3094
        %v3221 = vpack.c.b16 %v3099, %v3097
        %v3222 = vpack.c.b16 %v3100, %v3098
        %v3223 = vpack.c.b16 %v3103, %v3101
        %v3224 = vpack.c.b16 %v3104, %v3102
        %v3225 = vpack.c.b16 %v3107, %v3105
        %v3226 = vpack.c.b16 %v3108, %v3106
        %v3227 = vpack.c.b16 %v3111, %v3109
        %v3228 = vpack.c.b16 %v3112, %v3110
        %v3229 = vpack.c.b16 %v3115, %v3113
        %v3230 = vpack.c.b16 %v3116, %v3114
        %v3231 = vpack.c.b16 %v3119, %v3117
        %v3232 = vpack.c.b16 %v3120, %v3118
        %v3233 = vpack.c.b16 %v3123, %v3121
        %v3234 = vpack.c.b16 %v3124, %v3122
        %v3235 = vpack.c.b16 %v3127, %v3125
        %v3236 = vpack.c.b16 %v3128, %v3126
        %v3237 = vpack.c.b16 %v3131, %v3129
        %v3238 = vpack.c.b16 %v3132, %v3130
        %v3239 = vpack.c.b16 %v3135, %v3133
        %v3240 = vpack.c.b16 %v3136, %v3134
        %v3241 = vpack.c.b16 %v3139, %v3137
        %v3242 = vpack.c.b16 %v3140, %v3138
        %v3243 = vpack.c.b16 %v3143, %v3141
        %v3244 = vpack.c.b16 %v3144, %v3142
        %v3245 = vpack.c.b16 %v3147, %v3145
        %v3246 = vpack.c.b16 %v3148, %v3146
        %v3247 = vpack.c.b16 %v3151, %v3149
        %v3248 = vpack.c.b16 %v3152, %v3150
        %v3249 = vpack.c.b16 %v3155, %v3153
        %v3250 = vpack.c.b16 %v3156, %v3154
        %v3251 = vpack.c.b16 %v3159, %v3157
        %v3252 = vpack.c.b16 %v3160, %v3158
        %v3253 = vpack.c.b16 %v3163, %v3161
        %v3254 = vpack.c.b16 %v3164, %v3162
        %v3255 = vpack.c.b16 %v3167, %v3165
        %v3256 = vpack.c.b16 %v3168, %v3166
        %v3257 = vpack.c.b16 %v3171, %v3169
        %v3258 = vpack.c.b16 %v3172, %v3170
        %v3259 = vpack.c.b16 %v3175, %v3173
        %v3260 = vpack.c.b16 %v3176, %v3174
        %v3261 = vpack.c.b16 %v3179, %v3177
        %v3262 = vpack.c.b16 %v3180, %v3178
        %v3263 = vpack.c.b16 %v3183, %v3181
        %v3264 = vpack.c.b16 %v3184, %v3182
        %v3265 = vpack.c.b16 %v3187, %v3185
        %v3266 = vpack.c.b16 %v3188, %v3186
        %v3267 = vpack.c.b16 %v3191, %v3189
        %v3268 = vpack.c.b16 %v3192, %v3190
        %v3269 = vpack.c.b16 %v3195, %v3193
        %v3270 = vpack.c.b16 %v3196, %v3194
        %v3271 = vpack.c.b16 %v3199, %v3197
        %v3272 = vpack.c.b16 %v3200, %v3198
        %v3273 = vpack.c.b16 %v3203, %v3201
        %v3274 = vpack.c.b16 %v3204, %v3202
        %v3275 = vpack.c.b16 %v3207, %v3205
        %v3276 = vpack.c.b16 %v3208, %v3206
        %v3277 = vpack.c.b16 %v3211, %v3209
        %v3278 = vpack.c.b16 %v3212, %v3210
        %v3279 = vpack.c.b16 %v3215, %v3213
        %v3280 = vpack.c.b16 %v3216, %v3214
        %3345 = vmatpush.bf16.msra.mxu0 %v3231
        %3346 = vmatpush.bf16.msra.mxu0 %v3229
        %3347 = vmatpush.bf16.msra.mxu0 %v3227
        %3348 = vmatpush.bf16.msra.mxu0 %v3225
        %3349 = vmatpush.bf16.msra.mxu0 %v3223
        %3350 = vmatpush.bf16.msra.mxu0 %v3221
        %3351 = vmatpush.bf16.msra.mxu0 %v3219
        %3352 = vmatpush.bf16.msra.mxu0 %v3217
        %3353 = vmatmul.bf16.gmra.mxu0 %v2951
        %v3354 = vpop.f32.mrf.mxu0
        %v3355 = vadd.f32 %v3021, %v3354
        %v3356 = vpop.f32.mrf.mxu0
        %v3357 = vadd.f32 %v3021, %v3356
        %3358 = vdwg.mxu0
        %3359 = vmatpush.bf16.msra.mxu0 %v3247
        %3360 = vmatpush.bf16.msra.mxu0 %v3245
        %3361 = vmatpush.bf16.msra.mxu0 %v3243
        %3362 = vmatpush.bf16.msra.mxu0 %v3241
        %3363 = vmatpush.bf16.msra.mxu0 %v3239
        %3364 = vmatpush.bf16.msra.mxu0 %v3237
        %3365 = vmatpush.bf16.msra.mxu0 %v3235
        %3366 = vmatpush.bf16.msra.mxu0 %v3233
        %3367 = vmatmul.bf16.gmra.mxu0 %v2952
        %v3368 = vpop.f32.mrf.mxu0
        %v3369 = vadd.f32 %v3355, %v3368
        %v3370 = vpop.f32.mrf.mxu0
        %v3371 = vadd.f32 %v3357, %v3370
        %3372 = vdwg.mxu0
        %3373 = vmatpush.bf16.msra.mxu0 %v3263
        %3374 = vmatpush.bf16.msra.mxu0 %v3261
        %3375 = vmatpush.bf16.msra.mxu0 %v3259
        %3376 = vmatpush.bf16.msra.mxu0 %v3257
        %3377 = vmatpush.bf16.msra.mxu0 %v3255
        %3378 = vmatpush.bf16.msra.mxu0 %v3253
        %3379 = vmatpush.bf16.msra.mxu0 %v3251
        %3380 = vmatpush.bf16.msra.mxu0 %v3249
        %3381 = vmatmul.bf16.gmra.mxu0 %v2953
        %v3382 = vpop.f32.mrf.mxu0
        %v3383 = vadd.f32 %v3369, %v3382
        %v3384 = vpop.f32.mrf.mxu0
        %v3385 = vadd.f32 %v3371, %v3384
        %3386 = vdwg.mxu0
        %3387 = vmatpush.bf16.msra.mxu0 %v3279
        %3388 = vmatpush.bf16.msra.mxu0 %v3277
        %3389 = vmatpush.bf16.msra.mxu0 %v3275
        %3390 = vmatpush.bf16.msra.mxu0 %v3273
        %3391 = vmatpush.bf16.msra.mxu0 %v3271
        %3392 = vmatpush.bf16.msra.mxu0 %v3269
        %3393 = vmatpush.bf16.msra.mxu0 %v3267
        %3394 = vmatpush.bf16.msra.mxu0 %v3265
        %3395 = vmatmul.bf16.gmra.mxu0 %v2954
        %v3396 = vpop.f32.mrf.mxu0
        %v3397 = vadd.f32 %v3383, %v3396
        %v3398 = vpop.f32.mrf.mxu0
        %v3399 = vadd.f32 %v3385, %v3398
        %3400 = vdwg.mxu0
        %3401 = vmatpush.bf16.msra.mxu0 %v3232
        %3402 = vmatpush.bf16.msra.mxu0 %v3230
        %3403 = vmatpush.bf16.msra.mxu0 %v3228
        %3404 = vmatpush.bf16.msra.mxu0 %v3226
        %3405 = vmatpush.bf16.msra.mxu0 %v3224
        %3406 = vmatpush.bf16.msra.mxu0 %v3222
        %3407 = vmatpush.bf16.msra.mxu0 %v3220
        %3408 = vmatpush.bf16.msra.mxu0 %v3218
        %3409 = vmatmul.bf16.gmra.mxu0 %v2951
        %v3410 = vpop.f32.mrf.mxu0
        %v3411 = vadd.f32 %v3022, %v3410
        %v3412 = vpop.f32.mrf.mxu0
        %v3413 = vadd.f32 %v3022, %v3412
        %3414 = vdwg.mxu0
        %3415 = vmatpush.bf16.msra.mxu0 %v3248
        %3416 = vmatpush.bf16.msra.mxu0 %v3246
        %3417 = vmatpush.bf16.msra.mxu0 %v3244
        %3418 = vmatpush.bf16.msra.mxu0 %v3242
        %3419 = vmatpush.bf16.msra.mxu0 %v3240
        %3420 = vmatpush.bf16.msra.mxu0 %v3238
        %3421 = vmatpush.bf16.msra.mxu0 %v3236
        %3422 = vmatpush.bf16.msra.mxu0 %v3234
        %3423 = vmatmul.bf16.gmra.mxu0 %v2952
        %v3424 = vpop.f32.mrf.mxu0
        %v3425 = vadd.f32 %v3411, %v3424
        %v3426 = vpop.f32.mrf.mxu0
        %v3427 = vadd.f32 %v3413, %v3426
        %3428 = vdwg.mxu0
        %3429 = vmatpush.bf16.msra.mxu0 %v3264
        %3430 = vmatpush.bf16.msra.mxu0 %v3262
        %3431 = vmatpush.bf16.msra.mxu0 %v3260
        %3432 = vmatpush.bf16.msra.mxu0 %v3258
        %3433 = vmatpush.bf16.msra.mxu0 %v3256
        %3434 = vmatpush.bf16.msra.mxu0 %v3254
        %3435 = vmatpush.bf16.msra.mxu0 %v3252
        %3436 = vmatpush.bf16.msra.mxu0 %v3250
        %3437 = vmatmul.bf16.gmra.mxu0 %v2953
        %v3438 = vpop.f32.mrf.mxu0
        %v3439 = vadd.f32 %v3425, %v3438
        %v3440 = vpop.f32.mrf.mxu0
        %v3441 = vadd.f32 %v3427, %v3440
        %3442 = vdwg.mxu0
        %3443 = vmatpush.bf16.msra.mxu0 %v3280
        %3444 = vmatpush.bf16.msra.mxu0 %v3278
        %3445 = vmatpush.bf16.msra.mxu0 %v3276
        %3446 = vmatpush.bf16.msra.mxu0 %v3274
        %3447 = vmatpush.bf16.msra.mxu0 %v3272
        %3448 = vmatpush.bf16.msra.mxu0 %v3270
        %3449 = vmatpush.bf16.msra.mxu0 %v3268
        %3450 = vmatpush.bf16.msra.mxu0 %v3266
        %3451 = vmatmul.bf16.gmra.mxu0 %v2954
        %v3452 = vpop.f32.mrf.mxu0
        %v3453 = vadd.f32 %v3439, %v3452
        %v3454 = vpop.f32.mrf.mxu0
        %v3455 = vadd.f32 %v3441, %v3454
        %3456 = vdwg.mxu0
        %v3457 = vadd.f32 %v3397, %v1190
        %v3458 = vadd.f32 %v3453, %v1191
        %v3459 = vadd.f32 %v3399, %v1192
        %v3460 = vadd.f32 %v3455, %v1193
        %v3461 = vld [vmem:[%s974] sm:$0x3]
        %v3462 = vld [vmem:[%s984] sm:$0x3]
        %v3463 = vadd.f32 %v3457, %v3458
        %3464 = vadd.xlane.f32.xlu0 %v3463
        %v3465 = vpop.xlane.xlu0 %3464
        %v3466 = vadd.f32 %v3459, %v3460
        %3467 = vadd.xlane.f32.xlu0 %v3466
        %v3468 = vpop.xlane.xlu0 %3467
        %v3469 = vrcp.pop 256.0
        %v3470 = vmul.f32 256.0, %v3469
        %v3471 = vsub.f32 1.0, %v3470
        %v3472 = vmul.f32 %v3469, %v3471
        %v3473 = vadd.f32 %v3469, %v3472
        %vm3474 = vweird.f32 %v3469
        %v3475 = vsel %vm3474, %v3469, %v3473
        %v3476 = vmul.f32 %v3465, %v3475
        %v3477 = vmul.f32 %v3468, %v3475
        %v3478 = vsub.f32 %v3457, %v3476
        %v3479 = vsub.f32 %v3458, %v3476
        %v3480 = vsub.f32 %v3459, %v3477
        %v3481 = vsub.f32 %v3460, %v3477
        %v3482 = vmul.f32 %v3478, %v3478
        %v3483 = vmul.f32 %v3479, %v3479
        %v3484 = vmul.f32 %v3480, %v3480
        %v3485 = vmul.f32 %v3481, %v3481
        %v3486 = vadd.f32 %v3482, %v3483
        %3487 = vadd.xlane.f32.xlu0 %v3486
        %v3488 = vpop.xlane.xlu0 %3487
        %v3489 = vadd.f32 %v3484, %v3485
        %3490 = vadd.xlane.f32.xlu0 %v3489
        %v3491 = vpop.xlane.xlu0 %3490
        %v3492 = vmul.f32 %v3488, %v3475
        %v3493 = vmul.f32 %v3491, %v3475
        %v3494 = vadd.f32 %v3492, 1e-05
        %v3495 = vadd.f32 %v3493, 1e-05
        %v3496 = vrsqrt.pop %v3494
        %v3497 = vmul.f32 %v3496, %v3494
        %v3498 = vmul.f32 %v3497, %v3496
        %v3499 = vmul.f32 0.5, %v3498
        %v3500 = vsub.f32 1.5, %v3499
        %v3501 = vmul.f32 %v3496, %v3500
        %vm3502 = vweird.f32 %v3494
        %vm3503 = vweird.f32 %v3496
        %vm3504 = vmor %vm3502, %vm3503
        %v3505 = vsel %vm3504, %v3496, %v3501
        %v3506 = vrsqrt.pop %v3495
        %v3507 = vmul.f32 %v3506, %v3495
        %v3508 = vmul.f32 %v3507, %v3506
        %v3509 = vmul.f32 0.5, %v3508
        %v3510 = vsub.f32 1.5, %v3509
        %v3511 = vmul.f32 %v3506, %v3510
        %vm3512 = vweird.f32 %v3495
        %vm3513 = vweird.f32 %v3506
        %vm3514 = vmor %vm3512, %vm3513
        %v3515 = vsel %vm3514, %v3506, %v3511
        %v3516 = vmul.f32 %v3478, %v3505
        %v3517 = vmul.f32 %v3479, %v3505
        %v3518 = vmul.f32 %v3480, %v3515
        %v3519 = vmul.f32 %v3481, %v3515
        %v3521 = vperm.slane %v3461, 0
        %v3522 = vperm.slane %v3461, 1
        %v3525 = vmul.f32 %v3516, %v3521
        %v3526 = vmul.f32 %v3517, %v3522
        %v3527 = vmul.f32 %v3518, %v3521
        %v3528 = vmul.f32 %v3519, %v3522
        %v3530 = vperm.slane %v3462, 0
        %v3531 = vperm.slane %v3462, 1
        %v3534 = vadd.f32 %v3525, %v3530
        %v3535 = vadd.f32 %v3526, %v3531
        %v3536 = vadd.f32 %v3527, %v3530
        %v3537 = vadd.f32 %v3528, %v3531
        %v3538 = vpack.c.bf16 %v3536, %v3534
        %v3539 = vpack.c.bf16 %v3537, %v3535
        %v3540 = vld [vmem:[%s994] sm:$0xff]
        %v3541 = vld [vmem:[%s994 + $0x8] sm:$0xff]
        %v3542 = vld [vmem:[%s994 + $0x10] sm:$0xff]
        %v3543 = vld [vmem:[%s994 + $0x18] sm:$0xff]
        %v3544 = vld [vmem:[%s994 + $0x20] sm:$0xff]
        %v3545 = vld [vmem:[%s994 + $0x28] sm:$0xff]
        %v3546 = vld [vmem:[%s994 + $0x30] sm:$0xff]
        %v3547 = vld [vmem:[%s994 + $0x38] sm:$0xff]
        %v3548 = vld [vmem:[%s994 + $0x40] sm:$0xff]
        %v3549 = vld [vmem:[%s994 + $0x48] sm:$0xff]
        %v3550 = vld [vmem:[%s994 + $0x50] sm:$0xff]
        %v3551 = vld [vmem:[%s994 + $0x58] sm:$0xff]
        %v3552 = vld [vmem:[%s994 + $0x60] sm:$0xff]
        %v3553 = vld [vmem:[%s994 + $0x68] sm:$0xff]
        %v3554 = vld [vmem:[%s994 + $0x70] sm:$0xff]
        %v3555 = vld [vmem:[%s994 + $0x78] sm:$0xff]
        %v3556 = vld [vmem:[%s994 + $0x80] sm:$0xff]
        %v3557 = vld [vmem:[%s994 + $0x88] sm:$0xff]
        %v3558 = vld [vmem:[%s994 + $0x90] sm:$0xff]
        %v3559 = vld [vmem:[%s994 + $0x98] sm:$0xff]
        %v3560 = vld [vmem:[%s994 + $0xa0] sm:$0xff]
        %v3561 = vld [vmem:[%s994 + $0xa8] sm:$0xff]
        %v3562 = vld [vmem:[%s994 + $0xb0] sm:$0xff]
        %v3563 = vld [vmem:[%s994 + $0xb8] sm:$0xff]
        %v3564 = vld [vmem:[%s994 + $0xc0] sm:$0xff]
        %v3565 = vld [vmem:[%s994 + $0xc8] sm:$0xff]
        %v3566 = vld [vmem:[%s994 + $0xd0] sm:$0xff]
        %v3567 = vld [vmem:[%s994 + $0xd8] sm:$0xff]
        %v3568 = vld [vmem:[%s994 + $0xe0] sm:$0xff]
        %v3569 = vld [vmem:[%s994 + $0xe8] sm:$0xff]
        %v3570 = vld [vmem:[%s994 + $0xf0] sm:$0xff]
        %v3571 = vld [vmem:[%s994 + $0xf8] sm:$0xff]
        %v3572 = vld [vmem:[%s994 + $0x100] sm:$0xff]
        %v3573 = vld [vmem:[%s994 + $0x108] sm:$0xff]
        %v3574 = vld [vmem:[%s994 + $0x110] sm:$0xff]
        %v3575 = vld [vmem:[%s994 + $0x118] sm:$0xff]
        %v3576 = vld [vmem:[%s994 + $0x120] sm:$0xff]
        %v3577 = vld [vmem:[%s994 + $0x128] sm:$0xff]
        %v3578 = vld [vmem:[%s994 + $0x130] sm:$0xff]
        %v3579 = vld [vmem:[%s994 + $0x138] sm:$0xff]
        %v3580 = vld [vmem:[%s994 + $0x140] sm:$0xff]
        %v3581 = vld [vmem:[%s994 + $0x148] sm:$0xff]
        %v3582 = vld [vmem:[%s994 + $0x150] sm:$0xff]
        %v3583 = vld [vmem:[%s994 + $0x158] sm:$0xff]
        %v3584 = vld [vmem:[%s994 + $0x160] sm:$0xff]
        %v3585 = vld [vmem:[%s994 + $0x168] sm:$0xff]
        %v3586 = vld [vmem:[%s994 + $0x170] sm:$0xff]
        %v3587 = vld [vmem:[%s994 + $0x178] sm:$0xff]
        %v3588 = vld [vmem:[%s994 + $0x180] sm:$0xff]
        %v3589 = vld [vmem:[%s994 + $0x188] sm:$0xff]
        %v3590 = vld [vmem:[%s994 + $0x190] sm:$0xff]
        %v3591 = vld [vmem:[%s994 + $0x198] sm:$0xff]
        %v3592 = vld [vmem:[%s994 + $0x1a0] sm:$0xff]
        %v3593 = vld [vmem:[%s994 + $0x1a8] sm:$0xff]
        %v3594 = vld [vmem:[%s994 + $0x1b0] sm:$0xff]
        %v3595 = vld [vmem:[%s994 + $0x1b8] sm:$0xff]
        %v3596 = vld [vmem:[%s994 + $0x1c0] sm:$0xff]
        %v3597 = vld [vmem:[%s994 + $0x1c8] sm:$0xff]
        %v3598 = vld [vmem:[%s994 + $0x1d0] sm:$0xff]
        %v3599 = vld [vmem:[%s994 + $0x1d8] sm:$0xff]
        %v3600 = vld [vmem:[%s994 + $0x1e0] sm:$0xff]
        %v3601 = vld [vmem:[%s994 + $0x1e8] sm:$0xff]
        %v3602 = vld [vmem:[%s994 + $0x1f0] sm:$0xff]
        %v3603 = vld [vmem:[%s994 + $0x1f8] sm:$0xff]
        %v3604 = vld [vmem:[%s1004] sm:$0xf]
        %v3606 = vperm.slane %v3604, 0
        %v3607 = vperm.slane %v3604, 1
        %v3608 = vperm.slane %v3604, 2
        %v3609 = vperm.slane %v3604, 3
        %v3678 = vunpack.c.l.b16 %v3540
        %v3679 = vunpack.c.h.b16 %v3540
        %v3680 = vunpack.c.l.b16 %v3541
        %v3681 = vunpack.c.h.b16 %v3541
        %v3682 = vunpack.c.l.b16 %v3542
        %v3683 = vunpack.c.h.b16 %v3542
        %v3684 = vunpack.c.l.b16 %v3543
        %v3685 = vunpack.c.h.b16 %v3543
        %v3686 = vunpack.c.l.b16 %v3544
        %v3687 = vunpack.c.h.b16 %v3544
        %v3688 = vunpack.c.l.b16 %v3545
        %v3689 = vunpack.c.h.b16 %v3545
        %v3690 = vunpack.c.l.b16 %v3546
        %v3691 = vunpack.c.h.b16 %v3546
        %v3692 = vunpack.c.l.b16 %v3547
        %v3693 = vunpack.c.h.b16 %v3547
        %v3694 = vunpack.c.l.b16 %v3548
        %v3695 = vunpack.c.h.b16 %v3548
        %v3696 = vunpack.c.l.b16 %v3549
        %v3697 = vunpack.c.h.b16 %v3549
        %v3698 = vunpack.c.l.b16 %v3550
        %v3699 = vunpack.c.h.b16 %v3550
        %v3700 = vunpack.c.l.b16 %v3551
        %v3701 = vunpack.c.h.b16 %v3551
        %v3702 = vunpack.c.l.b16 %v3552
        %v3703 = vunpack.c.h.b16 %v3552
        %v3704 = vunpack.c.l.b16 %v3553
        %v3705 = vunpack.c.h.b16 %v3553
        %v3706 = vunpack.c.l.b16 %v3554
        %v3707 = vunpack.c.h.b16 %v3554
        %v3708 = vunpack.c.l.b16 %v3555
        %v3709 = vunpack.c.h.b16 %v3555
        %v3710 = vunpack.c.l.b16 %v3556
        %v3711 = vunpack.c.h.b16 %v3556
        %v3712 = vunpack.c.l.b16 %v3557
        %v3713 = vunpack.c.h.b16 %v3557
        %v3714 = vunpack.c.l.b16 %v3558
        %v3715 = vunpack.c.h.b16 %v3558
        %v3716 = vunpack.c.l.b16 %v3559
        %v3717 = vunpack.c.h.b16 %v3559
        %v3718 = vunpack.c.l.b16 %v3560
        %v3719 = vunpack.c.h.b16 %v3560
        %v3720 = vunpack.c.l.b16 %v3561
        %v3721 = vunpack.c.h.b16 %v3561
        %v3722 = vunpack.c.l.b16 %v3562
        %v3723 = vunpack.c.h.b16 %v3562
        %v3724 = vunpack.c.l.b16 %v3563
        %v3725 = vunpack.c.h.b16 %v3563
        %v3726 = vunpack.c.l.b16 %v3564
        %v3727 = vunpack.c.h.b16 %v3564
        %v3728 = vunpack.c.l.b16 %v3565
        %v3729 = vunpack.c.h.b16 %v3565
        %v3730 = vunpack.c.l.b16 %v3566
        %v3731 = vunpack.c.h.b16 %v3566
        %v3732 = vunpack.c.l.b16 %v3567
        %v3733 = vunpack.c.h.b16 %v3567
        %v3734 = vunpack.c.l.b16 %v3568
        %v3735 = vunpack.c.h.b16 %v3568
        %v3736 = vunpack.c.l.b16 %v3569
        %v3737 = vunpack.c.h.b16 %v3569
        %v3738 = vunpack.c.l.b16 %v3570
        %v3739 = vunpack.c.h.b16 %v3570
        %v3740 = vunpack.c.l.b16 %v3571
        %v3741 = vunpack.c.h.b16 %v3571
        %v3742 = vunpack.c.l.b16 %v3572
        %v3743 = vunpack.c.h.b16 %v3572
        %v3744 = vunpack.c.l.b16 %v3573
        %v3745 = vunpack.c.h.b16 %v3573
        %v3746 = vunpack.c.l.b16 %v3574
        %v3747 = vunpack.c.h.b16 %v3574
        %v3748 = vunpack.c.l.b16 %v3575
        %v3749 = vunpack.c.h.b16 %v3575
        %v3750 = vunpack.c.l.b16 %v3576
        %v3751 = vunpack.c.h.b16 %v3576
        %v3752 = vunpack.c.l.b16 %v3577
        %v3753 = vunpack.c.h.b16 %v3577
        %v3754 = vunpack.c.l.b16 %v3578
        %v3755 = vunpack.c.h.b16 %v3578
        %v3756 = vunpack.c.l.b16 %v3579
        %v3757 = vunpack.c.h.b16 %v3579
        %v3758 = vunpack.c.l.b16 %v3580
        %v3759 = vunpack.c.h.b16 %v3580
        %v3760 = vunpack.c.l.b16 %v3581
        %v3761 = vunpack.c.h.b16 %v3581
        %v3762 = vunpack.c.l.b16 %v3582
        %v3763 = vunpack.c.h.b16 %v3582
        %v3764 = vunpack.c.l.b16 %v3583
        %v3765 = vunpack.c.h.b16 %v3583
        %v3766 = vunpack.c.l.b16 %v3584
        %v3767 = vunpack.c.h.b16 %v3584
        %v3768 = vunpack.c.l.b16 %v3585
        %v3769 = vunpack.c.h.b16 %v3585
        %v3770 = vunpack.c.l.b16 %v3586
        %v3771 = vunpack.c.h.b16 %v3586
        %v3772 = vunpack.c.l.b16 %v3587
        %v3773 = vunpack.c.h.b16 %v3587
        %v3774 = vunpack.c.l.b16 %v3588
        %v3775 = vunpack.c.h.b16 %v3588
        %v3776 = vunpack.c.l.b16 %v3589
        %v3777 = vunpack.c.h.b16 %v3589
        %v3778 = vunpack.c.l.b16 %v3590
        %v3779 = vunpack.c.h.b16 %v3590
        %v3780 = vunpack.c.l.b16 %v3591
        %v3781 = vunpack.c.h.b16 %v3591
        %v3782 = vunpack.c.l.b16 %v3592
        %v3783 = vunpack.c.h.b16 %v3592
        %v3784 = vunpack.c.l.b16 %v3593
        %v3785 = vunpack.c.h.b16 %v3593
        %v3786 = vunpack.c.l.b16 %v3594
        %v3787 = vunpack.c.h.b16 %v3594
        %v3788 = vunpack.c.l.b16 %v3595
        %v3789 = vunpack.c.h.b16 %v3595
        %v3790 = vunpack.c.l.b16 %v3596
        %v3791 = vunpack.c.h.b16 %v3596
        %v3792 = vunpack.c.l.b16 %v3597
        %v3793 = vunpack.c.h.b16 %v3597
        %v3794 = vunpack.c.l.b16 %v3598
        %v3795 = vunpack.c.h.b16 %v3598
        %v3796 = vunpack.c.l.b16 %v3599
        %v3797 = vunpack.c.h.b16 %v3599
        %v3798 = vunpack.c.l.b16 %v3600
        %v3799 = vunpack.c.h.b16 %v3600
        %v3800 = vunpack.c.l.b16 %v3601
        %v3801 = vunpack.c.h.b16 %v3601
        %v3802 = vunpack.c.l.b16 %v3602
        %v3803 = vunpack.c.h.b16 %v3602
        %v3804 = vunpack.c.l.b16 %v3603
        %v3805 = vunpack.c.h.b16 %v3603
        %v3806 = vpack.c.b16 %v3682, %v3678
        %v3807 = vpack.c.b16 %v3683, %v3679
        %v3808 = vpack.c.b16 %v3684, %v3680
        %v3809 = vpack.c.b16 %v3685, %v3681
        %v3810 = vpack.c.b16 %v3690, %v3686
        %v3811 = vpack.c.b16 %v3691, %v3687
        %v3812 = vpack.c.b16 %v3692, %v3688
        %v3813 = vpack.c.b16 %v3693, %v3689
        %v3814 = vpack.c.b16 %v3698, %v3694
        %v3815 = vpack.c.b16 %v3699, %v3695
        %v3816 = vpack.c.b16 %v3700, %v3696
        %v3817 = vpack.c.b16 %v3701, %v3697
        %v3818 = vpack.c.b16 %v3706, %v3702
        %v3819 = vpack.c.b16 %v3707, %v3703
        %v3820 = vpack.c.b16 %v3708, %v3704
        %v3821 = vpack.c.b16 %v3709, %v3705
        %v3822 = vpack.c.b16 %v3714, %v3710
        %v3823 = vpack.c.b16 %v3715, %v3711
        %v3824 = vpack.c.b16 %v3716, %v3712
        %v3825 = vpack.c.b16 %v3717, %v3713
        %v3826 = vpack.c.b16 %v3722, %v3718
        %v3827 = vpack.c.b16 %v3723, %v3719
        %v3828 = vpack.c.b16 %v3724, %v3720
        %v3829 = vpack.c.b16 %v3725, %v3721
        %v3830 = vpack.c.b16 %v3730, %v3726
        %v3831 = vpack.c.b16 %v3731, %v3727
        %v3832 = vpack.c.b16 %v3732, %v3728
        %v3833 = vpack.c.b16 %v3733, %v3729
        %v3834 = vpack.c.b16 %v3738, %v3734
        %v3835 = vpack.c.b16 %v3739, %v3735
        %v3836 = vpack.c.b16 %v3740, %v3736
        %v3837 = vpack.c.b16 %v3741, %v3737
        %v3838 = vpack.c.b16 %v3746, %v3742
        %v3839 = vpack.c.b16 %v3747, %v3743
        %v3840 = vpack.c.b16 %v3748, %v3744
        %v3841 = vpack.c.b16 %v3749, %v3745
        %v3842 = vpack.c.b16 %v3754, %v3750
        %v3843 = vpack.c.b16 %v3755, %v3751
        %v3844 = vpack.c.b16 %v3756, %v3752
        %v3845 = vpack.c.b16 %v3757, %v3753
        %v3846 = vpack.c.b16 %v3762, %v3758
        %v3847 = vpack.c.b16 %v3763, %v3759
        %v3848 = vpack.c.b16 %v3764, %v3760
        %v3849 = vpack.c.b16 %v3765, %v3761
        %v3850 = vpack.c.b16 %v3770, %v3766
        %v3851 = vpack.c.b16 %v3771, %v3767
        %v3852 = vpack.c.b16 %v3772, %v3768
        %v3853 = vpack.c.b16 %v3773, %v3769
        %v3854 = vpack.c.b16 %v3778, %v3774
        %v3855 = vpack.c.b16 %v3779, %v3775
        %v3856 = vpack.c.b16 %v3780, %v3776
        %v3857 = vpack.c.b16 %v3781, %v3777
        %v3858 = vpack.c.b16 %v3786, %v3782
        %v3859 = vpack.c.b16 %v3787, %v3783
        %v3860 = vpack.c.b16 %v3788, %v3784
        %v3861 = vpack.c.b16 %v3789, %v3785
        %v3862 = vpack.c.b16 %v3794, %v3790
        %v3863 = vpack.c.b16 %v3795, %v3791
        %v3864 = vpack.c.b16 %v3796, %v3792
        %v3865 = vpack.c.b16 %v3797, %v3793
        %v3866 = vpack.c.b16 %v3802, %v3798
        %v3867 = vpack.c.b16 %v3803, %v3799
        %v3868 = vpack.c.b16 %v3804, %v3800
        %v3869 = vpack.c.b16 %v3805, %v3801
        %3934 = vmatpush.bf16.msra.mxu0 %v3834
        %3935 = vmatpush.bf16.msra.mxu0 %v3830
        %3936 = vmatpush.bf16.msra.mxu0 %v3826
        %3937 = vmatpush.bf16.msra.mxu0 %v3822
        %3938 = vmatpush.bf16.msra.mxu0 %v3818
        %3939 = vmatpush.bf16.msra.mxu0 %v3814
        %3940 = vmatpush.bf16.msra.mxu0 %v3810
        %3941 = vmatpush.bf16.msra.mxu0 %v3806
        %3942 = vmatmul.bf16.gmra.mxu0 %v3538
        %v3943 = vpop.f32.mrf.mxu0
        %v3944 = vadd.f32 %v3606, %v3943
        %v3945 = vpop.f32.mrf.mxu0
        %v3946 = vadd.f32 %v3606, %v3945
        %3947 = vdwg.mxu0
        %3948 = vmatpush.bf16.msra.mxu0 %v3866
        %3949 = vmatpush.bf16.msra.mxu0 %v3862
        %3950 = vmatpush.bf16.msra.mxu0 %v3858
        %3951 = vmatpush.bf16.msra.mxu0 %v3854
        %3952 = vmatpush.bf16.msra.mxu0 %v3850
        %3953 = vmatpush.bf16.msra.mxu0 %v3846
        %3954 = vmatpush.bf16.msra.mxu0 %v3842
        %3955 = vmatpush.bf16.msra.mxu0 %v3838
        %3956 = vmatmul.bf16.gmra.mxu0 %v3539
        %v3957 = vpop.f32.mrf.mxu0
        %v3958 = vadd.f32 %v3944, %v3957
        %v3959 = vpop.f32.mrf.mxu0
        %v3960 = vadd.f32 %v3946, %v3959
        %3961 = vdwg.mxu0
        %3962 = vmatpush.bf16.msra.mxu0 %v3835
        %3963 = vmatpush.bf16.msra.mxu0 %v3831
        %3964 = vmatpush.bf16.msra.mxu0 %v3827
        %3965 = vmatpush.bf16.msra.mxu0 %v3823
        %3966 = vmatpush.bf16.msra.mxu0 %v3819
        %3967 = vmatpush.bf16.msra.mxu0 %v3815
        %3968 = vmatpush.bf16.msra.mxu0 %v3811
        %3969 = vmatpush.bf16.msra.mxu0 %v3807
        %3970 = vmatmul.bf16.gmra.mxu0 %v3538
        %v3971 = vpop.f32.mrf.mxu0
        %v3972 = vadd.f32 %v3607, %v3971
        %v3973 = vpop.f32.mrf.mxu0
        %v3974 = vadd.f32 %v3607, %v3973
        %3975 = vdwg.mxu0
        %3976 = vmatpush.bf16.msra.mxu0 %v3867
        %3977 = vmatpush.bf16.msra.mxu0 %v3863
        %3978 = vmatpush.bf16.msra.mxu0 %v3859
        %3979 = vmatpush.bf16.msra.mxu0 %v3855
        %3980 = vmatpush.bf16.msra.mxu0 %v3851
        %3981 = vmatpush.bf16.msra.mxu0 %v3847
        %3982 = vmatpush.bf16.msra.mxu0 %v3843
        %3983 = vmatpush.bf16.msra.mxu0 %v3839
        %3984 = vmatmul.bf16.gmra.mxu0 %v3539
        %v3985 = vpop.f32.mrf.mxu0
        %v3986 = vadd.f32 %v3972, %v3985
        %v3987 = vpop.f32.mrf.mxu0
        %v3988 = vadd.f32 %v3974, %v3987
        %3989 = vdwg.mxu0
        %3990 = vmatpush.bf16.msra.mxu0 %v3836
        %3991 = vmatpush.bf16.msra.mxu0 %v3832
        %3992 = vmatpush.bf16.msra.mxu0 %v3828
        %3993 = vmatpush.bf16.msra.mxu0 %v3824
        %3994 = vmatpush.bf16.msra.mxu0 %v3820
        %3995 = vmatpush.bf16.msra.mxu0 %v3816
        %3996 = vmatpush.bf16.msra.mxu0 %v3812
        %3997 = vmatpush.bf16.msra.mxu0 %v3808
        %3998 = vmatmul.bf16.gmra.mxu0 %v3538
        %v3999 = vpop.f32.mrf.mxu0
        %v4000 = vadd.f32 %v3608, %v3999
        %v4001 = vpop.f32.mrf.mxu0
        %v4002 = vadd.f32 %v3608, %v4001
        %4003 = vdwg.mxu0
        %4004 = vmatpush.bf16.msra.mxu0 %v3868
        %4005 = vmatpush.bf16.msra.mxu0 %v3864
        %4006 = vmatpush.bf16.msra.mxu0 %v3860
        %4007 = vmatpush.bf16.msra.mxu0 %v3856
        %4008 = vmatpush.bf16.msra.mxu0 %v3852
        %4009 = vmatpush.bf16.msra.mxu0 %v3848
        %4010 = vmatpush.bf16.msra.mxu0 %v3844
        %4011 = vmatpush.bf16.msra.mxu0 %v3840
        %4012 = vmatmul.bf16.gmra.mxu0 %v3539
        %v4013 = vpop.f32.mrf.mxu0
        %v4014 = vadd.f32 %v4000, %v4013
        %v4015 = vpop.f32.mrf.mxu0
        %v4016 = vadd.f32 %v4002, %v4015
        %4017 = vdwg.mxu0
        %4018 = vmatpush.bf16.msra.mxu0 %v3837
        %4019 = vmatpush.bf16.msra.mxu0 %v3833
        %4020 = vmatpush.bf16.msra.mxu0 %v3829
        %4021 = vmatpush.bf16.msra.mxu0 %v3825
        %4022 = vmatpush.bf16.msra.mxu0 %v3821
        %4023 = vmatpush.bf16.msra.mxu0 %v3817
        %4024 = vmatpush.bf16.msra.mxu0 %v3813
        %4025 = vmatpush.bf16.msra.mxu0 %v3809
        %4026 = vmatmul.bf16.gmra.mxu0 %v3538
        %v4027 = vpop.f32.mrf.mxu0
        %v4028 = vadd.f32 %v3609, %v4027
        %v4029 = vpop.f32.mrf.mxu0
        %v4030 = vadd.f32 %v3609, %v4029
        %4031 = vdwg.mxu0
        %4032 = vmatpush.bf16.msra.mxu0 %v3869
        %4033 = vmatpush.bf16.msra.mxu0 %v3865
        %4034 = vmatpush.bf16.msra.mxu0 %v3861
        %4035 = vmatpush.bf16.msra.mxu0 %v3857
        %4036 = vmatpush.bf16.msra.mxu0 %v3853
        %4037 = vmatpush.bf16.msra.mxu0 %v3849
        %4038 = vmatpush.bf16.msra.mxu0 %v3845
        %4039 = vmatpush.bf16.msra.mxu0 %v3841
        %4040 = vmatmul.bf16.gmra.mxu0 %v3539
        %v4041 = vpop.f32.mrf.mxu0
        %v4042 = vadd.f32 %v4028, %v4041
        %v4043 = vpop.f32.mrf.mxu0
        %v4044 = vadd.f32 %v4030, %v4043
        %4045 = vdwg.mxu0
        %v4046 = vmax.f32 %v3958, 0.0
        %v4047 = vmax.f32 %v3986, 0.0
        %v4048 = vmax.f32 %v4014, 0.0
        %v4049 = vmax.f32 %v4042, 0.0
        %v4050 = vmax.f32 %v3960, 0.0
        %v4051 = vmax.f32 %v3988, 0.0
        %v4052 = vmax.f32 %v4016, 0.0
        %v4053 = vmax.f32 %v4044, 0.0
        %v4054 = vpack.c.bf16 %v4050, %v4046
        %v4055 = vpack.c.bf16 %v4051, %v4047
        %v4056 = vpack.c.bf16 %v4052, %v4048
        %v4057 = vpack.c.bf16 %v4053, %v4049
        %v4058 = vld [vmem:[%s1014] sm:$0xff]
        %v4059 = vld [vmem:[%s1014 + $0x8] sm:$0xff]
        %v4060 = vld [vmem:[%s1014 + $0x10] sm:$0xff]
        %v4061 = vld [vmem:[%s1014 + $0x18] sm:$0xff]
        %v4062 = vld [vmem:[%s1014 + $0x20] sm:$0xff]
        %v4063 = vld [vmem:[%s1014 + $0x28] sm:$0xff]
        %v4064 = vld [vmem:[%s1014 + $0x30] sm:$0xff]
        %v4065 = vld [vmem:[%s1014 + $0x38] sm:$0xff]
        %v4066 = vld [vmem:[%s1014 + $0x40] sm:$0xff]
        %v4067 = vld [vmem:[%s1014 + $0x48] sm:$0xff]
        %v4068 = vld [vmem:[%s1014 + $0x50] sm:$0xff]
        %v4069 = vld [vmem:[%s1014 + $0x58] sm:$0xff]
        %v4070 = vld [vmem:[%s1014 + $0x60] sm:$0xff]
        %v4071 = vld [vmem:[%s1014 + $0x68] sm:$0xff]
        %v4072 = vld [vmem:[%s1014 + $0x70] sm:$0xff]
        %v4073 = vld [vmem:[%s1014 + $0x78] sm:$0xff]
        %v4074 = vld [vmem:[%s1014 + $0x80] sm:$0xff]
        %v4075 = vld [vmem:[%s1014 + $0x88] sm:$0xff]
        %v4076 = vld [vmem:[%s1014 + $0x90] sm:$0xff]
        %v4077 = vld [vmem:[%s1014 + $0x98] sm:$0xff]
        %v4078 = vld [vmem:[%s1014 + $0xa0] sm:$0xff]
        %v4079 = vld [vmem:[%s1014 + $0xa8] sm:$0xff]
        %v4080 = vld [vmem:[%s1014 + $0xb0] sm:$0xff]
        %v4081 = vld [vmem:[%s1014 + $0xb8] sm:$0xff]
        %v4082 = vld [vmem:[%s1014 + $0xc0] sm:$0xff]
        %v4083 = vld [vmem:[%s1014 + $0xc8] sm:$0xff]
        %v4084 = vld [vmem:[%s1014 + $0xd0] sm:$0xff]
        %v4085 = vld [vmem:[%s1014 + $0xd8] sm:$0xff]
        %v4086 = vld [vmem:[%s1014 + $0xe0] sm:$0xff]
        %v4087 = vld [vmem:[%s1014 + $0xe8] sm:$0xff]
        %v4088 = vld [vmem:[%s1014 + $0xf0] sm:$0xff]
        %v4089 = vld [vmem:[%s1014 + $0xf8] sm:$0xff]
        %v4090 = vld [vmem:[%s1014 + $0x100] sm:$0xff]
        %v4091 = vld [vmem:[%s1014 + $0x108] sm:$0xff]
        %v4092 = vld [vmem:[%s1014 + $0x110] sm:$0xff]
        %v4093 = vld [vmem:[%s1014 + $0x118] sm:$0xff]
        %v4094 = vld [vmem:[%s1014 + $0x120] sm:$0xff]
        %v4095 = vld [vmem:[%s1014 + $0x128] sm:$0xff]
        %v4096 = vld [vmem:[%s1014 + $0x130] sm:$0xff]
        %v4097 = vld [vmem:[%s1014 + $0x138] sm:$0xff]
        %v4098 = vld [vmem:[%s1014 + $0x140] sm:$0xff]
        %v4099 = vld [vmem:[%s1014 + $0x148] sm:$0xff]
        %v4100 = vld [vmem:[%s1014 + $0x150] sm:$0xff]
        %v4101 = vld [vmem:[%s1014 + $0x158] sm:$0xff]
        %v4102 = vld [vmem:[%s1014 + $0x160] sm:$0xff]
        %v4103 = vld [vmem:[%s1014 + $0x168] sm:$0xff]
        %v4104 = vld [vmem:[%s1014 + $0x170] sm:$0xff]
        %v4105 = vld [vmem:[%s1014 + $0x178] sm:$0xff]
        %v4106 = vld [vmem:[%s1014 + $0x180] sm:$0xff]
        %v4107 = vld [vmem:[%s1014 + $0x188] sm:$0xff]
        %v4108 = vld [vmem:[%s1014 + $0x190] sm:$0xff]
        %v4109 = vld [vmem:[%s1014 + $0x198] sm:$0xff]
        %v4110 = vld [vmem:[%s1014 + $0x1a0] sm:$0xff]
        %v4111 = vld [vmem:[%s1014 + $0x1a8] sm:$0xff]
        %v4112 = vld [vmem:[%s1014 + $0x1b0] sm:$0xff]
        %v4113 = vld [vmem:[%s1014 + $0x1b8] sm:$0xff]
        %v4114 = vld [vmem:[%s1014 + $0x1c0] sm:$0xff]
        %v4115 = vld [vmem:[%s1014 + $0x1c8] sm:$0xff]
        %v4116 = vld [vmem:[%s1014 + $0x1d0] sm:$0xff]
        %v4117 = vld [vmem:[%s1014 + $0x1d8] sm:$0xff]
        %v4118 = vld [vmem:[%s1014 + $0x1e0] sm:$0xff]
        %v4119 = vld [vmem:[%s1014 + $0x1e8] sm:$0xff]
        %v4120 = vld [vmem:[%s1014 + $0x1f0] sm:$0xff]
        %v4121 = vld [vmem:[%s1014 + $0x1f8] sm:$0xff]
        %v4122 = vld [vmem:[%s1024] sm:$0x3]
        %v4124 = vperm.slane %v4122, 0
        %v4125 = vperm.slane %v4122, 1
        %v4192 = vunpack.c.l.b16 %v4058
        %v4193 = vunpack.c.h.b16 %v4058
        %v4194 = vunpack.c.l.b16 %v4059
        %v4195 = vunpack.c.h.b16 %v4059
        %v4196 = vunpack.c.l.b16 %v4060
        %v4197 = vunpack.c.h.b16 %v4060
        %v4198 = vunpack.c.l.b16 %v4061
        %v4199 = vunpack.c.h.b16 %v4061
        %v4200 = vunpack.c.l.b16 %v4062
        %v4201 = vunpack.c.h.b16 %v4062
        %v4202 = vunpack.c.l.b16 %v4063
        %v4203 = vunpack.c.h.b16 %v4063
        %v4204 = vunpack.c.l.b16 %v4064
        %v4205 = vunpack.c.h.b16 %v4064
        %v4206 = vunpack.c.l.b16 %v4065
        %v4207 = vunpack.c.h.b16 %v4065
        %v4208 = vunpack.c.l.b16 %v4066
        %v4209 = vunpack.c.h.b16 %v4066
        %v4210 = vunpack.c.l.b16 %v4067
        %v4211 = vunpack.c.h.b16 %v4067
        %v4212 = vunpack.c.l.b16 %v4068
        %v4213 = vunpack.c.h.b16 %v4068
        %v4214 = vunpack.c.l.b16 %v4069
        %v4215 = vunpack.c.h.b16 %v4069
        %v4216 = vunpack.c.l.b16 %v4070
        %v4217 = vunpack.c.h.b16 %v4070
        %v4218 = vunpack.c.l.b16 %v4071
        %v4219 = vunpack.c.h.b16 %v4071
        %v4220 = vunpack.c.l.b16 %v4072
        %v4221 = vunpack.c.h.b16 %v4072
        %v4222 = vunpack.c.l.b16 %v4073
        %v4223 = vunpack.c.h.b16 %v4073
        %v4224 = vunpack.c.l.b16 %v4074
        %v4225 = vunpack.c.h.b16 %v4074
        %v4226 = vunpack.c.l.b16 %v4075
        %v4227 = vunpack.c.h.b16 %v4075
        %v4228 = vunpack.c.l.b16 %v4076
        %v4229 = vunpack.c.h.b16 %v4076
        %v4230 = vunpack.c.l.b16 %v4077
        %v4231 = vunpack.c.h.b16 %v4077
        %v4232 = vunpack.c.l.b16 %v4078
        %v4233 = vunpack.c.h.b16 %v4078
        %v4234 = vunpack.c.l.b16 %v4079
        %v4235 = vunpack.c.h.b16 %v4079
        %v4236 = vunpack.c.l.b16 %v4080
        %v4237 = vunpack.c.h.b16 %v4080
        %v4238 = vunpack.c.l.b16 %v4081
        %v4239 = vunpack.c.h.b16 %v4081
        %v4240 = vunpack.c.l.b16 %v4082
        %v4241 = vunpack.c.h.b16 %v4082
        %v4242 = vunpack.c.l.b16 %v4083
        %v4243 = vunpack.c.h.b16 %v4083
        %v4244 = vunpack.c.l.b16 %v4084
        %v4245 = vunpack.c.h.b16 %v4084
        %v4246 = vunpack.c.l.b16 %v4085
        %v4247 = vunpack.c.h.b16 %v4085
        %v4248 = vunpack.c.l.b16 %v4086
        %v4249 = vunpack.c.h.b16 %v4086
        %v4250 = vunpack.c.l.b16 %v4087
        %v4251 = vunpack.c.h.b16 %v4087
        %v4252 = vunpack.c.l.b16 %v4088
        %v4253 = vunpack.c.h.b16 %v4088
        %v4254 = vunpack.c.l.b16 %v4089
        %v4255 = vunpack.c.h.b16 %v4089
        %v4256 = vunpack.c.l.b16 %v4090
        %v4257 = vunpack.c.h.b16 %v4090
        %v4258 = vunpack.c.l.b16 %v4091
        %v4259 = vunpack.c.h.b16 %v4091
        %v4260 = vunpack.c.l.b16 %v4092
        %v4261 = vunpack.c.h.b16 %v4092
        %v4262 = vunpack.c.l.b16 %v4093
        %v4263 = vunpack.c.h.b16 %v4093
        %v4264 = vunpack.c.l.b16 %v4094
        %v4265 = vunpack.c.h.b16 %v4094
        %v4266 = vunpack.c.l.b16 %v4095
        %v4267 = vunpack.c.h.b16 %v4095
        %v4268 = vunpack.c.l.b16 %v4096
        %v4269 = vunpack.c.h.b16 %v4096
        %v4270 = vunpack.c.l.b16 %v4097
        %v4271 = vunpack.c.h.b16 %v4097
        %v4272 = vunpack.c.l.b16 %v4098
        %v4273 = vunpack.c.h.b16 %v4098
        %v4274 = vunpack.c.l.b16 %v4099
        %v4275 = vunpack.c.h.b16 %v4099
        %v4276 = vunpack.c.l.b16 %v4100
        %v4277 = vunpack.c.h.b16 %v4100
        %v4278 = vunpack.c.l.b16 %v4101
        %v4279 = vunpack.c.h.b16 %v4101
        %v4280 = vunpack.c.l.b16 %v4102
        %v4281 = vunpack.c.h.b16 %v4102
        %v4282 = vunpack.c.l.b16 %v4103
        %v4283 = vunpack.c.h.b16 %v4103
        %v4284 = vunpack.c.l.b16 %v4104
        %v4285 = vunpack.c.h.b16 %v4104
        %v4286 = vunpack.c.l.b16 %v4105
        %v4287 = vunpack.c.h.b16 %v4105
        %v4288 = vunpack.c.l.b16 %v4106
        %v4289 = vunpack.c.h.b16 %v4106
        %v4290 = vunpack.c.l.b16 %v4107
        %v4291 = vunpack.c.h.b16 %v4107
        %v4292 = vunpack.c.l.b16 %v4108
        %v4293 = vunpack.c.h.b16 %v4108
        %v4294 = vunpack.c.l.b16 %v4109
        %v4295 = vunpack.c.h.b16 %v4109
        %v4296 = vunpack.c.l.b16 %v4110
        %v4297 = vunpack.c.h.b16 %v4110
        %v4298 = vunpack.c.l.b16 %v4111
        %v4299 = vunpack.c.h.b16 %v4111
        %v4300 = vunpack.c.l.b16 %v4112
        %v4301 = vunpack.c.h.b16 %v4112
        %v4302 = vunpack.c.l.b16 %v4113
        %v4303 = vunpack.c.h.b16 %v4113
        %v4304 = vunpack.c.l.b16 %v4114
        %v4305 = vunpack.c.h.b16 %v4114
        %v4306 = vunpack.c.l.b16 %v4115
        %v4307 = vunpack.c.h.b16 %v4115
        %v4308 = vunpack.c.l.b16 %v4116
        %v4309 = vunpack.c.h.b16 %v4116
        %v4310 = vunpack.c.l.b16 %v4117
        %v4311 = vunpack.c.h.b16 %v4117
        %v4312 = vunpack.c.l.b16 %v4118
        %v4313 = vunpack.c.h.b16 %v4118
        %v4314 = vunpack.c.l.b16 %v4119
        %v4315 = vunpack.c.h.b16 %v4119
        %v4316 = vunpack.c.l.b16 %v4120
        %v4317 = vunpack.c.h.b16 %v4120
        %v4318 = vunpack.c.l.b16 %v4121
        %v4319 = vunpack.c.h.b16 %v4121
        %v4320 = vpack.c.b16 %v4194, %v4192
        %v4321 = vpack.c.b16 %v4195, %v4193
        %v4322 = vpack.c.b16 %v4198, %v4196
        %v4323 = vpack.c.b16 %v4199, %v4197
        %v4324 = vpack.c.b16 %v4202, %v4200
        %v4325 = vpack.c.b16 %v4203, %v4201
        %v4326 = vpack.c.b16 %v4206, %v4204
        %v4327 = vpack.c.b16 %v4207, %v4205
        %v4328 = vpack.c.b16 %v4210, %v4208
        %v4329 = vpack.c.b16 %v4211, %v4209
        %v4330 = vpack.c.b16 %v4214, %v4212
        %v4331 = vpack.c.b16 %v4215, %v4213
        %v4332 = vpack.c.b16 %v4218, %v4216
        %v4333 = vpack.c.b16 %v4219, %v4217
        %v4334 = vpack.c.b16 %v4222, %v4220
        %v4335 = vpack.c.b16 %v4223, %v4221
        %v4336 = vpack.c.b16 %v4226, %v4224
        %v4337 = vpack.c.b16 %v4227, %v4225
        %v4338 = vpack.c.b16 %v4230, %v4228
        %v4339 = vpack.c.b16 %v4231, %v4229
        %v4340 = vpack.c.b16 %v4234, %v4232
        %v4341 = vpack.c.b16 %v4235, %v4233
        %v4342 = vpack.c.b16 %v4238, %v4236
        %v4343 = vpack.c.b16 %v4239, %v4237
        %v4344 = vpack.c.b16 %v4242, %v4240
        %v4345 = vpack.c.b16 %v4243, %v4241
        %v4346 = vpack.c.b16 %v4246, %v4244
        %v4347 = vpack.c.b16 %v4247, %v4245
        %v4348 = vpack.c.b16 %v4250, %v4248
        %v4349 = vpack.c.b16 %v4251, %v4249
        %v4350 = vpack.c.b16 %v4254, %v4252
        %v4351 = vpack.c.b16 %v4255, %v4253
        %v4352 = vpack.c.b16 %v4258, %v4256
        %v4353 = vpack.c.b16 %v4259, %v4257
        %v4354 = vpack.c.b16 %v4262, %v4260
        %v4355 = vpack.c.b16 %v4263, %v4261
        %v4356 = vpack.c.b16 %v4266, %v4264
        %v4357 = vpack.c.b16 %v4267, %v4265
        %v4358 = vpack.c.b16 %v4270, %v4268
        %v4359 = vpack.c.b16 %v4271, %v4269
        %v4360 = vpack.c.b16 %v4274, %v4272
        %v4361 = vpack.c.b16 %v4275, %v4273
        %v4362 = vpack.c.b16 %v4278, %v4276
        %v4363 = vpack.c.b16 %v4279, %v4277
        %v4364 = vpack.c.b16 %v4282, %v4280
        %v4365 = vpack.c.b16 %v4283, %v4281
        %v4366 = vpack.c.b16 %v4286, %v4284
        %v4367 = vpack.c.b16 %v4287, %v4285
        %v4368 = vpack.c.b16 %v4290, %v4288
        %v4369 = vpack.c.b16 %v4291, %v4289
        %v4370 = vpack.c.b16 %v4294, %v4292
        %v4371 = vpack.c.b16 %v4295, %v4293
        %v4372 = vpack.c.b16 %v4298, %v4296
        %v4373 = vpack.c.b16 %v4299, %v4297
        %v4374 = vpack.c.b16 %v4302, %v4300
        %v4375 = vpack.c.b16 %v4303, %v4301
        %v4376 = vpack.c.b16 %v4306, %v4304
        %v4377 = vpack.c.b16 %v4307, %v4305
        %v4378 = vpack.c.b16 %v4310, %v4308
        %v4379 = vpack.c.b16 %v4311, %v4309
        %v4380 = vpack.c.b16 %v4314, %v4312
        %v4381 = vpack.c.b16 %v4315, %v4313
        %v4382 = vpack.c.b16 %v4318, %v4316
        %v4383 = vpack.c.b16 %v4319, %v4317
        %4448 = vmatpush.bf16.msra.mxu0 %v4334
        %4449 = vmatpush.bf16.msra.mxu0 %v4332
        %4450 = vmatpush.bf16.msra.mxu0 %v4330
        %4451 = vmatpush.bf16.msra.mxu0 %v4328
        %4452 = vmatpush.bf16.msra.mxu0 %v4326
        %4453 = vmatpush.bf16.msra.mxu0 %v4324
        %4454 = vmatpush.bf16.msra.mxu0 %v4322
        %4455 = vmatpush.bf16.msra.mxu0 %v4320
        %4456 = vmatmul.bf16.gmra.mxu0 %v4054
        %v4457 = vpop.f32.mrf.mxu0
        %v4458 = vadd.f32 %v4124, %v4457
        %v4459 = vpop.f32.mrf.mxu0
        %v4460 = vadd.f32 %v4124, %v4459
        %4461 = vdwg.mxu0
        %4462 = vmatpush.bf16.msra.mxu0 %v4350
        %4463 = vmatpush.bf16.msra.mxu0 %v4348
        %4464 = vmatpush.bf16.msra.mxu0 %v4346
        %4465 = vmatpush.bf16.msra.mxu0 %v4344
        %4466 = vmatpush.bf16.msra.mxu0 %v4342
        %4467 = vmatpush.bf16.msra.mxu0 %v4340
        %4468 = vmatpush.bf16.msra.mxu0 %v4338
        %4469 = vmatpush.bf16.msra.mxu0 %v4336
        %4470 = vmatmul.bf16.gmra.mxu0 %v4055
        %v4471 = vpop.f32.mrf.mxu0
        %v4472 = vadd.f32 %v4458, %v4471
        %v4473 = vpop.f32.mrf.mxu0
        %v4474 = vadd.f32 %v4460, %v4473
        %4475 = vdwg.mxu0
        %4476 = vmatpush.bf16.msra.mxu0 %v4366
        %4477 = vmatpush.bf16.msra.mxu0 %v4364
        %4478 = vmatpush.bf16.msra.mxu0 %v4362
        %4479 = vmatpush.bf16.msra.mxu0 %v4360
        %4480 = vmatpush.bf16.msra.mxu0 %v4358
        %4481 = vmatpush.bf16.msra.mxu0 %v4356
        %4482 = vmatpush.bf16.msra.mxu0 %v4354
        %4483 = vmatpush.bf16.msra.mxu0 %v4352
        %4484 = vmatmul.bf16.gmra.mxu0 %v4056
        %v4485 = vpop.f32.mrf.mxu0
        %v4486 = vadd.f32 %v4472, %v4485
        %v4487 = vpop.f32.mrf.mxu0
        %v4488 = vadd.f32 %v4474, %v4487
        %4489 = vdwg.mxu0
        %4490 = vmatpush.bf16.msra.mxu0 %v4382
        %4491 = vmatpush.bf16.msra.mxu0 %v4380
        %4492 = vmatpush.bf16.msra.mxu0 %v4378
        %4493 = vmatpush.bf16.msra.mxu0 %v4376
        %4494 = vmatpush.bf16.msra.mxu0 %v4374
        %4495 = vmatpush.bf16.msra.mxu0 %v4372
        %4496 = vmatpush.bf16.msra.mxu0 %v4370
        %4497 = vmatpush.bf16.msra.mxu0 %v4368
        %4498 = vmatmul.bf16.gmra.mxu0 %v4057
        %v4499 = vpop.f32.mrf.mxu0
        %v4500 = vadd.f32 %v4486, %v4499
        %v4501 = vpop.f32.mrf.mxu0
        %v4502 = vadd.f32 %v4488, %v4501
        %4503 = vdwg.mxu0
        %4504 = vmatpush.bf16.msra.mxu0 %v4335
        %4505 = vmatpush.bf16.msra.mxu0 %v4333
        %4506 = vmatpush.bf16.msra.mxu0 %v4331
        %4507 = vmatpush.bf16.msra.mxu0 %v4329
        %4508 = vmatpush.bf16.msra.mxu0 %v4327
        %4509 = vmatpush.bf16.msra.mxu0 %v4325
        %4510 = vmatpush.bf16.msra.mxu0 %v4323
        %4511 = vmatpush.bf16.msra.mxu0 %v4321
        %4512 = vmatmul.bf16.gmra.mxu0 %v4054
        %v4513 = vpop.f32.mrf.mxu0
        %v4514 = vadd.f32 %v4125, %v4513
        %v4515 = vpop.f32.mrf.mxu0
        %v4516 = vadd.f32 %v4125, %v4515
        %4517 = vdwg.mxu0
        %4518 = vmatpush.bf16.msra.mxu0 %v4351
        %4519 = vmatpush.bf16.msra.mxu0 %v4349
        %4520 = vmatpush.bf16.msra.mxu0 %v4347
        %4521 = vmatpush.bf16.msra.mxu0 %v4345
        %4522 = vmatpush.bf16.msra.mxu0 %v4343
        %4523 = vmatpush.bf16.msra.mxu0 %v4341
        %4524 = vmatpush.bf16.msra.mxu0 %v4339
        %4525 = vmatpush.bf16.msra.mxu0 %v4337
        %4526 = vmatmul.bf16.gmra.mxu0 %v4055
        %v4527 = vpop.f32.mrf.mxu0
        %v4528 = vadd.f32 %v4514, %v4527
        %v4529 = vpop.f32.mrf.mxu0
        %v4530 = vadd.f32 %v4516, %v4529
        %4531 = vdwg.mxu0
        %4532 = vmatpush.bf16.msra.mxu0 %v4367
        %4533 = vmatpush.bf16.msra.mxu0 %v4365
        %4534 = vmatpush.bf16.msra.mxu0 %v4363
        %4535 = vmatpush.bf16.msra.mxu0 %v4361
        %4536 = vmatpush.bf16.msra.mxu0 %v4359
        %4537 = vmatpush.bf16.msra.mxu0 %v4357
        %4538 = vmatpush.bf16.msra.mxu0 %v4355
        %4539 = vmatpush.bf16.msra.mxu0 %v4353
        %4540 = vmatmul.bf16.gmra.mxu0 %v4056
        %v4541 = vpop.f32.mrf.mxu0
        %v4542 = vadd.f32 %v4528, %v4541
        %v4543 = vpop.f32.mrf.mxu0
        %v4544 = vadd.f32 %v4530, %v4543
        %4545 = vdwg.mxu0
        %4546 = vmatpush.bf16.msra.mxu0 %v4383
        %4547 = vmatpush.bf16.msra.mxu0 %v4381
        %4548 = vmatpush.bf16.msra.mxu0 %v4379
        %4549 = vmatpush.bf16.msra.mxu0 %v4377
        %4550 = vmatpush.bf16.msra.mxu0 %v4375
        %4551 = vmatpush.bf16.msra.mxu0 %v4373
        %4552 = vmatpush.bf16.msra.mxu0 %v4371
        %4553 = vmatpush.bf16.msra.mxu0 %v4369
        %4554 = vmatmul.bf16.gmra.mxu0 %v4057
        %v4555 = vpop.f32.mrf.mxu0
        %v4556 = vadd.f32 %v4542, %v4555
        %v4557 = vpop.f32.mrf.mxu0
        %v4558 = vadd.f32 %v4544, %v4557
        %4559 = vdwg.mxu0
        %v4560 = vadd.f32 %v4500, %v3534
        %v4561 = vadd.f32 %v4556, %v3535
        %v4562 = vadd.f32 %v4502, %v3536
        %v4563 = vadd.f32 %v4558, %v3537
        %v4564 = vld [vmem:[%s1034] sm:$0x3]
        %v4565 = vld [vmem:[%s1044] sm:$0x3]
        %v4566 = vadd.f32 %v4560, %v4561
        %4567 = vadd.xlane.f32.xlu0 %v4566
        %v4568 = vpop.xlane.xlu0 %4567
        %v4569 = vadd.f32 %v4562, %v4563
        %4570 = vadd.xlane.f32.xlu0 %v4569
        %v4571 = vpop.xlane.xlu0 %4570
        %v4572 = vmul.f32 %v4568, %v3475
        %v4573 = vmul.f32 %v4571, %v3475
        %v4574 = vsub.f32 %v4560, %v4572
        %v4575 = vsub.f32 %v4561, %v4572
        %v4576 = vsub.f32 %v4562, %v4573
        %v4577 = vsub.f32 %v4563, %v4573
        %v4578 = vmul.f32 %v4574, %v4574
        %v4579 = vmul.f32 %v4575, %v4575
        %v4580 = vmul.f32 %v4576, %v4576
        %v4581 = vmul.f32 %v4577, %v4577
        %v4582 = vadd.f32 %v4578, %v4579
        %4583 = vadd.xlane.f32.xlu0 %v4582
        %v4584 = vpop.xlane.xlu0 %4583
        %v4585 = vadd.f32 %v4580, %v4581
        %4586 = vadd.xlane.f32.xlu0 %v4585
        %v4587 = vpop.xlane.xlu0 %4586
        %v4588 = vmul.f32 %v4584, %v3475
        %v4589 = vmul.f32 %v4587, %v3475
        %v4590 = vadd.f32 %v4588, 1e-05
        %v4591 = vadd.f32 %v4589, 1e-05
        %v4592 = vrsqrt.pop %v4590
        %v4593 = vmul.f32 %v4592, %v4590
        %v4594 = vmul.f32 %v4593, %v4592
        %v4595 = vmul.f32 0.5, %v4594
        %v4596 = vsub.f32 1.5, %v4595
        %v4597 = vmul.f32 %v4592, %v4596
        %vm4598 = vweird.f32 %v4590
        %vm4599 = vweird.f32 %v4592
        %vm4600 = vmor %vm4598, %vm4599
        %v4601 = vsel %vm4600, %v4592, %v4597
        %v4602 = vrsqrt.pop %v4591
        %v4603 = vmul.f32 %v4602, %v4591
        %v4604 = vmul.f32 %v4603, %v4602
        %v4605 = vmul.f32 0.5, %v4604
        %v4606 = vsub.f32 1.5, %v4605
        %v4607 = vmul.f32 %v4602, %v4606
        %vm4608 = vweird.f32 %v4591
        %vm4609 = vweird.f32 %v4602
        %vm4610 = vmor %vm4608, %vm4609
        %v4611 = vsel %vm4610, %v4602, %v4607
        %v4612 = vmul.f32 %v4574, %v4601
        %v4613 = vmul.f32 %v4575, %v4601
        %v4614 = vmul.f32 %v4576, %v4611
        %v4615 = vmul.f32 %v4577, %v4611
        %v4617 = vperm.slane %v4564, 0
        %v4618 = vperm.slane %v4564, 1
        %v4621 = vmul.f32 %v4612, %v4617
        %v4622 = vmul.f32 %v4613, %v4618
        %v4623 = vmul.f32 %v4614, %v4617
        %v4624 = vmul.f32 %v4615, %v4618
        %v4626 = vperm.slane %v4565, 0
        %v4627 = vperm.slane %v4565, 1
        %v4630 = vadd.f32 %v4621, %v4626
        %v4631 = vadd.f32 %v4622, %v4627
        %v4632 = vadd.f32 %v4623, %v4626
        %v4633 = vadd.f32 %v4624, %v4627
        %4634 = vst [vmem:[#allocation2] sm:$0xff] %v4630
        %4635 = vst [vmem:[#allocation2 + $0x8] sm:$0xff] %v4631
        %4636 = vst [vmem:[#allocation2 + $0x10] sm:$0xff] %v4632
        %4637 = vst [vmem:[#allocation2 + $0x18] sm:$0xff] %v4633
        %p4638 = scmp.eq.s32.totalorder %s63, 2
        // Predicated region
        $region157: #{transformer_encoder_pallas.1} parent=87 // pred_check
          %p4639 = pneg %p4638
        $region158: #{transformer_encoder_pallas.1} parent=87 // pred_check_branch
          %4641 = sbr.rel (%p4639) target = $region160
        $region159: #{transformer_encoder_pallas.1} parent=87 // pred_region
          %4642 = vst [vmem:[%s1173] sm:$0xff] %v4630
          %4643 = vst [vmem:[%s1173 + $0x8] sm:$0xff] %v4631
          %4644 = vst [vmem:[%s1173 + $0x10] sm:$0xff] %v4632
          %4645 = vst [vmem:[%s1173 + $0x18] sm:$0xff] %v4633
        $region160: #{transformer_encoder_pallas.1} parent=87 // pred_fallthru
          _
        %s4646 = sand.u32 %s520, 1
        %s4647 = scalar_lea.sflag [#allocation5], %s4646
        %s4648 = sand.u32 %s520, 1
        %s4649 = smul.addr %s4648, 32
        %s4650 = scalar_lea.vmem [#allocation29], %s4649
        // Predicated region
        $region161: #{transformer_encoder_pallas.1} parent=87 // pred_check
          %p4651 = pneg %p530
        $region162: #{transformer_encoder_pallas.1} parent=87 // pred_check_branch
          %4653 = sbr.rel (%p4651) target = $region164
        $region163: #{transformer_encoder_pallas.1} parent=87 // pred_region
          %4655 = vsyncadd %s4647, 0
          %s4656 = smul.addr %s62, 4
          %s4657 = smul.addr %s4656, 8
          %s4658 = scalar_lea.hbm %s17, %s4657
          %s4659 = sshll.u32 %s4650, 4
          %s4660 = int_to_ptr.vmem [resolvable:$true] %s4659
          %s4661 = sshll.u32 %s4658, 4
          %s4662 = int_to_ptr.hbm [resolvable:$true] %s4661
          %4667 = dma.vmem_to_hbm [thread:$0]  %s4660, 512, %s4662, %s4647, 256, 256, 16
        $region164: #{transformer_encoder_pallas.1} parent=87 // pred_fallthru
          _
      $region88: #{transformer_encoder_pallas.1} parent=5 // pred_fallthru
        _
      %p4668 = scmp.le.s32.totalorder 2, %s53
      // Predicated region
      $region165: #{transformer_encoder_pallas.1} parent=5 // pred_check
        %p4669 = pneg %p4668
      $region166: #{transformer_encoder_pallas.1} parent=5 // pred_check_branch
        %4671 = sbr.rel (%p4669) target = $region168
      $region167: #{transformer_encoder_pallas.1} parent=5 // pred_region
        %s4672 = ssub.s32 %s53, 2
        // Predicated region
        $region169: #{transformer_encoder_pallas.1} parent=167 // pred_check
          %p4673 = pneg %p536
        $region170: #{transformer_encoder_pallas.1} parent=167 // pred_check_branch
          %4675 = sbr.rel (%p4673) target = $region172
        $region171: #{transformer_encoder_pallas.1} parent=167 // pred_region
          %s4676 = sand.u32 %s521, 1
          %s4677 = scalar_lea.sflag [#allocation5], %s4676
          %s4678 = sand.u32 %s521, 1
          %s4679 = smul.addr %s4678, 32
          %s4680 = scalar_lea.vmem [#allocation29], %s4679
          %4682 = dma.done %s4677, 512
        $region172: #{transformer_encoder_pallas.1} parent=167 // pred_fallthru
          _
      $region168: #{transformer_encoder_pallas.1} parent=5 // pred_fallthru
        _
    $region6: #{transformer_encoder_pallas.1} parent=1 // loop_footer
      %s57 = sadd.s32 1, %s53
    $region7: #{transformer_encoder_pallas.1} parent=1 // loop_footer_branch
      %52 = sbr.rel target = $region3
    $region8: #{transformer_encoder_pallas.1} parent=1 // loop_exit
      _
    %4683 = vsyncpa [#allocation4], 1
    %s4684 = scalar_lea.sflag [#allocation4], 1
    %4685 = vsyncpa %s4684, 1
    %4686 = vsyncpa [#allocation7], 1
    %s4687 = scalar_lea.sflag [#allocation7], 1
    %4688 = vsyncpa %s4687, 1
    %4689 = vsyncpa [#allocation10], 1
    %s4690 = scalar_lea.sflag [#allocation10], 1
    %4691 = vsyncpa %s4690, 1
    %4692 = vsyncpa [#allocation13], 1
    %s4693 = scalar_lea.sflag [#allocation13], 1
    %4694 = vsyncpa %s4693, 1
    %4695 = vsyncpa [#allocation16], 1
    %s4696 = scalar_lea.sflag [#allocation16], 1
    %4697 = vsyncpa %s4696, 1
    %4698 = vsyncpa [#allocation19], 1
    %s4699 = scalar_lea.sflag [#allocation19], 1
    %4700 = vsyncpa %s4699, 1
    %4701 = vsyncpa [#allocation22], 1
    %s4702 = scalar_lea.sflag [#allocation22], 1
    %4703 = vsyncpa %s4702, 1
    %4704 = vsyncpa [#allocation25], 1
    %s4705 = scalar_lea.sflag [#allocation25], 1
    %4706 = vsyncpa %s4705, 1
    %4707 = vsyncpa [#allocation28], 1
    %s4708 = scalar_lea.sflag [#allocation28], 1
    %4709 = vsyncpa %s4708, 1
    %4710 = vsyncpa [#allocation5], 1
    %s4711 = scalar_lea.sflag [#allocation5], 1
    %4712 = vsyncpa %s4711, 1

</llo_original>
